<compile_context>
chip_gen: v7x
topology: tpu7x:2x2x1
jax: 0.10.0
libtpu: 0.0.40
codegen_flags: <defaults>
</compile_context>

<pallas_src>
import math

import jax
import jax.numpy as jnp
from jax import lax
from jax.experimental import pallas as pl
from jax.experimental.pallas import tpu as pltpu


def generator_kernel(z_ref, c_ref, w1z_ref, w1c_ref, b1_ref, w2_ref, b2_ref,
                     gamma_ref, beta_ref, w3_ref, b3_ref, out_ref):
    z = z_ref[...]                                             # (B, 50) f32
    c = c_ref[...]                                             # (B, 10) f32

    # ---- Linear(60, H): split z / c contributions (no concat needed) ----
    h1 = jnp.dot(z.astype(jnp.bfloat16), w1z_ref[...],
                 preferred_element_type=jnp.float32)
    h1 = h1 + jnp.dot(c.astype(jnp.bfloat16), w1c_ref[...],
                      preferred_element_type=jnp.float32)
    h1 = h1 + b1_ref[...]                                      # (B, H)
    h1 = jnp.maximum(h1, 0.0)                                  # ReLU

    # ---- Linear(H, H) ----
    h2 = jnp.dot(h1.astype(jnp.bfloat16), w2_ref[...],
                 preferred_element_type=jnp.float32)
    h2 = h2 + b2_ref[...]                                      # (B, H)

    # ---- BatchNorm1d(H), training-mode batch statistics (f32) ----
    mean = jnp.mean(h2, axis=0, keepdims=True)                 # (1, H)
    centered = h2 - mean
    var = jnp.mean(centered * centered, axis=0, keepdims=True)
    h2 = centered * lax.rsqrt(var + 1e-5)                      # rsqrt -> EUP
    h2 = h2 * gamma_ref[...] + beta_ref[...]

    # ---- ReLU ----
    h2 = jnp.maximum(h2, 0.0)

    # ---- Linear(H, out_dim) + Sigmoid ----
    logits = jnp.dot(h2.astype(jnp.bfloat16), w3_ref[...],
                     preferred_element_type=jnp.float32)
    logits = logits + b3_ref[...]                              # (B, out_dim)
    out_ref[...] = jax.nn.sigmoid(logits)


def generator_forward(z, c, params, img_shape):
    """z: (B, 50), c: (B, 10). Returns (B, *img_shape) in [0, 1]."""
    B = z.shape[0]
    w1z, w1c, b1, w2, b2, gamma, beta, w3, b3 = params
    hidden = w2.shape[0]
    out_dim = w3.shape[1]

    vmem = pl.BlockSpec(memory_space=pltpu.MemorySpace.VMEM)

    flops = (2 * B * (w1z.shape[0] + w1c.shape[0]) * hidden
             + 2 * B * hidden * hidden
             + 2 * B * hidden * out_dim)
    bytes_accessed = int(sum(int(a.size) * a.dtype.itemsize
                             for a in (w1z, w1c, b1, w2, b2, gamma, beta, w3, b3))
                         + (z.size + c.size + B * out_dim) * 4)
    cost = pl.CostEstimate(flops=flops,
                           transcendentals=B * out_dim + hidden,  # sigmoid + rsqrt
                           bytes_accessed=bytes_accessed)

    img_flat = pl.pallas_call(
        generator_kernel,
        out_shape=jax.ShapeDtypeStruct((B, out_dim), jnp.float32),
        in_specs=[vmem] * 11,
        out_specs=vmem,
        compiler_params=pltpu.CompilerParams(vmem_limit_bytes=16 << 20),
        cost_estimate=cost,
    )(z.astype(jnp.float32), c.astype(jnp.float32),
      w1z, w1c, b1, w2, b2, gamma, beta, w3, b3)

    return img_flat.reshape((B,) + tuple(img_shape))


def init_params(key, z_dim, c_dim, hidden, out_dim):
    """PyTorch nn.Linear default init: U(-1/sqrt(fan_in), 1/sqrt(fan_in)).

    Weights are stored as (in_features, out_features) so the kernel does
    x @ W + b.  MXU-facing weights are cast to bf16; biases / BN params f32.
    """
    ks = jax.random.split(key, 6)

    def linear(kw, kb, fan_in, fan_out):
        bound = 1.0 / (fan_in ** 0.5)
        w = jax.random.uniform(kw, (fan_in, fan_out), jnp.float32, -bound, bound)
        b = jax.random.uniform(kb, (1, fan_out), jnp.float32, -bound, bound)
        return w, b

    d_in = z_dim + c_dim
    w1, b1 = linear(ks[0], ks[1], d_in, hidden)
    w2, b2 = linear(ks[2], ks[3], hidden, hidden)
    w3, b3 = linear(ks[4], ks[5], hidden, out_dim)

    # Split W1 into the rows multiplying z and the rows multiplying c so the
    # kernel never needs the concatenated [z, c] activation.
    w1z = w1[:z_dim].astype(jnp.bfloat16)
    w1c = w1[z_dim:].astype(jnp.bfloat16)

    gamma = jnp.ones((1, hidden), jnp.float32)   # BatchNorm1d affine defaults
    beta = jnp.zeros((1, hidden), jnp.float32)

    return (w1z, w1c, b1,
            w2.astype(jnp.bfloat16), b2,
            gamma, beta,
            w3.astype(jnp.bfloat16), b3)


def generator_reference(z, c, params, img_shape):
    """Pure-JAX f32 reference using the same (bf16-stored) weights."""
    w1z, w1c, b1, w2, b2, gamma, beta, w3, b3 = params
    w1 = jnp.concatenate([w1z, w1c], axis=0).astype(jnp.float32)
    zc = jnp.concatenate([z, c], axis=1).astype(jnp.float32)

    h1 = jnp.maximum(zc @ w1 + b1, 0.0)
    h2 = h1 @ w2.astype(jnp.float32) + b2
    mean = jnp.mean(h2, axis=0, keepdims=True)
    var = jnp.mean((h2 - mean) ** 2, axis=0, keepdims=True)
    h2 = (h2 - mean) * lax.rsqrt(var + 1e-5) * gamma + beta
    h2 = jnp.maximum(h2, 0.0)
    logits = h2 @ w3.astype(jnp.float32) + b3
    return jax.nn.sigmoid(logits).reshape((z.shape[0],) + tuple(img_shape))


if __name__ == "__main__":
    # Module hardcodes z=50, c=10, hidden=1024; pick a small img_shape whose
    # flattened size is a multiple of 128 so the output store is lane-dense.
    B = 8
    img_shape = (2, 8, 8)
    z_dim, c_dim, hidden = 50, 10, 1024
    out_dim = math.prod(img_shape)   # 128

    key = jax.random.PRNGKey(0)
    k_z, k_c, k_params = jax.random.split(key, 3)

    z = jax.random.normal(k_z, (B, z_dim), jnp.float32)
    c = jax.random.normal(k_c, (B, c_dim), jnp.float32)
    params = init_params(k_params, z_dim, c_dim, hidden, out_dim)

    img = generator_forward(z, c, params, img_shape)
    jax.block_until_ready(img)

    assert img.shape == (B,) + img_shape
    assert bool(jnp.all(jnp.isfinite(img)))
    assert bool(jnp.all((img >= 0.0) & (img <= 1.0)))

    # Relaxed tolerance: kernel uses bf16 MXU operands with f32 accumulation.
    ref = generator_reference(z, c, params, img_shape)
    max_err = float(jnp.max(jnp.abs(img - ref)))
    assert max_err < 5e-2, f"max abs error {max_err}"

    print("KERNEL_OK")
</pallas_src>

<mosaic_0001>
module attributes {stable_mosaic.version = 11 : i64} {
  func.func @generator_kernel(%arg0: memref<8x50xf32, #tpu.memory_space<vmem>>, %arg1: memref<8x10xf32, #tpu.memory_space<vmem>>, %arg2: memref<50x1024xbf16, #tpu.memory_space<vmem>>, %arg3: memref<10x1024xbf16, #tpu.memory_space<vmem>>, %arg4: memref<1x1024xf32, #tpu.memory_space<vmem>>, %arg5: memref<1024x1024xbf16, #tpu.memory_space<vmem>>, %arg6: memref<1x1024xf32, #tpu.memory_space<vmem>>, %arg7: memref<1x1024xf32, #tpu.memory_space<vmem>>, %arg8: memref<1x1024xf32, #tpu.memory_space<vmem>>, %arg9: memref<1024x128xbf16, #tpu.memory_space<vmem>>, %arg10: memref<1x128xf32, #tpu.memory_space<vmem>>, %arg11: memref<8x128xf32, #tpu.memory_space<vmem>>) attributes {dimension_semantics = [], scalar_prefetch = 0 : i64, scratch_operands = 0 : i64, tpu.core_type = #tpu.core_type<tc>} {
    %c0 = arith.constant 0 : index
    %c0_0 = arith.constant 0 : index
    %0 = vector.load %arg0[%c0, %c0_0] : memref<8x50xf32, #tpu.memory_space<vmem>>, vector<8x50xf32>
    %c0_1 = arith.constant 0 : index
    %c0_2 = arith.constant 0 : index
    %1 = vector.load %arg1[%c0_1, %c0_2] : memref<8x10xf32, #tpu.memory_space<vmem>>, vector<8x10xf32>
    %2 = arith.truncf %0 : vector<8x50xf32> to vector<8x50xbf16>
    %c0_3 = arith.constant 0 : index
    %c0_4 = arith.constant 0 : index
    %3 = vector.load %arg2[%c0_3, %c0_4] : memref<50x1024xbf16, #tpu.memory_space<vmem>>, vector<50x1024xbf16>
    %cst = arith.constant dense<0.000000e+00> : vector<8x1024xf32>
    %4 = tpu.matmul %2, %3, %cst {dimension_numbers = #tpu.dot_dimension_numbers<[1], [0], [0], [1], [0, 0, 1, 1], [], []>} : vector<8x50xbf16>, vector<50x1024xbf16>, vector<8x1024xf32> -> vector<8x1024xf32>
    %5 = arith.truncf %1 : vector<8x10xf32> to vector<8x10xbf16>
    %c0_5 = arith.constant 0 : index
    %c0_6 = arith.constant 0 : index
    %6 = vector.load %arg3[%c0_5, %c0_6] : memref<10x1024xbf16, #tpu.memory_space<vmem>>, vector<10x1024xbf16>
    %cst_7 = arith.constant dense<0.000000e+00> : vector<8x1024xf32>
    %7 = tpu.matmul %5, %6, %cst_7 {dimension_numbers = #tpu.dot_dimension_numbers<[1], [0], [0], [1], [0, 0, 1, 1], [], []>} : vector<8x10xbf16>, vector<10x1024xbf16>, vector<8x1024xf32> -> vector<8x1024xf32>
    %8 = arith.addf %4, %7 : vector<8x1024xf32>
    %c0_8 = arith.constant 0 : index
    %c0_9 = arith.constant 0 : index
    %9 = vector.load %arg4[%c0_8, %c0_9] : memref<1x1024xf32, #tpu.memory_space<vmem>>, vector<1x1024xf32>
    %10 = vector.broadcast %9 : vector<1x1024xf32> to vector<8x1024xf32>
    %11 = arith.addf %8, %10 : vector<8x1024xf32>
    %cst_10 = arith.constant 0.000000e+00 : f32
    %12 = vector.broadcast %cst_10 : f32 to vector<8x1024xf32>
    %13 = arith.maximumf %11, %12 : vector<8x1024xf32>
    %14 = arith.truncf %13 : vector<8x1024xf32> to vector<8x1024xbf16>
    %c0_11 = arith.constant 0 : index
    %c0_12 = arith.constant 0 : index
    %15 = vector.load %arg5[%c0_11, %c0_12] : memref<1024x1024xbf16, #tpu.memory_space<vmem>>, vector<1024x1024xbf16>
    %cst_13 = arith.constant dense<0.000000e+00> : vector<8x1024xf32>
    %16 = tpu.matmul %14, %15, %cst_13 {dimension_numbers = #tpu.dot_dimension_numbers<[1], [0], [0], [1], [0, 0, 1, 1], [], []>} : vector<8x1024xbf16>, vector<1024x1024xbf16>, vector<8x1024xf32> -> vector<8x1024xf32>
    %c0_14 = arith.constant 0 : index
    %c0_15 = arith.constant 0 : index
    %17 = vector.load %arg6[%c0_14, %c0_15] : memref<1x1024xf32, #tpu.memory_space<vmem>>, vector<1x1024xf32>
    %18 = vector.broadcast %17 : vector<1x1024xf32> to vector<8x1024xf32>
    %19 = arith.addf %16, %18 : vector<8x1024xf32>
    %cst_16 = arith.constant dense<0.000000e+00> : vector<1024xf32>
    %20 = vector.multi_reduction <add>, %19, %cst_16 [0] : vector<8x1024xf32> to vector<1024xf32>
    %21 = vector.shape_cast %20 : vector<1024xf32> to vector<1x1024xf32>
    %cst_17 = arith.constant 8.000000e+00 : f32
    %22 = vector.broadcast %cst_17 : f32 to vector<1x1024xf32>
    %23 = arith.divf %21, %22 : vector<1x1024xf32>
    %24 = vector.broadcast %23 : vector<1x1024xf32> to vector<8x1024xf32>
    %25 = arith.subf %19, %24 : vector<8x1024xf32>
    %26 = arith.mulf %25, %25 : vector<8x1024xf32>
    %cst_18 = arith.constant dense<0.000000e+00> : vector<1024xf32>
    %27 = vector.multi_reduction <add>, %26, %cst_18 [0] : vector<8x1024xf32> to vector<1024xf32>
    %28 = vector.shape_cast %27 : vector<1024xf32> to vector<1x1024xf32>
    %cst_19 = arith.constant 8.000000e+00 : f32
    %29 = vector.broadcast %cst_19 : f32 to vector<1x1024xf32>
    %30 = arith.divf %28, %29 : vector<1x1024xf32>
    %cst_20 = arith.constant 9.99999974E-6 : f32
    %31 = vector.broadcast %cst_20 : f32 to vector<1x1024xf32>
    %32 = arith.addf %30, %31 : vector<1x1024xf32>
    %33 = math.rsqrt %32 : vector<1x1024xf32>
    %34 = vector.broadcast %33 : vector<1x1024xf32> to vector<8x1024xf32>
    %35 = arith.mulf %25, %34 : vector<8x1024xf32>
    %c0_21 = arith.constant 0 : index
    %c0_22 = arith.constant 0 : index
    %36 = vector.load %arg7[%c0_21, %c0_22] : memref<1x1024xf32, #tpu.memory_space<vmem>>, vector<1x1024xf32>
    %37 = vector.broadcast %36 : vector<1x1024xf32> to vector<8x1024xf32>
    %38 = arith.mulf %35, %37 : vector<8x1024xf32>
    %c0_23 = arith.constant 0 : index
    %c0_24 = arith.constant 0 : index
    %39 = vector.load %arg8[%c0_23, %c0_24] : memref<1x1024xf32, #tpu.memory_space<vmem>>, vector<1x1024xf32>
    %40 = vector.broadcast %39 : vector<1x1024xf32> to vector<8x1024xf32>
    %41 = arith.addf %38, %40 : vector<8x1024xf32>
    %cst_25 = arith.constant 0.000000e+00 : f32
    %42 = vector.broadcast %cst_25 : f32 to vector<8x1024xf32>
    %43 = arith.maximumf %41, %42 : vector<8x1024xf32>
    %44 = arith.truncf %43 : vector<8x1024xf32> to vector<8x1024xbf16>
    %c0_26 = arith.constant 0 : index
    %c0_27 = arith.constant 0 : index
    %45 = vector.load %arg9[%c0_26, %c0_27] : memref<1024x128xbf16, #tpu.memory_space<vmem>>, vector<1024x128xbf16>
    %cst_28 = arith.constant dense<0.000000e+00> : vector<8x128xf32>
    %46 = tpu.matmul %44, %45, %cst_28 {dimension_numbers = #tpu.dot_dimension_numbers<[1], [0], [0], [1], [0, 0, 1, 1], [], []>} : vector<8x1024xbf16>, vector<1024x128xbf16>, vector<8x128xf32> -> vector<8x128xf32>
    %c0_29 = arith.constant 0 : index
    %c0_30 = arith.constant 0 : index
    %47 = vector.load %arg10[%c0_29, %c0_30] : memref<1x128xf32, #tpu.memory_space<vmem>>, vector<1x128xf32>
    %48 = vector.broadcast %47 : vector<1x128xf32> to vector<8x128xf32>
    %49 = arith.addf %46, %48 : vector<8x128xf32>
    %50 = arith.negf %49 : vector<8x128xf32>
    %51 = math.exp %50 : vector<8x128xf32>
    %cst_31 = arith.constant 1.000000e+00 : f32
    %52 = vector.broadcast %cst_31 : f32 to vector<8x128xf32>
    %53 = arith.addf %52, %51 : vector<8x128xf32>
    %54 = arith.divf %52, %53 : vector<8x128xf32>
    %c0_32 = arith.constant 0 : index
    %c0_33 = arith.constant 0 : index
    %55 = vector.load %arg11[%c0_32, %c0_33] : memref<8x128xf32, #tpu.memory_space<vmem>>, vector<8x128xf32>
    tpu.vector_store %arg11[%c0_32, %c0_33], %54 {strides = array<i32>} : memref<8x128xf32, #tpu.memory_space<vmem>>, vector<8x128xf32>,
    return
  }
}

</mosaic_0001>

<llo_original>
// kernel: tpu_custom_call.1
$region0: #{tpu_custom_call.1}
  #allocation0 [shape = 'u32[]', space=smem, size = 0x4, offset = 0x4, fixed_abs, tag = 'smem constant byte address 0x4 - core index']
  #allocation1 [shape = 'u32[144,128]{1,0:T(1,128)}', space=vmem, size = 0x12000, scoped, tag = 'internal scratch']
  %s0 = inlined_call_operand.hbm [shape: f32[8,50], index: 0, kind: input, shape index: {}]
  %s1 = inlined_call_operand.hbm [shape: f32[8,10], index: 1, kind: input, shape index: {}]
  %s2 = inlined_call_operand.hbm [shape: bf16[50,1024], index: 2, kind: input, shape index: {}]
  %s3 = inlined_call_operand.hbm [shape: bf16[10,1024], index: 3, kind: input, shape index: {}]
  %s4 = inlined_call_operand.hbm [shape: f32[1,1024], index: 4, kind: input, shape index: {}]
  %s5 = inlined_call_operand.hbm [shape: bf16[1024,1024], index: 5, kind: input, shape index: {}]
  %s6 = inlined_call_operand.hbm [shape: f32[1,1024], index: 6, kind: input, shape index: {}]
  %s7 = inlined_call_operand.hbm [shape: f32[1,1024], index: 7, kind: input, shape index: {}]
  %s8 = inlined_call_operand.hbm [shape: f32[1,1024], index: 8, kind: input, shape index: {}]
  %s9 = inlined_call_operand.hbm [shape: bf16[1024,128], index: 9, kind: input, shape index: {}]
  %s10 = inlined_call_operand.hbm [shape: f32[1,128], index: 10, kind: input, shape index: {}]
  %s11 = inlined_call_operand.hbm [shape: f32[8,128], index: 11, kind: output, shape index: {}]
  %s12 = sld [smem:[#allocation0]]
  $region98: #{tpu_custom_call.1} parent=0
    _
  %s14 = ssub.s32 1, %s12
  %s15 = scalar_select 0, %s14, %s12
  $region1: #{tpu_custom_call.1} parent=0
    #allocation2 [shape = 'u8[4096]{0}', space=vmem, size = 0x1000, scoped, tag = 'input window, operand 0, single buffered']
    #allocation3 [shape = 's32[1]{0}', space=sflag, size = 0x4, scoped, tag = 'scoped memory for tpu_custom_call.1']
    #allocation4 [shape = 's32[1]{0}', space=sflag, size = 0x4, scoped, tag = 'scoped memory for tpu_custom_call.1']
    #allocation5 [shape = 'u8[4096]{0}', space=vmem, size = 0x1000, scoped, tag = 'input window, operand 1, single buffered']
    #allocation6 [shape = 's32[1]{0}', space=sflag, size = 0x4, scoped, tag = 'scoped memory for tpu_custom_call.1']
    #allocation7 [shape = 'u8[114688]{0}', space=vmem, size = 0x1c000, scoped, tag = 'input window, operand 2, single buffered']
    #allocation8 [shape = 'u8[32768]{0}', space=vmem, size = 0x8000, scoped, tag = 'input window, operand 3, single buffered']
    #allocation9 [shape = 's32[1]{0}', space=sflag, size = 0x4, scoped, tag = 'scoped memory for tpu_custom_call.1']
    #allocation10 [shape = 'u8[4096]{0}', space=vmem, size = 0x1000, scoped, tag = 'input window, operand 4, single buffered']
    #allocation11 [shape = 'u8[2097152]{0}', space=vmem, size = 0x200000, scoped, tag = 'input window, operand 5, single buffered']
    #allocation12 [shape = 's32[1]{0}', space=sflag, size = 0x4, scoped, tag = 'scoped memory for tpu_custom_call.1']
    #allocation13 [shape = 'u8[4096]{0}', space=vmem, size = 0x1000, scoped, tag = 'input window, operand 6, single buffered']
    #allocation14 [shape = 'u8[4096]{0}', space=vmem, size = 0x1000, scoped, tag = 'input window, operand 7, single buffered']
    #allocation15 [shape = 's32[1]{0}', space=sflag, size = 0x4, scoped, tag = 'scoped memory for tpu_custom_call.1']
    #allocation16 [shape = 'u8[4096]{0}', space=vmem, size = 0x1000, scoped, tag = 'input window, operand 8, single buffered']
    #allocation17 [shape = 'u8[262144]{0}', space=vmem, size = 0x40000, scoped, tag = 'input window, operand 9, single buffered']
    #allocation18 [shape = 's32[1]{0}', space=sflag, size = 0x4, scoped, tag = 'scoped memory for tpu_custom_call.1']
    #allocation19 [shape = 'u8[512]{0}', space=vmem, size = 0x400, scoped, tag = 'input window, operand 10, single buffered']
    #allocation20 [shape = 'u8[4096]{0}', space=vmem, size = 0x1000, scoped, tag = 'output window, operand 0, single buffered']
    %16 = vsyncpa [#allocation3], 0
    %17 = vsyncpa [#allocation6], 0
    %18 = vsyncpa [#allocation9], 0
    %19 = vsyncpa [#allocation12], 0
    %20 = vsyncpa [#allocation15], 0
    %21 = vsyncpa [#allocation18], 0
    %22 = vsyncpa [#allocation4], 0
    // Predicated region
    $region2: #{tpu_custom_call.1} parent=1 // pred_check
      _
    $region3: #{tpu_custom_call.1} parent=1 // pred_check_branch
      %24 = sbr.rel (0) target = $region5
    $region4: #{tpu_custom_call.1} parent=1 // pred_region
      %s26 = ssub.s32 128, 128
      %27 = vsyncadd [#allocation3], %s26
      %s29 = sshll.u32 [#allocation2], 4
      %s30 = int_to_ptr.vmem [resolvable:$true] %s29
      %32 = dma.hbm_to_vmem [thread:$0]  %s0, 128, %s30, [#allocation3]
    $region5: #{tpu_custom_call.1} parent=1 // pred_fallthru
      _
    // Predicated region
    $region6: #{tpu_custom_call.1} parent=1 // pred_check
      _
    $region7: #{tpu_custom_call.1} parent=1 // pred_check_branch
      %34 = sbr.rel (0) target = $region9
    $region8: #{tpu_custom_call.1} parent=1 // pred_region
      %s36 = ssub.s32 128, 128
      %37 = vsyncadd [#allocation6], %s36
      %s39 = sshll.u32 [#allocation5], 4
      %s40 = int_to_ptr.vmem [resolvable:$true] %s39
      %42 = dma.hbm_to_vmem [thread:$0]  %s1, 128, %s40, [#allocation6]
    $region9: #{tpu_custom_call.1} parent=1 // pred_fallthru
      _
    // Predicated region
    $region10: #{tpu_custom_call.1} parent=1 // pred_check
      _
    $region11: #{tpu_custom_call.1} parent=1 // pred_check_branch
      %44 = sbr.rel (0) target = $region13
    $region12: #{tpu_custom_call.1} parent=1 // pred_region
      %s46 = ssub.s32 3584, 3584
      %47 = vsyncadd [#allocation6], %s46
      %s48 = sshll.u32 [#allocation7], 4
      %s49 = int_to_ptr.vmem [resolvable:$true] %s48
      %54 = dma.hbm_to_vmem [thread:$0]  %s2, 3584, %s49, [#allocation6], 512, 512, 32
    $region13: #{tpu_custom_call.1} parent=1 // pred_fallthru
      _
    // Predicated region
    $region14: #{tpu_custom_call.1} parent=1 // pred_check
      _
    $region15: #{tpu_custom_call.1} parent=1 // pred_check_branch
      %56 = sbr.rel (0) target = $region17
    $region16: #{tpu_custom_call.1} parent=1 // pred_region
      %s58 = ssub.s32 1024, 1024
      %59 = vsyncadd [#allocation9], %s58
      %s60 = sshll.u32 [#allocation8], 4
      %s61 = int_to_ptr.vmem [resolvable:$true] %s60
      %66 = dma.hbm_to_vmem [thread:$0]  %s3, 1024, %s61, [#allocation9], 512, 512, 32
    $region17: #{tpu_custom_call.1} parent=1 // pred_fallthru
      _
    // Predicated region
    $region18: #{tpu_custom_call.1} parent=1 // pred_check
      _
    $region19: #{tpu_custom_call.1} parent=1 // pred_check_branch
      %68 = sbr.rel (0) target = $region21
    $region20: #{tpu_custom_call.1} parent=1 // pred_region
      %s70 = ssub.s32 128, 128
      %71 = vsyncadd [#allocation9], %s70
      %s73 = sshll.u32 [#allocation10], 4
      %s74 = int_to_ptr.vmem [resolvable:$true] %s73
      %76 = dma.hbm_to_vmem [thread:$0]  %s4, 128, %s74, [#allocation9]
    $region21: #{tpu_custom_call.1} parent=1 // pred_fallthru
      _
    // Predicated region
    $region22: #{tpu_custom_call.1} parent=1 // pred_check
      _
    $region23: #{tpu_custom_call.1} parent=1 // pred_check_branch
      %78 = sbr.rel (0) target = $region25
    $region24: #{tpu_custom_call.1} parent=1 // pred_region
      %s80 = ssub.s32 65536, 65536
      %81 = vsyncadd [#allocation12], %s80
      %s82 = sshll.u32 [#allocation11], 4
      %s83 = int_to_ptr.vmem [resolvable:$true] %s82
      %88 = dma.hbm_to_vmem [thread:$0]  %s5, 65536, %s83, [#allocation12], 512, 512, 32
    $region25: #{tpu_custom_call.1} parent=1 // pred_fallthru
      _
    // Predicated region
    $region26: #{tpu_custom_call.1} parent=1 // pred_check
      _
    $region27: #{tpu_custom_call.1} parent=1 // pred_check_branch
      %90 = sbr.rel (0) target = $region29
    $region28: #{tpu_custom_call.1} parent=1 // pred_region
      %s92 = ssub.s32 128, 128
      %93 = vsyncadd [#allocation12], %s92
      %s95 = sshll.u32 [#allocation13], 4
      %s96 = int_to_ptr.vmem [resolvable:$true] %s95
      %98 = dma.hbm_to_vmem [thread:$0]  %s6, 128, %s96, [#allocation12]
    $region29: #{tpu_custom_call.1} parent=1 // pred_fallthru
      _
    // Predicated region
    $region30: #{tpu_custom_call.1} parent=1 // pred_check
      _
    $region31: #{tpu_custom_call.1} parent=1 // pred_check_branch
      %100 = sbr.rel (0) target = $region33
    $region32: #{tpu_custom_call.1} parent=1 // pred_region
      %s102 = ssub.s32 128, 128
      %103 = vsyncadd [#allocation15], %s102
      %s105 = sshll.u32 [#allocation14], 4
      %s106 = int_to_ptr.vmem [resolvable:$true] %s105
      %108 = dma.hbm_to_vmem [thread:$0]  %s7, 128, %s106, [#allocation15]
    $region33: #{tpu_custom_call.1} parent=1 // pred_fallthru
      _
    // Predicated region
    $region34: #{tpu_custom_call.1} parent=1 // pred_check
      _
    $region35: #{tpu_custom_call.1} parent=1 // pred_check_branch
      %110 = sbr.rel (0) target = $region37
    $region36: #{tpu_custom_call.1} parent=1 // pred_region
      %s112 = ssub.s32 128, 128
      %113 = vsyncadd [#allocation15], %s112
      %s115 = sshll.u32 [#allocation16], 4
      %s116 = int_to_ptr.vmem [resolvable:$true] %s115
      %118 = dma.hbm_to_vmem [thread:$0]  %s8, 128, %s116, [#allocation15]
    $region37: #{tpu_custom_call.1} parent=1 // pred_fallthru
      _
    // Predicated region
    $region38: #{tpu_custom_call.1} parent=1 // pred_check
      _
    $region39: #{tpu_custom_call.1} parent=1 // pred_check_branch
      %120 = sbr.rel (0) target = $region41
    $region40: #{tpu_custom_call.1} parent=1 // pred_region
      %s122 = ssub.s32 8192, 8192
      %123 = vsyncadd [#allocation18], %s122
      %s124 = sshll.u32 [#allocation17], 4
      %s125 = int_to_ptr.vmem [resolvable:$true] %s124
      %130 = dma.hbm_to_vmem [thread:$0]  %s9, 8192, %s125, [#allocation18], 64, 64, 4
    $region41: #{tpu_custom_call.1} parent=1 // pred_fallthru
      _
    // Predicated region
    $region42: #{tpu_custom_call.1} parent=1 // pred_check
      _
    $region43: #{tpu_custom_call.1} parent=1 // pred_check_branch
      %132 = sbr.rel (0) target = $region45
    $region44: #{tpu_custom_call.1} parent=1 // pred_region
      %s134 = ssub.s32 16, 16
      %135 = vsyncadd [#allocation18], %s134
      %s137 = sshll.u32 [#allocation19], 4
      %s138 = int_to_ptr.vmem [resolvable:$true] %s137
      %140 = dma.hbm_to_vmem [thread:$0]  %s10, 16, %s138, [#allocation18]
    $region45: #{tpu_custom_call.1} parent=1 // pred_fallthru
      _
    // Predicated region
    $region46: #{tpu_custom_call.1} parent=1 // pred_check
      _
    $region47: #{tpu_custom_call.1} parent=1 // pred_check_branch
      %142 = sbr.rel (0) target = $region49
    $region48: #{tpu_custom_call.1} parent=1 // pred_region
      %143 = dma.done [#allocation3], 128
    $region49: #{tpu_custom_call.1} parent=1 // pred_fallthru
      _
    // Predicated region
    $region50: #{tpu_custom_call.1} parent=1 // pred_check
      _
    $region51: #{tpu_custom_call.1} parent=1 // pred_check_branch
      %145 = sbr.rel (0) target = $region53
    $region52: #{tpu_custom_call.1} parent=1 // pred_region
      %146 = dma.done [#allocation6], 128
    $region53: #{tpu_custom_call.1} parent=1 // pred_fallthru
      _
    // Predicated region
    $region54: #{tpu_custom_call.1} parent=1 // pred_check
      _
    $region55: #{tpu_custom_call.1} parent=1 // pred_check_branch
      %148 = sbr.rel (0) target = $region57
    $region56: #{tpu_custom_call.1} parent=1 // pred_region
      %149 = dma.done [#allocation6], 3584
    $region57: #{tpu_custom_call.1} parent=1 // pred_fallthru
      _
    // Predicated region
    $region58: #{tpu_custom_call.1} parent=1 // pred_check
      _
    $region59: #{tpu_custom_call.1} parent=1 // pred_check_branch
      %151 = sbr.rel (0) target = $region61
    $region60: #{tpu_custom_call.1} parent=1 // pred_region
      %152 = dma.done [#allocation9], 1024
    $region61: #{tpu_custom_call.1} parent=1 // pred_fallthru
      _
    // Predicated region
    $region62: #{tpu_custom_call.1} parent=1 // pred_check
      _
    $region63: #{tpu_custom_call.1} parent=1 // pred_check_branch
      %154 = sbr.rel (0) target = $region65
    $region64: #{tpu_custom_call.1} parent=1 // pred_region
      %155 = dma.done [#allocation9], 128
    $region65: #{tpu_custom_call.1} parent=1 // pred_fallthru
      _
    // Predicated region
    $region66: #{tpu_custom_call.1} parent=1 // pred_check
      _
    $region67: #{tpu_custom_call.1} parent=1 // pred_check_branch
      %157 = sbr.rel (0) target = $region69
    $region68: #{tpu_custom_call.1} parent=1 // pred_region
      %158 = dma.done [#allocation12], 65536
    $region69: #{tpu_custom_call.1} parent=1 // pred_fallthru
      _
    // Predicated region
    $region70: #{tpu_custom_call.1} parent=1 // pred_check
      _
    $region71: #{tpu_custom_call.1} parent=1 // pred_check_branch
      %160 = sbr.rel (0) target = $region73
    $region72: #{tpu_custom_call.1} parent=1 // pred_region
      %161 = dma.done [#allocation12], 128
    $region73: #{tpu_custom_call.1} parent=1 // pred_fallthru
      _
    // Predicated region
    $region74: #{tpu_custom_call.1} parent=1 // pred_check
      _
    $region75: #{tpu_custom_call.1} parent=1 // pred_check_branch
      %163 = sbr.rel (0) target = $region77
    $region76: #{tpu_custom_call.1} parent=1 // pred_region
      %164 = dma.done [#allocation15], 128
    $region77: #{tpu_custom_call.1} parent=1 // pred_fallthru
      _
    // Predicated region
    $region78: #{tpu_custom_call.1} parent=1 // pred_check
      _
    $region79: #{tpu_custom_call.1} parent=1 // pred_check_branch
      %166 = sbr.rel (0) target = $region81
    $region80: #{tpu_custom_call.1} parent=1 // pred_region
      %167 = dma.done [#allocation15], 128
    $region81: #{tpu_custom_call.1} parent=1 // pred_fallthru
      _
    // Predicated region
    $region82: #{tpu_custom_call.1} parent=1 // pred_check
      _
    $region83: #{tpu_custom_call.1} parent=1 // pred_check_branch
      %169 = sbr.rel (0) target = $region85
    $region84: #{tpu_custom_call.1} parent=1 // pred_region
      %170 = dma.done [#allocation18], 8192
    $region85: #{tpu_custom_call.1} parent=1 // pred_fallthru
      _
    // Predicated region
    $region86: #{tpu_custom_call.1} parent=1 // pred_check
      _
    $region87: #{tpu_custom_call.1} parent=1 // pred_check_branch
      %172 = sbr.rel (0) target = $region89
    $region88: #{tpu_custom_call.1} parent=1 // pred_region
      %173 = dma.done [#allocation18], 16
    $region89: #{tpu_custom_call.1} parent=1 // pred_fallthru
      _
    %v175 = vld [vmem:[#allocation2] sm:$0xff]
    %v176 = vld [vmem:[#allocation5] sm:$0xff]
    %v177 = vpack.c.bf16 %v175, %v175
    %v178 = vld [vmem:[#allocation7] sm:$0xff]
    %v179 = vld [vmem:[#allocation7 + $0x8] sm:$0xff]
    %v180 = vld [vmem:[#allocation7 + $0x10] sm:$0xff]
    %v181 = vld [vmem:[#allocation7 + $0x18] sm:$0xff]
    %v182 = vld [vmem:[#allocation7 + $0x20] sm:$0xff]
    %v183 = vld [vmem:[#allocation7 + $0x28] sm:$0xff]
    %v184 = vld [vmem:[#allocation7 + $0x30] sm:$0xff]
    %v185 = vld [vmem:[#allocation7 + $0x38] sm:$0xff]
    %v186 = vld [vmem:[#allocation7 + $0x40] sm:$0xff]
    %v187 = vld [vmem:[#allocation7 + $0x48] sm:$0xff]
    %v188 = vld [vmem:[#allocation7 + $0x50] sm:$0xff]
    %v189 = vld [vmem:[#allocation7 + $0x58] sm:$0xff]
    %v190 = vld [vmem:[#allocation7 + $0x60] sm:$0xff]
    %v191 = vld [vmem:[#allocation7 + $0x68] sm:$0xff]
    %v192 = vld [vmem:[#allocation7 + $0x70] sm:$0xff]
    %v193 = vld [vmem:[#allocation7 + $0x78] sm:$0xff]
    %v194 = vld [vmem:[#allocation7 + $0x80] sm:$0xff]
    %v195 = vld [vmem:[#allocation7 + $0x88] sm:$0xff]
    %v196 = vld [vmem:[#allocation7 + $0x90] sm:$0xff]
    %v197 = vld [vmem:[#allocation7 + $0x98] sm:$0xff]
    %v198 = vld [vmem:[#allocation7 + $0xa0] sm:$0xff]
    %v199 = vld [vmem:[#allocation7 + $0xa8] sm:$0xff]
    %v200 = vld [vmem:[#allocation7 + $0xb0] sm:$0xff]
    %v201 = vld [vmem:[#allocation7 + $0xb8] sm:$0xff]
    %v202 = vld [vmem:[#allocation7 + $0xc0] sm:$0x11]
    %v203 = vld [vmem:[#allocation7 + $0xc8] sm:$0x11]
    %v204 = vld [vmem:[#allocation7 + $0xd0] sm:$0x11]
    %v205 = vld [vmem:[#allocation7 + $0xd8] sm:$0x11]
    %v206 = vpack.c.bf16 %v176, %v176
    %v207 = vld [vmem:[#allocation8] sm:$0xff]
    %v208 = vld [vmem:[#allocation8 + $0x8] sm:$0xff]
    %v209 = vld [vmem:[#allocation8 + $0x10] sm:$0xff]
    %v210 = vld [vmem:[#allocation8 + $0x18] sm:$0xff]
    %v211 = vld [vmem:[#allocation8 + $0x20] sm:$0x11]
    %v212 = vld [vmem:[#allocation8 + $0x28] sm:$0x11]
    %v213 = vld [vmem:[#allocation8 + $0x30] sm:$0x11]
    %v214 = vld [vmem:[#allocation8 + $0x38] sm:$0x11]
    %v223 = vunpack.c.l.b16 %v207
    %v224 = vunpack.c.h.b16 %v207
    %v225 = vunpack.c.l.b16 %v208
    %v226 = vunpack.c.h.b16 %v208
    %v227 = vunpack.c.l.b16 %v209
    %v228 = vunpack.c.h.b16 %v209
    %v229 = vunpack.c.l.b16 %v210
    %v230 = vunpack.c.h.b16 %v210
    %v231 = vunpack.c.l.b16 %v211
    %v232 = vunpack.c.h.b16 %v211
    %v233 = vunpack.c.l.b16 %v212
    %v234 = vunpack.c.h.b16 %v212
    %v235 = vunpack.c.l.b16 %v213
    %v236 = vunpack.c.h.b16 %v213
    %v237 = vunpack.c.l.b16 %v214
    %v238 = vunpack.c.h.b16 %v214
    %v239 = vpack.c.b16 %v231, %v223
    %v240 = vpack.c.b16 %v232, %v224
    %v241 = vpack.c.b16 %v233, %v225
    %v242 = vpack.c.b16 %v234, %v226
    %v243 = vpack.c.b16 %v235, %v227
    %v244 = vpack.c.b16 %v236, %v228
    %v245 = vpack.c.b16 %v237, %v229
    %v246 = vpack.c.b16 %v238, %v230
    %vm247 = vcmask 80896
    %v249 = vsel %vm247, %v206, 0
    %vm251 = vcmask 1044480
    %v253 = vsel %vm251, %v239, 0
    %v256 = vsel %vm251, %v240, 0
    %v259 = vsel %vm251, %v241, 0
    %v262 = vsel %vm251, %v242, 0
    %v265 = vsel %vm251, %v243, 0
    %v268 = vsel %vm251, %v244, 0
    %v271 = vsel %vm251, %v245, 0
    %v274 = vsel %vm251, %v246, 0
    %276 = vmatprep.subr.bf16.mxu0 %v256
    %277 = vmatpush1.bf16.msra.mxu0 %v253
    %278 = vmatprep.subr.bf16.mxu0 0
    %279 = vmatpush1.bf16.msra.mxu0 0
    %280 = vmatprep.subr.bf16.mxu0 0
    %281 = vmatpush1.bf16.msra.mxu0 0
    %282 = vmatprep.subr.bf16.mxu0 0
    %283 = vmatpush1.bf16.msra.mxu0 0
    %284 = vmatprep.subr.bf16.mxu0 0
    %285 = vmatpush1.bf16.msra.mxu0 0
    %286 = vmatprep.subr.bf16.mxu0 0
    %287 = vmatpush1.bf16.msra.mxu0 0
    %288 = vmatprep.subr.bf16.mxu0 0
    %289 = vmatpush1.bf16.msra.mxu0 0
    %290 = vmatprep.subr.bf16.mxu0 0
    %291 = vmatpush1.bf16.msra.mxu0 0
    %292 = vmatprep.subr.bf16.mxu0 0
    %293 = vmatpush1.bf16.msra.mxu0 0
    %294 = vmatprep.subr.bf16.mxu0 0
    %295 = vmatpush1.bf16.msra.mxu0 0
    %296 = vmatprep.subr.bf16.mxu0 0
    %297 = vmatpush1.bf16.msra.mxu0 0
    %298 = vmatprep.subr.bf16.mxu0 0
    %299 = vmatpush1.bf16.msra.mxu0 0
    %300 = vmatprep.subr.bf16.mxu0 0
    %301 = vmatpush1.bf16.msra.mxu0 0
    %302 = vmatprep.subr.bf16.mxu0 0
    %303 = vmatpush1.bf16.msra.mxu0 0
    %304 = vmatprep.subr.bf16.mxu0 0
    %305 = vmatpush1.bf16.msra.mxu0 0
    %306 = vmatprep.subr.bf16.mxu0 0
    %307 = vmatpush1.bf16.msra.mxu0 0
    %308 = vmatprep.mubr.bf16.mxu0 0
    %309 = vmatmul.mubr.bf16.gmra.mrb[0].mxu0 %v249
    %v310 = vpop.f32.mrb[0].mxu0
    %v311 = vadd.f32 0.0, %v310
    %v312 = vpop.f32.mrb[0].mxu0
    %v313 = vadd.f32 0.0, %v312
    %v314 = vpop.f32.mrb[0].mxu0
    %v315 = vpop.f32.mrb[0].mxu0
    %316 = vdwg.mxu0
    %317 = vmatprep.subr.bf16.mxu0 %v262
    %318 = vmatpush1.bf16.msra.mxu0 %v259
    %319 = vmatprep.subr.bf16.mxu0 0
    %320 = vmatpush1.bf16.msra.mxu0 0
    %321 = vmatprep.subr.bf16.mxu0 0
    %322 = vmatpush1.bf16.msra.mxu0 0
    %323 = vmatprep.subr.bf16.mxu0 0
    %324 = vmatpush1.bf16.msra.mxu0 0
    %325 = vmatprep.subr.bf16.mxu0 0
    %326 = vmatpush1.bf16.msra.mxu0 0
    %327 = vmatprep.subr.bf16.mxu0 0
    %328 = vmatpush1.bf16.msra.mxu0 0
    %329 = vmatprep.subr.bf16.mxu0 0
    %330 = vmatpush1.bf16.msra.mxu0 0
    %331 = vmatprep.subr.bf16.mxu0 0
    %332 = vmatpush1.bf16.msra.mxu0 0
    %333 = vmatprep.subr.bf16.mxu0 0
    %334 = vmatpush1.bf16.msra.mxu0 0
    %335 = vmatprep.subr.bf16.mxu0 0
    %336 = vmatpush1.bf16.msra.mxu0 0
    %337 = vmatprep.subr.bf16.mxu0 0
    %338 = vmatpush1.bf16.msra.mxu0 0
    %339 = vmatprep.subr.bf16.mxu0 0
    %340 = vmatpush1.bf16.msra.mxu0 0
    %341 = vmatprep.subr.bf16.mxu0 0
    %342 = vmatpush1.bf16.msra.mxu0 0
    %343 = vmatprep.subr.bf16.mxu0 0
    %344 = vmatpush1.bf16.msra.mxu0 0
    %345 = vmatprep.subr.bf16.mxu0 0
    %346 = vmatpush1.bf16.msra.mxu0 0
    %347 = vmatprep.subr.bf16.mxu0 0
    %348 = vmatpush1.bf16.msra.mxu0 0
    %349 = vmatprep.mubr.bf16.mxu0 0
    %350 = vmatmul.mubr.bf16.gmra.mrb[0].mxu0 %v249
    %v351 = vpop.f32.mrb[0].mxu0
    %v352 = vadd.f32 0.0, %v351
    %v353 = vpop.f32.mrb[0].mxu0
    %v354 = vadd.f32 0.0, %v353
    %v355 = vpop.f32.mrb[0].mxu0
    %v356 = vpop.f32.mrb[0].mxu0
    %357 = vdwg.mxu0
    %358 = vmatprep.subr.bf16.mxu0 %v268
    %359 = vmatpush1.bf16.msra.mxu0 %v265
    %360 = vmatprep.subr.bf16.mxu0 0
    %361 = vmatpush1.bf16.msra.mxu0 0
    %362 = vmatprep.subr.bf16.mxu0 0
    %363 = vmatpush1.bf16.msra.mxu0 0
    %364 = vmatprep.subr.bf16.mxu0 0
    %365 = vmatpush1.bf16.msra.mxu0 0
    %366 = vmatprep.subr.bf16.mxu0 0
    %367 = vmatpush1.bf16.msra.mxu0 0
    %368 = vmatprep.subr.bf16.mxu0 0
    %369 = vmatpush1.bf16.msra.mxu0 0
    %370 = vmatprep.subr.bf16.mxu0 0
    %371 = vmatpush1.bf16.msra.mxu0 0
    %372 = vmatprep.subr.bf16.mxu0 0
    %373 = vmatpush1.bf16.msra.mxu0 0
    %374 = vmatprep.subr.bf16.mxu0 0
    %375 = vmatpush1.bf16.msra.mxu0 0
    %376 = vmatprep.subr.bf16.mxu0 0
    %377 = vmatpush1.bf16.msra.mxu0 0
    %378 = vmatprep.subr.bf16.mxu0 0
    %379 = vmatpush1.bf16.msra.mxu0 0
    %380 = vmatprep.subr.bf16.mxu0 0
    %381 = vmatpush1.bf16.msra.mxu0 0
    %382 = vmatprep.subr.bf16.mxu0 0
    %383 = vmatpush1.bf16.msra.mxu0 0
    %384 = vmatprep.subr.bf16.mxu0 0
    %385 = vmatpush1.bf16.msra.mxu0 0
    %386 = vmatprep.subr.bf16.mxu0 0
    %387 = vmatpush1.bf16.msra.mxu0 0
    %388 = vmatprep.subr.bf16.mxu0 0
    %389 = vmatpush1.bf16.msra.mxu0 0
    %390 = vmatprep.mubr.bf16.mxu0 0
    %391 = vmatmul.mubr.bf16.gmra.mrb[0].mxu0 %v249
    %v392 = vpop.f32.mrb[0].mxu0
    %v393 = vadd.f32 0.0, %v392
    %v394 = vpop.f32.mrb[0].mxu0
    %v395 = vadd.f32 0.0, %v394
    %v396 = vpop.f32.mrb[0].mxu0
    %v397 = vpop.f32.mrb[0].mxu0
    %398 = vdwg.mxu0
    %399 = vmatprep.subr.bf16.mxu0 %v274
    %400 = vmatpush1.bf16.msra.mxu0 %v271
    %401 = vmatprep.subr.bf16.mxu0 0
    %402 = vmatpush1.bf16.msra.mxu0 0
    %403 = vmatprep.subr.bf16.mxu0 0
    %404 = vmatpush1.bf16.msra.mxu0 0
    %405 = vmatprep.subr.bf16.mxu0 0
    %406 = vmatpush1.bf16.msra.mxu0 0
    %407 = vmatprep.subr.bf16.mxu0 0
    %408 = vmatpush1.bf16.msra.mxu0 0
    %409 = vmatprep.subr.bf16.mxu0 0
    %410 = vmatpush1.bf16.msra.mxu0 0
    %411 = vmatprep.subr.bf16.mxu0 0
    %412 = vmatpush1.bf16.msra.mxu0 0
    %413 = vmatprep.subr.bf16.mxu0 0
    %414 = vmatpush1.bf16.msra.mxu0 0
    %415 = vmatprep.subr.bf16.mxu0 0
    %416 = vmatpush1.bf16.msra.mxu0 0
    %417 = vmatprep.subr.bf16.mxu0 0
    %418 = vmatpush1.bf16.msra.mxu0 0
    %419 = vmatprep.subr.bf16.mxu0 0
    %420 = vmatpush1.bf16.msra.mxu0 0
    %421 = vmatprep.subr.bf16.mxu0 0
    %422 = vmatpush1.bf16.msra.mxu0 0
    %423 = vmatprep.subr.bf16.mxu0 0
    %424 = vmatpush1.bf16.msra.mxu0 0
    %425 = vmatprep.subr.bf16.mxu0 0
    %426 = vmatpush1.bf16.msra.mxu0 0
    %427 = vmatprep.subr.bf16.mxu0 0
    %428 = vmatpush1.bf16.msra.mxu0 0
    %429 = vmatprep.subr.bf16.mxu0 0
    %430 = vmatpush1.bf16.msra.mxu0 0
    %431 = vmatprep.mubr.bf16.mxu0 0
    %432 = vmatmul.mubr.bf16.gmra.mrb[0].mxu0 %v249
    %v433 = vpop.f32.mrb[0].mxu0
    %v434 = vadd.f32 0.0, %v433
    %v435 = vpop.f32.mrb[0].mxu0
    %v436 = vadd.f32 0.0, %v435
    %v437 = vpop.f32.mrb[0].mxu0
    %v438 = vpop.f32.mrb[0].mxu0
    %439 = vdwg.mxu0
    %v468 = vunpack.c.l.b16 %v178
    %v469 = vunpack.c.h.b16 %v178
    %v470 = vunpack.c.l.b16 %v179
    %v471 = vunpack.c.h.b16 %v179
    %v472 = vunpack.c.l.b16 %v180
    %v473 = vunpack.c.h.b16 %v180
    %v474 = vunpack.c.l.b16 %v181
    %v475 = vunpack.c.h.b16 %v181
    %v476 = vunpack.c.l.b16 %v182
    %v477 = vunpack.c.h.b16 %v182
    %v478 = vunpack.c.l.b16 %v183
    %v479 = vunpack.c.h.b16 %v183
    %v480 = vunpack.c.l.b16 %v184
    %v481 = vunpack.c.h.b16 %v184
    %v482 = vunpack.c.l.b16 %v185
    %v483 = vunpack.c.h.b16 %v185
    %v484 = vunpack.c.l.b16 %v186
    %v485 = vunpack.c.h.b16 %v186
    %v486 = vunpack.c.l.b16 %v187
    %v487 = vunpack.c.h.b16 %v187
    %v488 = vunpack.c.l.b16 %v188
    %v489 = vunpack.c.h.b16 %v188
    %v490 = vunpack.c.l.b16 %v189
    %v491 = vunpack.c.h.b16 %v189
    %v492 = vunpack.c.l.b16 %v190
    %v493 = vunpack.c.h.b16 %v190
    %v494 = vunpack.c.l.b16 %v191
    %v495 = vunpack.c.h.b16 %v191
    %v496 = vunpack.c.l.b16 %v192
    %v497 = vunpack.c.h.b16 %v192
    %v498 = vunpack.c.l.b16 %v193
    %v499 = vunpack.c.h.b16 %v193
    %v500 = vunpack.c.l.b16 %v194
    %v501 = vunpack.c.h.b16 %v194
    %v502 = vunpack.c.l.b16 %v195
    %v503 = vunpack.c.h.b16 %v195
    %v504 = vunpack.c.l.b16 %v196
    %v505 = vunpack.c.h.b16 %v196
    %v506 = vunpack.c.l.b16 %v197
    %v507 = vunpack.c.h.b16 %v197
    %v508 = vunpack.c.l.b16 %v198
    %v509 = vunpack.c.h.b16 %v198
    %v510 = vunpack.c.l.b16 %v199
    %v511 = vunpack.c.h.b16 %v199
    %v512 = vunpack.c.l.b16 %v200
    %v513 = vunpack.c.h.b16 %v200
    %v514 = vunpack.c.l.b16 %v201
    %v515 = vunpack.c.h.b16 %v201
    %v516 = vunpack.c.l.b16 %v202
    %v517 = vunpack.c.h.b16 %v202
    %v518 = vunpack.c.l.b16 %v203
    %v519 = vunpack.c.h.b16 %v203
    %v520 = vunpack.c.l.b16 %v204
    %v521 = vunpack.c.h.b16 %v204
    %v522 = vunpack.c.l.b16 %v205
    %v523 = vunpack.c.h.b16 %v205
    %v524 = vpack.c.b16 %v476, %v468
    %v525 = vpack.c.b16 %v477, %v469
    %v526 = vpack.c.b16 %v478, %v470
    %v527 = vpack.c.b16 %v479, %v471
    %v528 = vpack.c.b16 %v480, %v472
    %v529 = vpack.c.b16 %v481, %v473
    %v530 = vpack.c.b16 %v482, %v474
    %v531 = vpack.c.b16 %v483, %v475
    %v532 = vpack.c.b16 %v492, %v484
    %v533 = vpack.c.b16 %v493, %v485
    %v534 = vpack.c.b16 %v494, %v486
    %v535 = vpack.c.b16 %v495, %v487
    %v536 = vpack.c.b16 %v496, %v488
    %v537 = vpack.c.b16 %v497, %v489
    %v538 = vpack.c.b16 %v498, %v490
    %v539 = vpack.c.b16 %v499, %v491
    %v540 = vpack.c.b16 %v508, %v500
    %v541 = vpack.c.b16 %v509, %v501
    %v542 = vpack.c.b16 %v510, %v502
    %v543 = vpack.c.b16 %v511, %v503
    %v544 = vpack.c.b16 %v512, %v504
    %v545 = vpack.c.b16 %v513, %v505
    %v546 = vpack.c.b16 %v514, %v506
    %v547 = vpack.c.b16 %v515, %v507
    %v548 = vpack.c.b16 %v516, %v516
    %v549 = vpack.c.b16 %v517, %v517
    %v550 = vpack.c.b16 %v518, %v518
    %v551 = vpack.c.b16 %v519, %v519
    %v552 = vpack.c.b16 %v520, %v520
    %v553 = vpack.c.b16 %v521, %v521
    %v554 = vpack.c.b16 %v522, %v522
    %v555 = vpack.c.b16 %v523, %v523
    %vm580 = vcmask 408576
    %v582 = vsel %vm580, %v177, 0
    %vm584 = vcmask 1040384
    %v586 = vsel %vm584, %v548, 0
    %v589 = vsel %vm584, %v549, 0
    %v592 = vsel %vm584, %v550, 0
    %v595 = vsel %vm584, %v551, 0
    %v598 = vsel %vm584, %v552, 0
    %v601 = vsel %vm584, %v553, 0
    %v604 = vsel %vm584, %v554, 0
    %v607 = vsel %vm584, %v555, 0
    %609 = vmatprep.subr.bf16.mxu0 %v525
    %610 = vmatpush1.bf16.msra.mxu0 %v524
    %611 = vmatprep.subr.bf16.mxu0 %v533
    %612 = vmatpush1.bf16.msra.mxu0 %v532
    %613 = vmatprep.subr.bf16.mxu0 %v541
    %614 = vmatpush1.bf16.msra.mxu0 %v540
    %615 = vmatprep.subr.bf16.mxu0 %v589
    %616 = vmatpush1.bf16.msra.mxu0 %v586
    %617 = vmatprep.subr.bf16.mxu0 0
    %618 = vmatpush1.bf16.msra.mxu0 0
    %619 = vmatprep.subr.bf16.mxu0 0
    %620 = vmatpush1.bf16.msra.mxu0 0
    %621 = vmatprep.subr.bf16.mxu0 0
    %622 = vmatpush1.bf16.msra.mxu0 0
    %623 = vmatprep.subr.bf16.mxu0 0
    %624 = vmatpush1.bf16.msra.mxu0 0
    %625 = vmatprep.subr.bf16.mxu0 0
    %626 = vmatpush1.bf16.msra.mxu0 0
    %627 = vmatprep.subr.bf16.mxu0 0
    %628 = vmatpush1.bf16.msra.mxu0 0
    %629 = vmatprep.subr.bf16.mxu0 0
    %630 = vmatpush1.bf16.msra.mxu0 0
    %631 = vmatprep.subr.bf16.mxu0 0
    %632 = vmatpush1.bf16.msra.mxu0 0
    %633 = vmatprep.subr.bf16.mxu0 0
    %634 = vmatpush1.bf16.msra.mxu0 0
    %635 = vmatprep.subr.bf16.mxu0 0
    %636 = vmatpush1.bf16.msra.mxu0 0
    %637 = vmatprep.subr.bf16.mxu0 0
    %638 = vmatpush1.bf16.msra.mxu0 0
    %639 = vmatprep.subr.bf16.mxu0 0
    %640 = vmatpush1.bf16.msra.mxu0 0
    %641 = vmatprep.mubr.bf16.mxu0 0
    %642 = vmatmul.mubr.bf16.gmra.mrb[0].mxu0 %v582
    %v643 = vpop.f32.mrb[0].mxu0
    %v644 = vadd.f32 %v311, %v643
    %v645 = vpop.f32.mrb[0].mxu0
    %v646 = vadd.f32 %v313, %v645
    %v647 = vpop.f32.mrb[0].mxu0
    %v648 = vpop.f32.mrb[0].mxu0
    %649 = vdwg.mxu0
    %650 = vmatprep.subr.bf16.mxu0 %v527
    %651 = vmatpush1.bf16.msra.mxu0 %v526
    %652 = vmatprep.subr.bf16.mxu0 %v535
    %653 = vmatpush1.bf16.msra.mxu0 %v534
    %654 = vmatprep.subr.bf16.mxu0 %v543
    %655 = vmatpush1.bf16.msra.mxu0 %v542
    %656 = vmatprep.subr.bf16.mxu0 %v595
    %657 = vmatpush1.bf16.msra.mxu0 %v592
    %658 = vmatprep.subr.bf16.mxu0 0
    %659 = vmatpush1.bf16.msra.mxu0 0
    %660 = vmatprep.subr.bf16.mxu0 0
    %661 = vmatpush1.bf16.msra.mxu0 0
    %662 = vmatprep.subr.bf16.mxu0 0
    %663 = vmatpush1.bf16.msra.mxu0 0
    %664 = vmatprep.subr.bf16.mxu0 0
    %665 = vmatpush1.bf16.msra.mxu0 0
    %666 = vmatprep.subr.bf16.mxu0 0
    %667 = vmatpush1.bf16.msra.mxu0 0
    %668 = vmatprep.subr.bf16.mxu0 0
    %669 = vmatpush1.bf16.msra.mxu0 0
    %670 = vmatprep.subr.bf16.mxu0 0
    %671 = vmatpush1.bf16.msra.mxu0 0
    %672 = vmatprep.subr.bf16.mxu0 0
    %673 = vmatpush1.bf16.msra.mxu0 0
    %674 = vmatprep.subr.bf16.mxu0 0
    %675 = vmatpush1.bf16.msra.mxu0 0
    %676 = vmatprep.subr.bf16.mxu0 0
    %677 = vmatpush1.bf16.msra.mxu0 0
    %678 = vmatprep.subr.bf16.mxu0 0
    %679 = vmatpush1.bf16.msra.mxu0 0
    %680 = vmatprep.subr.bf16.mxu0 0
    %681 = vmatpush1.bf16.msra.mxu0 0
    %682 = vmatprep.mubr.bf16.mxu0 0
    %683 = vmatmul.mubr.bf16.gmra.mrb[0].mxu0 %v582
    %v684 = vpop.f32.mrb[0].mxu0
    %v685 = vadd.f32 %v352, %v684
    %v686 = vpop.f32.mrb[0].mxu0
    %v687 = vadd.f32 %v354, %v686
    %v688 = vpop.f32.mrb[0].mxu0
    %v689 = vpop.f32.mrb[0].mxu0
    %690 = vdwg.mxu0
    %691 = vmatprep.subr.bf16.mxu0 %v529
    %692 = vmatpush1.bf16.msra.mxu0 %v528
    %693 = vmatprep.subr.bf16.mxu0 %v537
    %694 = vmatpush1.bf16.msra.mxu0 %v536
    %695 = vmatprep.subr.bf16.mxu0 %v545
    %696 = vmatpush1.bf16.msra.mxu0 %v544
    %697 = vmatprep.subr.bf16.mxu0 %v601
    %698 = vmatpush1.bf16.msra.mxu0 %v598
    %699 = vmatprep.subr.bf16.mxu0 0
    %700 = vmatpush1.bf16.msra.mxu0 0
    %701 = vmatprep.subr.bf16.mxu0 0
    %702 = vmatpush1.bf16.msra.mxu0 0
    %703 = vmatprep.subr.bf16.mxu0 0
    %704 = vmatpush1.bf16.msra.mxu0 0
    %705 = vmatprep.subr.bf16.mxu0 0
    %706 = vmatpush1.bf16.msra.mxu0 0
    %707 = vmatprep.subr.bf16.mxu0 0
    %708 = vmatpush1.bf16.msra.mxu0 0
    %709 = vmatprep.subr.bf16.mxu0 0
    %710 = vmatpush1.bf16.msra.mxu0 0
    %711 = vmatprep.subr.bf16.mxu0 0
    %712 = vmatpush1.bf16.msra.mxu0 0
    %713 = vmatprep.subr.bf16.mxu0 0
    %714 = vmatpush1.bf16.msra.mxu0 0
    %715 = vmatprep.subr.bf16.mxu0 0
    %716 = vmatpush1.bf16.msra.mxu0 0
    %717 = vmatprep.subr.bf16.mxu0 0
    %718 = vmatpush1.bf16.msra.mxu0 0
    %719 = vmatprep.subr.bf16.mxu0 0
    %720 = vmatpush1.bf16.msra.mxu0 0
    %721 = vmatprep.subr.bf16.mxu0 0
    %722 = vmatpush1.bf16.msra.mxu0 0
    %723 = vmatprep.mubr.bf16.mxu0 0
    %724 = vmatmul.mubr.bf16.gmra.mrb[0].mxu0 %v582
    %v725 = vpop.f32.mrb[0].mxu0
    %v726 = vadd.f32 %v393, %v725
    %v727 = vpop.f32.mrb[0].mxu0
    %v728 = vadd.f32 %v395, %v727
    %v729 = vpop.f32.mrb[0].mxu0
    %v730 = vpop.f32.mrb[0].mxu0
    %731 = vdwg.mxu0
    %732 = vmatprep.subr.bf16.mxu0 %v531
    %733 = vmatpush1.bf16.msra.mxu0 %v530
    %734 = vmatprep.subr.bf16.mxu0 %v539
    %735 = vmatpush1.bf16.msra.mxu0 %v538
    %736 = vmatprep.subr.bf16.mxu0 %v547
    %737 = vmatpush1.bf16.msra.mxu0 %v546
    %738 = vmatprep.subr.bf16.mxu0 %v607
    %739 = vmatpush1.bf16.msra.mxu0 %v604
    %740 = vmatprep.subr.bf16.mxu0 0
    %741 = vmatpush1.bf16.msra.mxu0 0
    %742 = vmatprep.subr.bf16.mxu0 0
    %743 = vmatpush1.bf16.msra.mxu0 0
    %744 = vmatprep.subr.bf16.mxu0 0
    %745 = vmatpush1.bf16.msra.mxu0 0
    %746 = vmatprep.subr.bf16.mxu0 0
    %747 = vmatpush1.bf16.msra.mxu0 0
    %748 = vmatprep.subr.bf16.mxu0 0
    %749 = vmatpush1.bf16.msra.mxu0 0
    %750 = vmatprep.subr.bf16.mxu0 0
    %751 = vmatpush1.bf16.msra.mxu0 0
    %752 = vmatprep.subr.bf16.mxu0 0
    %753 = vmatpush1.bf16.msra.mxu0 0
    %754 = vmatprep.subr.bf16.mxu0 0
    %755 = vmatpush1.bf16.msra.mxu0 0
    %756 = vmatprep.subr.bf16.mxu0 0
    %757 = vmatpush1.bf16.msra.mxu0 0
    %758 = vmatprep.subr.bf16.mxu0 0
    %759 = vmatpush1.bf16.msra.mxu0 0
    %760 = vmatprep.subr.bf16.mxu0 0
    %761 = vmatpush1.bf16.msra.mxu0 0
    %762 = vmatprep.subr.bf16.mxu0 0
    %763 = vmatpush1.bf16.msra.mxu0 0
    %764 = vmatprep.mubr.bf16.mxu0 0
    %765 = vmatmul.mubr.bf16.gmra.mrb[0].mxu0 %v582
    %v766 = vpop.f32.mrb[0].mxu0
    %v767 = vadd.f32 %v434, %v766
    %v768 = vpop.f32.mrb[0].mxu0
    %v769 = vadd.f32 %v436, %v768
    %v770 = vpop.f32.mrb[0].mxu0
    %v771 = vpop.f32.mrb[0].mxu0
    %772 = vdwg.mxu0
    %v773 = vld [vmem:[#allocation10] sm:$0xff]
    %v775 = vlaneseq
    %v776 = vshrl.u32 %v775, 7
    %v777 = vsub.s32 0, %v776
    %v778 = vrot.slane %v773, %v777
    %v779 = vlaneseq
    %v780 = vshrl.u32 %v779, 7
    %v781 = vsub.s32 1, %v780
    %v782 = vrot.slane %v773, %v781
    %v783 = vlaneseq
    %v784 = vshrl.u32 %v783, 7
    %v785 = vsub.s32 2, %v784
    %v786 = vrot.slane %v773, %v785
    %v787 = vlaneseq
    %v788 = vshrl.u32 %v787, 7
    %v789 = vsub.s32 3, %v788
    %v790 = vrot.slane %v773, %v789
    %v791 = vlaneseq
    %v792 = vshrl.u32 %v791, 7
    %v793 = vsub.s32 4, %v792
    %v794 = vrot.slane %v773, %v793
    %v795 = vlaneseq
    %v796 = vshrl.u32 %v795, 7
    %v797 = vsub.s32 5, %v796
    %v798 = vrot.slane %v773, %v797
    %v799 = vlaneseq
    %v800 = vshrl.u32 %v799, 7
    %v801 = vsub.s32 6, %v800
    %v802 = vrot.slane %v773, %v801
    %v803 = vlaneseq
    %v804 = vshrl.u32 %v803, 7
    %v805 = vsub.s32 7, %v804
    %v806 = vrot.slane %v773, %v805
    %v815 = vadd.f32 %v644, %v778
    %v816 = vadd.f32 %v646, %v782
    %v817 = vadd.f32 %v685, %v786
    %v818 = vadd.f32 %v687, %v790
    %v819 = vadd.f32 %v726, %v794
    %v820 = vadd.f32 %v728, %v798
    %v821 = vadd.f32 %v767, %v802
    %v822 = vadd.f32 %v769, %v806
    %v823 = vmax.f32 %v815, 0.0
    %v824 = vmax.f32 %v816, 0.0
    %v825 = vmax.f32 %v817, 0.0
    %v826 = vmax.f32 %v818, 0.0
    %v827 = vmax.f32 %v819, 0.0
    %v828 = vmax.f32 %v820, 0.0
    %v829 = vmax.f32 %v821, 0.0
    %v830 = vmax.f32 %v822, 0.0
    %v831 = vpack.c.bf16 %v823, %v823
    %v832 = vpack.c.bf16 %v824, %v824
    %v833 = vpack.c.bf16 %v825, %v825
    %v834 = vpack.c.bf16 %v826, %v826
    %v835 = vpack.c.bf16 %v827, %v827
    %v836 = vpack.c.bf16 %v828, %v828
    %v837 = vpack.c.bf16 %v829, %v829
    %v838 = vpack.c.bf16 %v830, %v830
    %v839 = vld [vmem:[#allocation11] sm:$0xff]
    %v840 = vld [vmem:[#allocation11 + $0x8] sm:$0xff]
    %v841 = vld [vmem:[#allocation11 + $0x10] sm:$0xff]
    %v842 = vld [vmem:[#allocation11 + $0x18] sm:$0xff]
    %v843 = vld [vmem:[#allocation11 + $0x20] sm:$0xff]
    %v844 = vld [vmem:[#allocation11 + $0x28] sm:$0xff]
    %v845 = vld [vmem:[#allocation11 + $0x30] sm:$0xff]
    %v846 = vld [vmem:[#allocation11 + $0x38] sm:$0xff]
    %v847 = vld [vmem:[#allocation11 + $0x40] sm:$0xff]
    %v848 = vld [vmem:[#allocation11 + $0x48] sm:$0xff]
    %v849 = vld [vmem:[#allocation11 + $0x50] sm:$0xff]
    %v850 = vld [vmem:[#allocation11 + $0x58] sm:$0xff]
    %v851 = vld [vmem:[#allocation11 + $0x60] sm:$0xff]
    %v852 = vld [vmem:[#allocation11 + $0x68] sm:$0xff]
    %v853 = vld [vmem:[#allocation11 + $0x70] sm:$0xff]
    %v854 = vld [vmem:[#allocation11 + $0x78] sm:$0xff]
    %v855 = vld [vmem:[#allocation11 + $0x80] sm:$0xff]
    %v856 = vld [vmem:[#allocation11 + $0x88] sm:$0xff]
    %v857 = vld [vmem:[#allocation11 + $0x90] sm:$0xff]
    %v858 = vld [vmem:[#allocation11 + $0x98] sm:$0xff]
    %v859 = vld [vmem:[#allocation11 + $0xa0] sm:$0xff]
    %v860 = vld [vmem:[#allocation11 + $0xa8] sm:$0xff]
    %v861 = vld [vmem:[#allocation11 + $0xb0] sm:$0xff]
    %v862 = vld [vmem:[#allocation11 + $0xb8] sm:$0xff]
    %v863 = vld [vmem:[#allocation11 + $0xc0] sm:$0xff]
    %v864 = vld [vmem:[#allocation11 + $0xc8] sm:$0xff]
    %v865 = vld [vmem:[#allocation11 + $0xd0] sm:$0xff]
    %v866 = vld [vmem:[#allocation11 + $0xd8] sm:$0xff]
    %v867 = vld [vmem:[#allocation11 + $0xe0] sm:$0xff]
    %v868 = vld [vmem:[#allocation11 + $0xe8] sm:$0xff]
    %v869 = vld [vmem:[#allocation11 + $0xf0] sm:$0xff]
    %v870 = vld [vmem:[#allocation11 + $0xf8] sm:$0xff]
    %v871 = vld [vmem:[#allocation11 + $0x100] sm:$0xff]
    %v872 = vld [vmem:[#allocation11 + $0x108] sm:$0xff]
    %v873 = vld [vmem:[#allocation11 + $0x110] sm:$0xff]
    %v874 = vld [vmem:[#allocation11 + $0x118] sm:$0xff]
    %v875 = vld [vmem:[#allocation11 + $0x120] sm:$0xff]
    %v876 = vld [vmem:[#allocation11 + $0x128] sm:$0xff]
    %v877 = vld [vmem:[#allocation11 + $0x130] sm:$0xff]
    %v878 = vld [vmem:[#allocation11 + $0x138] sm:$0xff]
    %v879 = vld [vmem:[#allocation11 + $0x140] sm:$0xff]
    %v880 = vld [vmem:[#allocation11 + $0x148] sm:$0xff]
    %v881 = vld [vmem:[#allocation11 + $0x150] sm:$0xff]
    %v882 = vld [vmem:[#allocation11 + $0x158] sm:$0xff]
    %v883 = vld [vmem:[#allocation11 + $0x160] sm:$0xff]
    %v884 = vld [vmem:[#allocation11 + $0x168] sm:$0xff]
    %v885 = vld [vmem:[#allocation11 + $0x170] sm:$0xff]
    %v886 = vld [vmem:[#allocation11 + $0x178] sm:$0xff]
    %v887 = vld [vmem:[#allocation11 + $0x180] sm:$0xff]
    %v888 = vld [vmem:[#allocation11 + $0x188] sm:$0xff]
    %v889 = vld [vmem:[#allocation11 + $0x190] sm:$0xff]
    %v890 = vld [vmem:[#allocation11 + $0x198] sm:$0xff]
    %v891 = vld [vmem:[#allocation11 + $0x1a0] sm:$0xff]
    %v892 = vld [vmem:[#allocation11 + $0x1a8] sm:$0xff]
    %v893 = vld [vmem:[#allocation11 + $0x1b0] sm:$0xff]
    %v894 = vld [vmem:[#allocation11 + $0x1b8] sm:$0xff]
    %v895 = vld [vmem:[#allocation11 + $0x1c0] sm:$0xff]
    %v896 = vld [vmem:[#allocation11 + $0x1c8] sm:$0xff]
    %v897 = vld [vmem:[#allocation11 + $0x1d0] sm:$0xff]
    %v898 = vld [vmem:[#allocation11 + $0x1d8] sm:$0xff]
    %v899 = vld [vmem:[#allocation11 + $0x1e0] sm:$0xff]
    %v900 = vld [vmem:[#allocation11 + $0x1e8] sm:$0xff]
    %v901 = vld [vmem:[#allocation11 + $0x1f0] sm:$0xff]
    %v902 = vld [vmem:[#allocation11 + $0x1f8] sm:$0xff]
    %v903 = vld [vmem:[#allocation11 + $0x200] sm:$0xff]
    %v904 = vld [vmem:[#allocation11 + $0x208] sm:$0xff]
    %v905 = vld [vmem:[#allocation11 + $0x210] sm:$0xff]
    %v906 = vld [vmem:[#allocation11 + $0x218] sm:$0xff]
    %v907 = vld [vmem:[#allocation11 + $0x220] sm:$0xff]
    %v908 = vld [vmem:[#allocation11 + $0x228] sm:$0xff]
    %v909 = vld [vmem:[#allocation11 + $0x230] sm:$0xff]
    %v910 = vld [vmem:[#allocation11 + $0x238] sm:$0xff]
    %v911 = vld [vmem:[#allocation11 + $0x240] sm:$0xff]
    %v912 = vld [vmem:[#allocation11 + $0x248] sm:$0xff]
    %v913 = vld [vmem:[#allocation11 + $0x250] sm:$0xff]
    %v914 = vld [vmem:[#allocation11 + $0x258] sm:$0xff]
    %v915 = vld [vmem:[#allocation11 + $0x260] sm:$0xff]
    %v916 = vld [vmem:[#allocation11 + $0x268] sm:$0xff]
    %v917 = vld [vmem:[#allocation11 + $0x270] sm:$0xff]
    %v918 = vld [vmem:[#allocation11 + $0x278] sm:$0xff]
    %v919 = vld [vmem:[#allocation11 + $0x280] sm:$0xff]
    %v920 = vld [vmem:[#allocation11 + $0x288] sm:$0xff]
    %v921 = vld [vmem:[#allocation11 + $0x290] sm:$0xff]
    %v922 = vld [vmem:[#allocation11 + $0x298] sm:$0xff]
    %v923 = vld [vmem:[#allocation11 + $0x2a0] sm:$0xff]
    %v924 = vld [vmem:[#allocation11 + $0x2a8] sm:$0xff]
    %v925 = vld [vmem:[#allocation11 + $0x2b0] sm:$0xff]
    %v926 = vld [vmem:[#allocation11 + $0x2b8] sm:$0xff]
    %v927 = vld [vmem:[#allocation11 + $0x2c0] sm:$0xff]
    %v928 = vld [vmem:[#allocation11 + $0x2c8] sm:$0xff]
    %v929 = vld [vmem:[#allocation11 + $0x2d0] sm:$0xff]
    %v930 = vld [vmem:[#allocation11 + $0x2d8] sm:$0xff]
    %v931 = vld [vmem:[#allocation11 + $0x2e0] sm:$0xff]
    %v932 = vld [vmem:[#allocation11 + $0x2e8] sm:$0xff]
    %v933 = vld [vmem:[#allocation11 + $0x2f0] sm:$0xff]
    %v934 = vld [vmem:[#allocation11 + $0x2f8] sm:$0xff]
    %v935 = vld [vmem:[#allocation11 + $0x300] sm:$0xff]
    %v936 = vld [vmem:[#allocation11 + $0x308] sm:$0xff]
    %v937 = vld [vmem:[#allocation11 + $0x310] sm:$0xff]
    %v938 = vld [vmem:[#allocation11 + $0x318] sm:$0xff]
    %v939 = vld [vmem:[#allocation11 + $0x320] sm:$0xff]
    %v940 = vld [vmem:[#allocation11 + $0x328] sm:$0xff]
    %v941 = vld [vmem:[#allocation11 + $0x330] sm:$0xff]
    %v942 = vld [vmem:[#allocation11 + $0x338] sm:$0xff]
    %v943 = vld [vmem:[#allocation11 + $0x340] sm:$0xff]
    %v944 = vld [vmem:[#allocation11 + $0x348] sm:$0xff]
    %v945 = vld [vmem:[#allocation11 + $0x350] sm:$0xff]
    %v946 = vld [vmem:[#allocation11 + $0x358] sm:$0xff]
    %v947 = vld [vmem:[#allocation11 + $0x360] sm:$0xff]
    %v948 = vld [vmem:[#allocation11 + $0x368] sm:$0xff]
    %v949 = vld [vmem:[#allocation11 + $0x370] sm:$0xff]
    %v950 = vld [vmem:[#allocation11 + $0x378] sm:$0xff]
    %v951 = vld [vmem:[#allocation11 + $0x380] sm:$0xff]
    %v952 = vld [vmem:[#allocation11 + $0x388] sm:$0xff]
    %v953 = vld [vmem:[#allocation11 + $0x390] sm:$0xff]
    %v954 = vld [vmem:[#allocation11 + $0x398] sm:$0xff]
    %v955 = vld [vmem:[#allocation11 + $0x3a0] sm:$0xff]
    %v956 = vld [vmem:[#allocation11 + $0x3a8] sm:$0xff]
    %v957 = vld [vmem:[#allocation11 + $0x3b0] sm:$0xff]
    %v958 = vld [vmem:[#allocation11 + $0x3b8] sm:$0xff]
    %v959 = vld [vmem:[#allocation11 + $0x3c0] sm:$0xff]
    %v960 = vld [vmem:[#allocation11 + $0x3c8] sm:$0xff]
    %v961 = vld [vmem:[#allocation11 + $0x3d0] sm:$0xff]
    %v962 = vld [vmem:[#allocation11 + $0x3d8] sm:$0xff]
    %v963 = vld [vmem:[#allocation11 + $0x3e0] sm:$0xff]
    %v964 = vld [vmem:[#allocation11 + $0x3e8] sm:$0xff]
    %v965 = vld [vmem:[#allocation11 + $0x3f0] sm:$0xff]
    %v966 = vld [vmem:[#allocation11 + $0x3f8] sm:$0xff]
    %v967 = vld [vmem:[#allocation11 + $0x400] sm:$0xff]
    %v968 = vld [vmem:[#allocation11 + $0x408] sm:$0xff]
    %v969 = vld [vmem:[#allocation11 + $0x410] sm:$0xff]
    %v970 = vld [vmem:[#allocation11 + $0x418] sm:$0xff]
    %v971 = vld [vmem:[#allocation11 + $0x420] sm:$0xff]
    %v972 = vld [vmem:[#allocation11 + $0x428] sm:$0xff]
    %v973 = vld [vmem:[#allocation11 + $0x430] sm:$0xff]
    %v974 = vld [vmem:[#allocation11 + $0x438] sm:$0xff]
    %v975 = vld [vmem:[#allocation11 + $0x440] sm:$0xff]
    %v976 = vld [vmem:[#allocation11 + $0x448] sm:$0xff]
    %v977 = vld [vmem:[#allocation11 + $0x450] sm:$0xff]
    %v978 = vld [vmem:[#allocation11 + $0x458] sm:$0xff]
    %v979 = vld [vmem:[#allocation11 + $0x460] sm:$0xff]
    %v980 = vld [vmem:[#allocation11 + $0x468] sm:$0xff]
    %v981 = vld [vmem:[#allocation11 + $0x470] sm:$0xff]
    %v982 = vld [vmem:[#allocation11 + $0x478] sm:$0xff]
    %v983 = vld [vmem:[#allocation11 + $0x480] sm:$0xff]
    %v984 = vld [vmem:[#allocation11 + $0x488] sm:$0xff]
    %v985 = vld [vmem:[#allocation11 + $0x490] sm:$0xff]
    %v986 = vld [vmem:[#allocation11 + $0x498] sm:$0xff]
    %v987 = vld [vmem:[#allocation11 + $0x4a0] sm:$0xff]
    %v988 = vld [vmem:[#allocation11 + $0x4a8] sm:$0xff]
    %v989 = vld [vmem:[#allocation11 + $0x4b0] sm:$0xff]
    %v990 = vld [vmem:[#allocation11 + $0x4b8] sm:$0xff]
    %v991 = vld [vmem:[#allocation11 + $0x4c0] sm:$0xff]
    %v992 = vld [vmem:[#allocation11 + $0x4c8] sm:$0xff]
    %v993 = vld [vmem:[#allocation11 + $0x4d0] sm:$0xff]
    %v994 = vld [vmem:[#allocation11 + $0x4d8] sm:$0xff]
    %v995 = vld [vmem:[#allocation11 + $0x4e0] sm:$0xff]
    %v996 = vld [vmem:[#allocation11 + $0x4e8] sm:$0xff]
    %v997 = vld [vmem:[#allocation11 + $0x4f0] sm:$0xff]
    %v998 = vld [vmem:[#allocation11 + $0x4f8] sm:$0xff]
    %v999 = vld [vmem:[#allocation11 + $0x500] sm:$0xff]
    %v1000 = vld [vmem:[#allocation11 + $0x508] sm:$0xff]
    %v1001 = vld [vmem:[#allocation11 + $0x510] sm:$0xff]
    %v1002 = vld [vmem:[#allocation11 + $0x518] sm:$0xff]
    %v1003 = vld [vmem:[#allocation11 + $0x520] sm:$0xff]
    %v1004 = vld [vmem:[#allocation11 + $0x528] sm:$0xff]
    %v1005 = vld [vmem:[#allocation11 + $0x530] sm:$0xff]
    %v1006 = vld [vmem:[#allocation11 + $0x538] sm:$0xff]
    %v1007 = vld [vmem:[#allocation11 + $0x540] sm:$0xff]
    %v1008 = vld [vmem:[#allocation11 + $0x548] sm:$0xff]
    %v1009 = vld [vmem:[#allocation11 + $0x550] sm:$0xff]
    %v1010 = vld [vmem:[#allocation11 + $0x558] sm:$0xff]
    %v1011 = vld [vmem:[#allocation11 + $0x560] sm:$0xff]
    %v1012 = vld [vmem:[#allocation11 + $0x568] sm:$0xff]
    %v1013 = vld [vmem:[#allocation11 + $0x570] sm:$0xff]
    %v1014 = vld [vmem:[#allocation11 + $0x578] sm:$0xff]
    %v1015 = vld [vmem:[#allocation11 + $0x580] sm:$0xff]
    %v1016 = vld [vmem:[#allocation11 + $0x588] sm:$0xff]
    %v1017 = vld [vmem:[#allocation11 + $0x590] sm:$0xff]
    %v1018 = vld [vmem:[#allocation11 + $0x598] sm:$0xff]
    %v1019 = vld [vmem:[#allocation11 + $0x5a0] sm:$0xff]
    %v1020 = vld [vmem:[#allocation11 + $0x5a8] sm:$0xff]
    %v1021 = vld [vmem:[#allocation11 + $0x5b0] sm:$0xff]
    %v1022 = vld [vmem:[#allocation11 + $0x5b8] sm:$0xff]
    %v1023 = vld [vmem:[#allocation11 + $0x5c0] sm:$0xff]
    %v1024 = vld [vmem:[#allocation11 + $0x5c8] sm:$0xff]
    %v1025 = vld [vmem:[#allocation11 + $0x5d0] sm:$0xff]
    %v1026 = vld [vmem:[#allocation11 + $0x5d8] sm:$0xff]
    %v1027 = vld [vmem:[#allocation11 + $0x5e0] sm:$0xff]
    %v1028 = vld [vmem:[#allocation11 + $0x5e8] sm:$0xff]
    %v1029 = vld [vmem:[#allocation11 + $0x5f0] sm:$0xff]
    %v1030 = vld [vmem:[#allocation11 + $0x5f8] sm:$0xff]
    %v1031 = vld [vmem:[#allocation11 + $0x600] sm:$0xff]
    %v1032 = vld [vmem:[#allocation11 + $0x608] sm:$0xff]
    %v1033 = vld [vmem:[#allocation11 + $0x610] sm:$0xff]
    %v1034 = vld [vmem:[#allocation11 + $0x618] sm:$0xff]
    %v1035 = vld [vmem:[#allocation11 + $0x620] sm:$0xff]
    %v1036 = vld [vmem:[#allocation11 + $0x628] sm:$0xff]
    %v1037 = vld [vmem:[#allocation11 + $0x630] sm:$0xff]
    %v1038 = vld [vmem:[#allocation11 + $0x638] sm:$0xff]
    %v1039 = vld [vmem:[#allocation11 + $0x640] sm:$0xff]
    %v1040 = vld [vmem:[#allocation11 + $0x648] sm:$0xff]
    %v1041 = vld [vmem:[#allocation11 + $0x650] sm:$0xff]
    %v1042 = vld [vmem:[#allocation11 + $0x658] sm:$0xff]
    %v1043 = vld [vmem:[#allocation11 + $0x660] sm:$0xff]
    %v1044 = vld [vmem:[#allocation11 + $0x668] sm:$0xff]
    %v1045 = vld [vmem:[#allocation11 + $0x670] sm:$0xff]
    %v1046 = vld [vmem:[#allocation11 + $0x678] sm:$0xff]
    %v1047 = vld [vmem:[#allocation11 + $0x680] sm:$0xff]
    %v1048 = vld [vmem:[#allocation11 + $0x688] sm:$0xff]
    %v1049 = vld [vmem:[#allocation11 + $0x690] sm:$0xff]
    %v1050 = vld [vmem:[#allocation11 + $0x698] sm:$0xff]
    %v1051 = vld [vmem:[#allocation11 + $0x6a0] sm:$0xff]
    %v1052 = vld [vmem:[#allocation11 + $0x6a8] sm:$0xff]
    %v1053 = vld [vmem:[#allocation11 + $0x6b0] sm:$0xff]
    %v1054 = vld [vmem:[#allocation11 + $0x6b8] sm:$0xff]
    %v1055 = vld [vmem:[#allocation11 + $0x6c0] sm:$0xff]
    %v1056 = vld [vmem:[#allocation11 + $0x6c8] sm:$0xff]
    %v1057 = vld [vmem:[#allocation11 + $0x6d0] sm:$0xff]
    %v1058 = vld [vmem:[#allocation11 + $0x6d8] sm:$0xff]
    %v1059 = vld [vmem:[#allocation11 + $0x6e0] sm:$0xff]
    %v1060 = vld [vmem:[#allocation11 + $0x6e8] sm:$0xff]
    %v1061 = vld [vmem:[#allocation11 + $0x6f0] sm:$0xff]
    %v1062 = vld [vmem:[#allocation11 + $0x6f8] sm:$0xff]
    %v1063 = vld [vmem:[#allocation11 + $0x700] sm:$0xff]
    %v1064 = vld [vmem:[#allocation11 + $0x708] sm:$0xff]
    %v1065 = vld [vmem:[#allocation11 + $0x710] sm:$0xff]
    %v1066 = vld [vmem:[#allocation11 + $0x718] sm:$0xff]
    %v1067 = vld [vmem:[#allocation11 + $0x720] sm:$0xff]
    %v1068 = vld [vmem:[#allocation11 + $0x728] sm:$0xff]
    %v1069 = vld [vmem:[#allocation11 + $0x730] sm:$0xff]
    %v1070 = vld [vmem:[#allocation11 + $0x738] sm:$0xff]
    %v1071 = vld [vmem:[#allocation11 + $0x740] sm:$0xff]
    %v1072 = vld [vmem:[#allocation11 + $0x748] sm:$0xff]
    %v1073 = vld [vmem:[#allocation11 + $0x750] sm:$0xff]
    %v1074 = vld [vmem:[#allocation11 + $0x758] sm:$0xff]
    %v1075 = vld [vmem:[#allocation11 + $0x760] sm:$0xff]
    %v1076 = vld [vmem:[#allocation11 + $0x768] sm:$0xff]
    %v1077 = vld [vmem:[#allocation11 + $0x770] sm:$0xff]
    %v1078 = vld [vmem:[#allocation11 + $0x778] sm:$0xff]
    %v1079 = vld [vmem:[#allocation11 + $0x780] sm:$0xff]
    %v1080 = vld [vmem:[#allocation11 + $0x788] sm:$0xff]
    %v1081 = vld [vmem:[#allocation11 + $0x790] sm:$0xff]
    %v1082 = vld [vmem:[#allocation11 + $0x798] sm:$0xff]
    %v1083 = vld [vmem:[#allocation11 + $0x7a0] sm:$0xff]
    %v1084 = vld [vmem:[#allocation11 + $0x7a8] sm:$0xff]
    %v1085 = vld [vmem:[#allocation11 + $0x7b0] sm:$0xff]
    %v1086 = vld [vmem:[#allocation11 + $0x7b8] sm:$0xff]
    %v1087 = vld [vmem:[#allocation11 + $0x7c0] sm:$0xff]
    %v1088 = vld [vmem:[#allocation11 + $0x7c8] sm:$0xff]
    %v1089 = vld [vmem:[#allocation11 + $0x7d0] sm:$0xff]
    %v1090 = vld [vmem:[#allocation11 + $0x7d8] sm:$0xff]
    %v1091 = vld [vmem:[#allocation11 + $0x7e0] sm:$0xff]
    %v1092 = vld [vmem:[#allocation11 + $0x7e8] sm:$0xff]
    %v1093 = vld [vmem:[#allocation11 + $0x7f0] sm:$0xff]
    %v1094 = vld [vmem:[#allocation11 + $0x7f8] sm:$0xff]
    %v1095 = vld [vmem:[#allocation11 + $0x800] sm:$0xff]
    %v1096 = vld [vmem:[#allocation11 + $0x808] sm:$0xff]
    %v1097 = vld [vmem:[#allocation11 + $0x810] sm:$0xff]
    %v1098 = vld [vmem:[#allocation11 + $0x818] sm:$0xff]
    %v1099 = vld [vmem:[#allocation11 + $0x820] sm:$0xff]
    %v1100 = vld [vmem:[#allocation11 + $0x828] sm:$0xff]
    %v1101 = vld [vmem:[#allocation11 + $0x830] sm:$0xff]
    %v1102 = vld [vmem:[#allocation11 + $0x838] sm:$0xff]
    %v1103 = vld [vmem:[#allocation11 + $0x840] sm:$0xff]
    %v1104 = vld [vmem:[#allocation11 + $0x848] sm:$0xff]
    %v1105 = vld [vmem:[#allocation11 + $0x850] sm:$0xff]
    %v1106 = vld [vmem:[#allocation11 + $0x858] sm:$0xff]
    %v1107 = vld [vmem:[#allocation11 + $0x860] sm:$0xff]
    %v1108 = vld [vmem:[#allocation11 + $0x868] sm:$0xff]
    %v1109 = vld [vmem:[#allocation11 + $0x870] sm:$0xff]
    %v1110 = vld [vmem:[#allocation11 + $0x878] sm:$0xff]
    %v1111 = vld [vmem:[#allocation11 + $0x880] sm:$0xff]
    %v1112 = vld [vmem:[#allocation11 + $0x888] sm:$0xff]
    %v1113 = vld [vmem:[#allocation11 + $0x890] sm:$0xff]
    %v1114 = vld [vmem:[#allocation11 + $0x898] sm:$0xff]
    %v1115 = vld [vmem:[#allocation11 + $0x8a0] sm:$0xff]
    %v1116 = vld [vmem:[#allocation11 + $0x8a8] sm:$0xff]
    %v1117 = vld [vmem:[#allocation11 + $0x8b0] sm:$0xff]
    %v1118 = vld [vmem:[#allocation11 + $0x8b8] sm:$0xff]
    %v1119 = vld [vmem:[#allocation11 + $0x8c0] sm:$0xff]
    %v1120 = vld [vmem:[#allocation11 + $0x8c8] sm:$0xff]
    %v1121 = vld [vmem:[#allocation11 + $0x8d0] sm:$0xff]
    %v1122 = vld [vmem:[#allocation11 + $0x8d8] sm:$0xff]
    %v1123 = vld [vmem:[#allocation11 + $0x8e0] sm:$0xff]
    %v1124 = vld [vmem:[#allocation11 + $0x8e8] sm:$0xff]
    %v1125 = vld [vmem:[#allocation11 + $0x8f0] sm:$0xff]
    %v1126 = vld [vmem:[#allocation11 + $0x8f8] sm:$0xff]
    %v1127 = vld [vmem:[#allocation11 + $0x900] sm:$0xff]
    %v1128 = vld [vmem:[#allocation11 + $0x908] sm:$0xff]
    %v1129 = vld [vmem:[#allocation11 + $0x910] sm:$0xff]
    %v1130 = vld [vmem:[#allocation11 + $0x918] sm:$0xff]
    %v1131 = vld [vmem:[#allocation11 + $0x920] sm:$0xff]
    %v1132 = vld [vmem:[#allocation11 + $0x928] sm:$0xff]
    %v1133 = vld [vmem:[#allocation11 + $0x930] sm:$0xff]
    %v1134 = vld [vmem:[#allocation11 + $0x938] sm:$0xff]
    %v1135 = vld [vmem:[#allocation11 + $0x940] sm:$0xff]
    %v1136 = vld [vmem:[#allocation11 + $0x948] sm:$0xff]
    %v1137 = vld [vmem:[#allocation11 + $0x950] sm:$0xff]
    %v1138 = vld [vmem:[#allocation11 + $0x958] sm:$0xff]
    %v1139 = vld [vmem:[#allocation11 + $0x960] sm:$0xff]
    %v1140 = vld [vmem:[#allocation11 + $0x968] sm:$0xff]
    %v1141 = vld [vmem:[#allocation11 + $0x970] sm:$0xff]
    %v1142 = vld [vmem:[#allocation11 + $0x978] sm:$0xff]
    %v1143 = vld [vmem:[#allocation11 + $0x980] sm:$0xff]
    %v1144 = vld [vmem:[#allocation11 + $0x988] sm:$0xff]
    %v1145 = vld [vmem:[#allocation11 + $0x990] sm:$0xff]
    %v1146 = vld [vmem:[#allocation11 + $0x998] sm:$0xff]
    %v1147 = vld [vmem:[#allocation11 + $0x9a0] sm:$0xff]
    %v1148 = vld [vmem:[#allocation11 + $0x9a8] sm:$0xff]
    %v1149 = vld [vmem:[#allocation11 + $0x9b0] sm:$0xff]
    %v1150 = vld [vmem:[#allocation11 + $0x9b8] sm:$0xff]
    %v1151 = vld [vmem:[#allocation11 + $0x9c0] sm:$0xff]
    %v1152 = vld [vmem:[#allocation11 + $0x9c8] sm:$0xff]
    %v1153 = vld [vmem:[#allocation11 + $0x9d0] sm:$0xff]
    %v1154 = vld [vmem:[#allocation11 + $0x9d8] sm:$0xff]
    %v1155 = vld [vmem:[#allocation11 + $0x9e0] sm:$0xff]
    %v1156 = vld [vmem:[#allocation11 + $0x9e8] sm:$0xff]
    %v1157 = vld [vmem:[#allocation11 + $0x9f0] sm:$0xff]
    %v1158 = vld [vmem:[#allocation11 + $0x9f8] sm:$0xff]
    %v1159 = vld [vmem:[#allocation11 + $0xa00] sm:$0xff]
    %v1160 = vld [vmem:[#allocation11 + $0xa08] sm:$0xff]
    %v1161 = vld [vmem:[#allocation11 + $0xa10] sm:$0xff]
    %v1162 = vld [vmem:[#allocation11 + $0xa18] sm:$0xff]
    %v1163 = vld [vmem:[#allocation11 + $0xa20] sm:$0xff]
    %v1164 = vld [vmem:[#allocation11 + $0xa28] sm:$0xff]
    %v1165 = vld [vmem:[#allocation11 + $0xa30] sm:$0xff]
    %v1166 = vld [vmem:[#allocation11 + $0xa38] sm:$0xff]
    %v1167 = vld [vmem:[#allocation11 + $0xa40] sm:$0xff]
    %v1168 = vld [vmem:[#allocation11 + $0xa48] sm:$0xff]
    %v1169 = vld [vmem:[#allocation11 + $0xa50] sm:$0xff]
    %v1170 = vld [vmem:[#allocation11 + $0xa58] sm:$0xff]
    %v1171 = vld [vmem:[#allocation11 + $0xa60] sm:$0xff]
    %v1172 = vld [vmem:[#allocation11 + $0xa68] sm:$0xff]
    %v1173 = vld [vmem:[#allocation11 + $0xa70] sm:$0xff]
    %v1174 = vld [vmem:[#allocation11 + $0xa78] sm:$0xff]
    %v1175 = vld [vmem:[#allocation11 + $0xa80] sm:$0xff]
    %v1176 = vld [vmem:[#allocation11 + $0xa88] sm:$0xff]
    %v1177 = vld [vmem:[#allocation11 + $0xa90] sm:$0xff]
    %v1178 = vld [vmem:[#allocation11 + $0xa98] sm:$0xff]
    %v1179 = vld [vmem:[#allocation11 + $0xaa0] sm:$0xff]
    %v1180 = vld [vmem:[#allocation11 + $0xaa8] sm:$0xff]
    %v1181 = vld [vmem:[#allocation11 + $0xab0] sm:$0xff]
    %v1182 = vld [vmem:[#allocation11 + $0xab8] sm:$0xff]
    %v1183 = vld [vmem:[#allocation11 + $0xac0] sm:$0xff]
    %v1184 = vld [vmem:[#allocation11 + $0xac8] sm:$0xff]
    %v1185 = vld [vmem:[#allocation11 + $0xad0] sm:$0xff]
    %v1186 = vld [vmem:[#allocation11 + $0xad8] sm:$0xff]
    %v1187 = vld [vmem:[#allocation11 + $0xae0] sm:$0xff]
    %v1188 = vld [vmem:[#allocation11 + $0xae8] sm:$0xff]
    %v1189 = vld [vmem:[#allocation11 + $0xaf0] sm:$0xff]
    %v1190 = vld [vmem:[#allocation11 + $0xaf8] sm:$0xff]
    %v1191 = vld [vmem:[#allocation11 + $0xb00] sm:$0xff]
    %v1192 = vld [vmem:[#allocation11 + $0xb08] sm:$0xff]
    %v1193 = vld [vmem:[#allocation11 + $0xb10] sm:$0xff]
    %v1194 = vld [vmem:[#allocation11 + $0xb18] sm:$0xff]
    %v1195 = vld [vmem:[#allocation11 + $0xb20] sm:$0xff]
    %v1196 = vld [vmem:[#allocation11 + $0xb28] sm:$0xff]
    %v1197 = vld [vmem:[#allocation11 + $0xb30] sm:$0xff]
    %v1198 = vld [vmem:[#allocation11 + $0xb38] sm:$0xff]
    %v1199 = vld [vmem:[#allocation11 + $0xb40] sm:$0xff]
    %v1200 = vld [vmem:[#allocation11 + $0xb48] sm:$0xff]
    %v1201 = vld [vmem:[#allocation11 + $0xb50] sm:$0xff]
    %v1202 = vld [vmem:[#allocation11 + $0xb58] sm:$0xff]
    %v1203 = vld [vmem:[#allocation11 + $0xb60] sm:$0xff]
    %v1204 = vld [vmem:[#allocation11 + $0xb68] sm:$0xff]
    %v1205 = vld [vmem:[#allocation11 + $0xb70] sm:$0xff]
    %v1206 = vld [vmem:[#allocation11 + $0xb78] sm:$0xff]
    %v1207 = vld [vmem:[#allocation11 + $0xb80] sm:$0xff]
    %v1208 = vld [vmem:[#allocation11 + $0xb88] sm:$0xff]
    %v1209 = vld [vmem:[#allocation11 + $0xb90] sm:$0xff]
    %v1210 = vld [vmem:[#allocation11 + $0xb98] sm:$0xff]
    %v1211 = vld [vmem:[#allocation11 + $0xba0] sm:$0xff]
    %v1212 = vld [vmem:[#allocation11 + $0xba8] sm:$0xff]
    %v1213 = vld [vmem:[#allocation11 + $0xbb0] sm:$0xff]
    %v1214 = vld [vmem:[#allocation11 + $0xbb8] sm:$0xff]
    %v1215 = vld [vmem:[#allocation11 + $0xbc0] sm:$0xff]
    %v1216 = vld [vmem:[#allocation11 + $0xbc8] sm:$0xff]
    %v1217 = vld [vmem:[#allocation11 + $0xbd0] sm:$0xff]
    %v1218 = vld [vmem:[#allocation11 + $0xbd8] sm:$0xff]
    %v1219 = vld [vmem:[#allocation11 + $0xbe0] sm:$0xff]
    %v1220 = vld [vmem:[#allocation11 + $0xbe8] sm:$0xff]
    %v1221 = vld [vmem:[#allocation11 + $0xbf0] sm:$0xff]
    %v1222 = vld [vmem:[#allocation11 + $0xbf8] sm:$0xff]
    %v1223 = vld [vmem:[#allocation11 + $0xc00] sm:$0xff]
    %v1224 = vld [vmem:[#allocation11 + $0xc08] sm:$0xff]
    %v1225 = vld [vmem:[#allocation11 + $0xc10] sm:$0xff]
    %v1226 = vld [vmem:[#allocation11 + $0xc18] sm:$0xff]
    %v1227 = vld [vmem:[#allocation11 + $0xc20] sm:$0xff]
    %v1228 = vld [vmem:[#allocation11 + $0xc28] sm:$0xff]
    %v1229 = vld [vmem:[#allocation11 + $0xc30] sm:$0xff]
    %v1230 = vld [vmem:[#allocation11 + $0xc38] sm:$0xff]
    %v1231 = vld [vmem:[#allocation11 + $0xc40] sm:$0xff]
    %v1232 = vld [vmem:[#allocation11 + $0xc48] sm:$0xff]
    %v1233 = vld [vmem:[#allocation11 + $0xc50] sm:$0xff]
    %v1234 = vld [vmem:[#allocation11 + $0xc58] sm:$0xff]
    %v1235 = vld [vmem:[#allocation11 + $0xc60] sm:$0xff]
    %v1236 = vld [vmem:[#allocation11 + $0xc68] sm:$0xff]
    %v1237 = vld [vmem:[#allocation11 + $0xc70] sm:$0xff]
    %v1238 = vld [vmem:[#allocation11 + $0xc78] sm:$0xff]
    %v1239 = vld [vmem:[#allocation11 + $0xc80] sm:$0xff]
    %v1240 = vld [vmem:[#allocation11 + $0xc88] sm:$0xff]
    %v1241 = vld [vmem:[#allocation11 + $0xc90] sm:$0xff]
    %v1242 = vld [vmem:[#allocation11 + $0xc98] sm:$0xff]
    %v1243 = vld [vmem:[#allocation11 + $0xca0] sm:$0xff]
    %v1244 = vld [vmem:[#allocation11 + $0xca8] sm:$0xff]
    %v1245 = vld [vmem:[#allocation11 + $0xcb0] sm:$0xff]
    %v1246 = vld [vmem:[#allocation11 + $0xcb8] sm:$0xff]
    %v1247 = vld [vmem:[#allocation11 + $0xcc0] sm:$0xff]
    %v1248 = vld [vmem:[#allocation11 + $0xcc8] sm:$0xff]
    %v1249 = vld [vmem:[#allocation11 + $0xcd0] sm:$0xff]
    %v1250 = vld [vmem:[#allocation11 + $0xcd8] sm:$0xff]
    %v1251 = vld [vmem:[#allocation11 + $0xce0] sm:$0xff]
    %v1252 = vld [vmem:[#allocation11 + $0xce8] sm:$0xff]
    %v1253 = vld [vmem:[#allocation11 + $0xcf0] sm:$0xff]
    %v1254 = vld [vmem:[#allocation11 + $0xcf8] sm:$0xff]
    %v1255 = vld [vmem:[#allocation11 + $0xd00] sm:$0xff]
    %v1256 = vld [vmem:[#allocation11 + $0xd08] sm:$0xff]
    %v1257 = vld [vmem:[#allocation11 + $0xd10] sm:$0xff]
    %v1258 = vld [vmem:[#allocation11 + $0xd18] sm:$0xff]
    %v1259 = vld [vmem:[#allocation11 + $0xd20] sm:$0xff]
    %v1260 = vld [vmem:[#allocation11 + $0xd28] sm:$0xff]
    %v1261 = vld [vmem:[#allocation11 + $0xd30] sm:$0xff]
    %v1262 = vld [vmem:[#allocation11 + $0xd38] sm:$0xff]
    %v1263 = vld [vmem:[#allocation11 + $0xd40] sm:$0xff]
    %v1264 = vld [vmem:[#allocation11 + $0xd48] sm:$0xff]
    %v1265 = vld [vmem:[#allocation11 + $0xd50] sm:$0xff]
    %v1266 = vld [vmem:[#allocation11 + $0xd58] sm:$0xff]
    %v1267 = vld [vmem:[#allocation11 + $0xd60] sm:$0xff]
    %v1268 = vld [vmem:[#allocation11 + $0xd68] sm:$0xff]
    %v1269 = vld [vmem:[#allocation11 + $0xd70] sm:$0xff]
    %v1270 = vld [vmem:[#allocation11 + $0xd78] sm:$0xff]
    %v1271 = vld [vmem:[#allocation11 + $0xd80] sm:$0xff]
    %v1272 = vld [vmem:[#allocation11 + $0xd88] sm:$0xff]
    %v1273 = vld [vmem:[#allocation11 + $0xd90] sm:$0xff]
    %v1274 = vld [vmem:[#allocation11 + $0xd98] sm:$0xff]
    %v1275 = vld [vmem:[#allocation11 + $0xda0] sm:$0xff]
    %v1276 = vld [vmem:[#allocation11 + $0xda8] sm:$0xff]
    %v1277 = vld [vmem:[#allocation11 + $0xdb0] sm:$0xff]
    %v1278 = vld [vmem:[#allocation11 + $0xdb8] sm:$0xff]
    %v1279 = vld [vmem:[#allocation11 + $0xdc0] sm:$0xff]
    %v1280 = vld [vmem:[#allocation11 + $0xdc8] sm:$0xff]
    %v1281 = vld [vmem:[#allocation11 + $0xdd0] sm:$0xff]
    %v1282 = vld [vmem:[#allocation11 + $0xdd8] sm:$0xff]
    %v1283 = vld [vmem:[#allocation11 + $0xde0] sm:$0xff]
    %v1284 = vld [vmem:[#allocation11 + $0xde8] sm:$0xff]
    %v1285 = vld [vmem:[#allocation11 + $0xdf0] sm:$0xff]
    %v1286 = vld [vmem:[#allocation11 + $0xdf8] sm:$0xff]
    %v1287 = vld [vmem:[#allocation11 + $0xe00] sm:$0xff]
    %v1288 = vld [vmem:[#allocation11 + $0xe08] sm:$0xff]
    %v1289 = vld [vmem:[#allocation11 + $0xe10] sm:$0xff]
    %v1290 = vld [vmem:[#allocation11 + $0xe18] sm:$0xff]
    %v1291 = vld [vmem:[#allocation11 + $0xe20] sm:$0xff]
    %v1292 = vld [vmem:[#allocation11 + $0xe28] sm:$0xff]
    %v1293 = vld [vmem:[#allocation11 + $0xe30] sm:$0xff]
    %v1294 = vld [vmem:[#allocation11 + $0xe38] sm:$0xff]
    %v1295 = vld [vmem:[#allocation11 + $0xe40] sm:$0xff]
    %v1296 = vld [vmem:[#allocation11 + $0xe48] sm:$0xff]
    %v1297 = vld [vmem:[#allocation11 + $0xe50] sm:$0xff]
    %v1298 = vld [vmem:[#allocation11 + $0xe58] sm:$0xff]
    %v1299 = vld [vmem:[#allocation11 + $0xe60] sm:$0xff]
    %v1300 = vld [vmem:[#allocation11 + $0xe68] sm:$0xff]
    %v1301 = vld [vmem:[#allocation11 + $0xe70] sm:$0xff]
    %v1302 = vld [vmem:[#allocation11 + $0xe78] sm:$0xff]
    %v1303 = vld [vmem:[#allocation11 + $0xe80] sm:$0xff]
    %v1304 = vld [vmem:[#allocation11 + $0xe88] sm:$0xff]
    %v1305 = vld [vmem:[#allocation11 + $0xe90] sm:$0xff]
    %v1306 = vld [vmem:[#allocation11 + $0xe98] sm:$0xff]
    %v1307 = vld [vmem:[#allocation11 + $0xea0] sm:$0xff]
    %v1308 = vld [vmem:[#allocation11 + $0xea8] sm:$0xff]
    %v1309 = vld [vmem:[#allocation11 + $0xeb0] sm:$0xff]
    %v1310 = vld [vmem:[#allocation11 + $0xeb8] sm:$0xff]
    %v1311 = vld [vmem:[#allocation11 + $0xec0] sm:$0xff]
    %v1312 = vld [vmem:[#allocation11 + $0xec8] sm:$0xff]
    %v1313 = vld [vmem:[#allocation11 + $0xed0] sm:$0xff]
    %v1314 = vld [vmem:[#allocation11 + $0xed8] sm:$0xff]
    %v1315 = vld [vmem:[#allocation11 + $0xee0] sm:$0xff]
    %v1316 = vld [vmem:[#allocation11 + $0xee8] sm:$0xff]
    %v1317 = vld [vmem:[#allocation11 + $0xef0] sm:$0xff]
    %v1318 = vld [vmem:[#allocation11 + $0xef8] sm:$0xff]
    %v1319 = vld [vmem:[#allocation11 + $0xf00] sm:$0xff]
    %v1320 = vld [vmem:[#allocation11 + $0xf08] sm:$0xff]
    %v1321 = vld [vmem:[#allocation11 + $0xf10] sm:$0xff]
    %v1322 = vld [vmem:[#allocation11 + $0xf18] sm:$0xff]
    %v1323 = vld [vmem:[#allocation11 + $0xf20] sm:$0xff]
    %v1324 = vld [vmem:[#allocation11 + $0xf28] sm:$0xff]
    %v1325 = vld [vmem:[#allocation11 + $0xf30] sm:$0xff]
    %v1326 = vld [vmem:[#allocation11 + $0xf38] sm:$0xff]
    %v1327 = vld [vmem:[#allocation11 + $0xf40] sm:$0xff]
    %v1328 = vld [vmem:[#allocation11 + $0xf48] sm:$0xff]
    %v1329 = vld [vmem:[#allocation11 + $0xf50] sm:$0xff]
    %v1330 = vld [vmem:[#allocation11 + $0xf58] sm:$0xff]
    %v1331 = vld [vmem:[#allocation11 + $0xf60] sm:$0xff]
    %v1332 = vld [vmem:[#allocation11 + $0xf68] sm:$0xff]
    %v1333 = vld [vmem:[#allocation11 + $0xf70] sm:$0xff]
    %v1334 = vld [vmem:[#allocation11 + $0xf78] sm:$0xff]
    %v1335 = vld [vmem:[#allocation11 + $0xf80] sm:$0xff]
    %v1336 = vld [vmem:[#allocation11 + $0xf88] sm:$0xff]
    %v1337 = vld [vmem:[#allocation11 + $0xf90] sm:$0xff]
    %v1338 = vld [vmem:[#allocation11 + $0xf98] sm:$0xff]
    %v1339 = vld [vmem:[#allocation11 + $0xfa0] sm:$0xff]
    %v1340 = vld [vmem:[#allocation11 + $0xfa8] sm:$0xff]
    %v1341 = vld [vmem:[#allocation11 + $0xfb0] sm:$0xff]
    %v1342 = vld [vmem:[#allocation11 + $0xfb8] sm:$0xff]
    %v1343 = vld [vmem:[#allocation11 + $0xfc0] sm:$0xff]
    %v1344 = vld [vmem:[#allocation11 + $0xfc8] sm:$0xff]
    %v1345 = vld [vmem:[#allocation11 + $0xfd0] sm:$0xff]
    %v1346 = vld [vmem:[#allocation11 + $0xfd8] sm:$0xff]
    %v1347 = vld [vmem:[#allocation11 + $0xfe0] sm:$0xff]
    %v1348 = vld [vmem:[#allocation11 + $0xfe8] sm:$0xff]
    %v1349 = vld [vmem:[#allocation11 + $0xff0] sm:$0xff]
    %v1350 = vld [vmem:[#allocation11 + $0xff8] sm:$0xff]
    %v1351 = vld [vmem:[#allocation13] sm:$0xff]
    %v1353 = vlaneseq
    %v1354 = vshrl.u32 %v1353, 7
    %v1355 = vsub.s32 0, %v1354
    %v1356 = vrot.slane %v1351, %v1355
    %v1357 = vlaneseq
    %v1358 = vshrl.u32 %v1357, 7
    %v1359 = vsub.s32 1, %v1358
    %v1360 = vrot.slane %v1351, %v1359
    %v1361 = vlaneseq
    %v1362 = vshrl.u32 %v1361, 7
    %v1363 = vsub.s32 2, %v1362
    %v1364 = vrot.slane %v1351, %v1363
    %v1365 = vlaneseq
    %v1366 = vshrl.u32 %v1365, 7
    %v1367 = vsub.s32 3, %v1366
    %v1368 = vrot.slane %v1351, %v1367
    %v1369 = vlaneseq
    %v1370 = vshrl.u32 %v1369, 7
    %v1371 = vsub.s32 4, %v1370
    %v1372 = vrot.slane %v1351, %v1371
    %v1373 = vlaneseq
    %v1374 = vshrl.u32 %v1373, 7
    %v1375 = vsub.s32 5, %v1374
    %v1376 = vrot.slane %v1351, %v1375
    %v1377 = vlaneseq
    %v1378 = vshrl.u32 %v1377, 7
    %v1379 = vsub.s32 6, %v1378
    %v1380 = vrot.slane %v1351, %v1379
    %v1381 = vlaneseq
    %v1382 = vshrl.u32 %v1381, 7
    %v1383 = vsub.s32 7, %v1382
    %v1384 = vrot.slane %v1351, %v1383
    %v1905 = vunpack.c.l.b16 %v839
    %v1906 = vunpack.c.h.b16 %v839
    %v1907 = vunpack.c.l.b16 %v840
    %v1908 = vunpack.c.h.b16 %v840
    %v1909 = vunpack.c.l.b16 %v841
    %v1910 = vunpack.c.h.b16 %v841
    %v1911 = vunpack.c.l.b16 %v842
    %v1912 = vunpack.c.h.b16 %v842
    %v1913 = vunpack.c.l.b16 %v843
    %v1914 = vunpack.c.h.b16 %v843
    %v1915 = vunpack.c.l.b16 %v844
    %v1916 = vunpack.c.h.b16 %v844
    %v1917 = vunpack.c.l.b16 %v845
    %v1918 = vunpack.c.h.b16 %v845
    %v1919 = vunpack.c.l.b16 %v846
    %v1920 = vunpack.c.h.b16 %v846
    %v1921 = vunpack.c.l.b16 %v847
    %v1922 = vunpack.c.h.b16 %v847
    %v1923 = vunpack.c.l.b16 %v848
    %v1924 = vunpack.c.h.b16 %v848
    %v1925 = vunpack.c.l.b16 %v849
    %v1926 = vunpack.c.h.b16 %v849
    %v1927 = vunpack.c.l.b16 %v850
    %v1928 = vunpack.c.h.b16 %v850
    %v1929 = vunpack.c.l.b16 %v851
    %v1930 = vunpack.c.h.b16 %v851
    %v1931 = vunpack.c.l.b16 %v852
    %v1932 = vunpack.c.h.b16 %v852
    %v1933 = vunpack.c.l.b16 %v853
    %v1934 = vunpack.c.h.b16 %v853
    %v1935 = vunpack.c.l.b16 %v854
    %v1936 = vunpack.c.h.b16 %v854
    %v1937 = vunpack.c.l.b16 %v855
    %v1938 = vunpack.c.h.b16 %v855
    %v1939 = vunpack.c.l.b16 %v856
    %v1940 = vunpack.c.h.b16 %v856
    %v1941 = vunpack.c.l.b16 %v857
    %v1942 = vunpack.c.h.b16 %v857
    %v1943 = vunpack.c.l.b16 %v858
    %v1944 = vunpack.c.h.b16 %v858
    %v1945 = vunpack.c.l.b16 %v859
    %v1946 = vunpack.c.h.b16 %v859
    %v1947 = vunpack.c.l.b16 %v860
    %v1948 = vunpack.c.h.b16 %v860
    %v1949 = vunpack.c.l.b16 %v861
    %v1950 = vunpack.c.h.b16 %v861
    %v1951 = vunpack.c.l.b16 %v862
    %v1952 = vunpack.c.h.b16 %v862
    %v1953 = vunpack.c.l.b16 %v863
    %v1954 = vunpack.c.h.b16 %v863
    %v1955 = vunpack.c.l.b16 %v864
    %v1956 = vunpack.c.h.b16 %v864
    %v1957 = vunpack.c.l.b16 %v865
    %v1958 = vunpack.c.h.b16 %v865
    %v1959 = vunpack.c.l.b16 %v866
    %v1960 = vunpack.c.h.b16 %v866
    %v1961 = vunpack.c.l.b16 %v867
    %v1962 = vunpack.c.h.b16 %v867
    %v1963 = vunpack.c.l.b16 %v868
    %v1964 = vunpack.c.h.b16 %v868
    %v1965 = vunpack.c.l.b16 %v869
    %v1966 = vunpack.c.h.b16 %v869
    %v1967 = vunpack.c.l.b16 %v870
    %v1968 = vunpack.c.h.b16 %v870
    %v1969 = vunpack.c.l.b16 %v871
    %v1970 = vunpack.c.h.b16 %v871
    %v1971 = vunpack.c.l.b16 %v872
    %v1972 = vunpack.c.h.b16 %v872
    %v1973 = vunpack.c.l.b16 %v873
    %v1974 = vunpack.c.h.b16 %v873
    %v1975 = vunpack.c.l.b16 %v874
    %v1976 = vunpack.c.h.b16 %v874
    %v1977 = vunpack.c.l.b16 %v875
    %v1978 = vunpack.c.h.b16 %v875
    %v1979 = vunpack.c.l.b16 %v876
    %v1980 = vunpack.c.h.b16 %v876
    %v1981 = vunpack.c.l.b16 %v877
    %v1982 = vunpack.c.h.b16 %v877
    %v1983 = vunpack.c.l.b16 %v878
    %v1984 = vunpack.c.h.b16 %v878
    %v1985 = vunpack.c.l.b16 %v879
    %v1986 = vunpack.c.h.b16 %v879
    %v1987 = vunpack.c.l.b16 %v880
    %v1988 = vunpack.c.h.b16 %v880
    %v1989 = vunpack.c.l.b16 %v881
    %v1990 = vunpack.c.h.b16 %v881
    %v1991 = vunpack.c.l.b16 %v882
    %v1992 = vunpack.c.h.b16 %v882
    %v1993 = vunpack.c.l.b16 %v883
    %v1994 = vunpack.c.h.b16 %v883
    %v1995 = vunpack.c.l.b16 %v884
    %v1996 = vunpack.c.h.b16 %v884
    %v1997 = vunpack.c.l.b16 %v885
    %v1998 = vunpack.c.h.b16 %v885
    %v1999 = vunpack.c.l.b16 %v886
    %v2000 = vunpack.c.h.b16 %v886
    %v2001 = vunpack.c.l.b16 %v887
    %v2002 = vunpack.c.h.b16 %v887
    %v2003 = vunpack.c.l.b16 %v888
    %v2004 = vunpack.c.h.b16 %v888
    %v2005 = vunpack.c.l.b16 %v889
    %v2006 = vunpack.c.h.b16 %v889
    %v2007 = vunpack.c.l.b16 %v890
    %v2008 = vunpack.c.h.b16 %v890
    %v2009 = vunpack.c.l.b16 %v891
    %v2010 = vunpack.c.h.b16 %v891
    %v2011 = vunpack.c.l.b16 %v892
    %v2012 = vunpack.c.h.b16 %v892
    %v2013 = vunpack.c.l.b16 %v893
    %v2014 = vunpack.c.h.b16 %v893
    %v2015 = vunpack.c.l.b16 %v894
    %v2016 = vunpack.c.h.b16 %v894
    %v2017 = vunpack.c.l.b16 %v895
    %v2018 = vunpack.c.h.b16 %v895
    %v2019 = vunpack.c.l.b16 %v896
    %v2020 = vunpack.c.h.b16 %v896
    %v2021 = vunpack.c.l.b16 %v897
    %v2022 = vunpack.c.h.b16 %v897
    %v2023 = vunpack.c.l.b16 %v898
    %v2024 = vunpack.c.h.b16 %v898
    %v2025 = vunpack.c.l.b16 %v899
    %v2026 = vunpack.c.h.b16 %v899
    %v2027 = vunpack.c.l.b16 %v900
    %v2028 = vunpack.c.h.b16 %v900
    %v2029 = vunpack.c.l.b16 %v901
    %v2030 = vunpack.c.h.b16 %v901
    %v2031 = vunpack.c.l.b16 %v902
    %v2032 = vunpack.c.h.b16 %v902
    %v2033 = vunpack.c.l.b16 %v903
    %v2034 = vunpack.c.h.b16 %v903
    %v2035 = vunpack.c.l.b16 %v904
    %v2036 = vunpack.c.h.b16 %v904
    %v2037 = vunpack.c.l.b16 %v905
    %v2038 = vunpack.c.h.b16 %v905
    %v2039 = vunpack.c.l.b16 %v906
    %v2040 = vunpack.c.h.b16 %v906
    %v2041 = vunpack.c.l.b16 %v907
    %v2042 = vunpack.c.h.b16 %v907
    %v2043 = vunpack.c.l.b16 %v908
    %v2044 = vunpack.c.h.b16 %v908
    %v2045 = vunpack.c.l.b16 %v909
    %v2046 = vunpack.c.h.b16 %v909
    %v2047 = vunpack.c.l.b16 %v910
    %v2048 = vunpack.c.h.b16 %v910
    %v2049 = vunpack.c.l.b16 %v911
    %v2050 = vunpack.c.h.b16 %v911
    %v2051 = vunpack.c.l.b16 %v912
    %v2052 = vunpack.c.h.b16 %v912
    %v2053 = vunpack.c.l.b16 %v913
    %v2054 = vunpack.c.h.b16 %v913
    %v2055 = vunpack.c.l.b16 %v914
    %v2056 = vunpack.c.h.b16 %v914
    %v2057 = vunpack.c.l.b16 %v915
    %v2058 = vunpack.c.h.b16 %v915
    %v2059 = vunpack.c.l.b16 %v916
    %v2060 = vunpack.c.h.b16 %v916
    %v2061 = vunpack.c.l.b16 %v917
    %v2062 = vunpack.c.h.b16 %v917
    %v2063 = vunpack.c.l.b16 %v918
    %v2064 = vunpack.c.h.b16 %v918
    %v2065 = vunpack.c.l.b16 %v919
    %v2066 = vunpack.c.h.b16 %v919
    %v2067 = vunpack.c.l.b16 %v920
    %v2068 = vunpack.c.h.b16 %v920
    %v2069 = vunpack.c.l.b16 %v921
    %v2070 = vunpack.c.h.b16 %v921
    %v2071 = vunpack.c.l.b16 %v922
    %v2072 = vunpack.c.h.b16 %v922
    %v2073 = vunpack.c.l.b16 %v923
    %v2074 = vunpack.c.h.b16 %v923
    %v2075 = vunpack.c.l.b16 %v924
    %v2076 = vunpack.c.h.b16 %v924
    %v2077 = vunpack.c.l.b16 %v925
    %v2078 = vunpack.c.h.b16 %v925
    %v2079 = vunpack.c.l.b16 %v926
    %v2080 = vunpack.c.h.b16 %v926
    %v2081 = vunpack.c.l.b16 %v927
    %v2082 = vunpack.c.h.b16 %v927
    %v2083 = vunpack.c.l.b16 %v928
    %v2084 = vunpack.c.h.b16 %v928
    %v2085 = vunpack.c.l.b16 %v929
    %v2086 = vunpack.c.h.b16 %v929
    %v2087 = vunpack.c.l.b16 %v930
    %v2088 = vunpack.c.h.b16 %v930
    %v2089 = vunpack.c.l.b16 %v931
    %v2090 = vunpack.c.h.b16 %v931
    %v2091 = vunpack.c.l.b16 %v932
    %v2092 = vunpack.c.h.b16 %v932
    %v2093 = vunpack.c.l.b16 %v933
    %v2094 = vunpack.c.h.b16 %v933
    %v2095 = vunpack.c.l.b16 %v934
    %v2096 = vunpack.c.h.b16 %v934
    %v2097 = vunpack.c.l.b16 %v935
    %v2098 = vunpack.c.h.b16 %v935
    %v2099 = vunpack.c.l.b16 %v936
    %v2100 = vunpack.c.h.b16 %v936
    %v2101 = vunpack.c.l.b16 %v937
    %v2102 = vunpack.c.h.b16 %v937
    %v2103 = vunpack.c.l.b16 %v938
    %v2104 = vunpack.c.h.b16 %v938
    %v2105 = vunpack.c.l.b16 %v939
    %v2106 = vunpack.c.h.b16 %v939
    %v2107 = vunpack.c.l.b16 %v940
    %v2108 = vunpack.c.h.b16 %v940
    %v2109 = vunpack.c.l.b16 %v941
    %v2110 = vunpack.c.h.b16 %v941
    %v2111 = vunpack.c.l.b16 %v942
    %v2112 = vunpack.c.h.b16 %v942
    %v2113 = vunpack.c.l.b16 %v943
    %v2114 = vunpack.c.h.b16 %v943
    %v2115 = vunpack.c.l.b16 %v944
    %v2116 = vunpack.c.h.b16 %v944
    %v2117 = vunpack.c.l.b16 %v945
    %v2118 = vunpack.c.h.b16 %v945
    %v2119 = vunpack.c.l.b16 %v946
    %v2120 = vunpack.c.h.b16 %v946
    %v2121 = vunpack.c.l.b16 %v947
    %v2122 = vunpack.c.h.b16 %v947
    %v2123 = vunpack.c.l.b16 %v948
    %v2124 = vunpack.c.h.b16 %v948
    %v2125 = vunpack.c.l.b16 %v949
    %v2126 = vunpack.c.h.b16 %v949
    %v2127 = vunpack.c.l.b16 %v950
    %v2128 = vunpack.c.h.b16 %v950
    %v2129 = vunpack.c.l.b16 %v951
    %v2130 = vunpack.c.h.b16 %v951
    %v2131 = vunpack.c.l.b16 %v952
    %v2132 = vunpack.c.h.b16 %v952
    %v2133 = vunpack.c.l.b16 %v953
    %v2134 = vunpack.c.h.b16 %v953
    %v2135 = vunpack.c.l.b16 %v954
    %v2136 = vunpack.c.h.b16 %v954
    %v2137 = vunpack.c.l.b16 %v955
    %v2138 = vunpack.c.h.b16 %v955
    %v2139 = vunpack.c.l.b16 %v956
    %v2140 = vunpack.c.h.b16 %v956
    %v2141 = vunpack.c.l.b16 %v957
    %v2142 = vunpack.c.h.b16 %v957
    %v2143 = vunpack.c.l.b16 %v958
    %v2144 = vunpack.c.h.b16 %v958
    %v2145 = vunpack.c.l.b16 %v959
    %v2146 = vunpack.c.h.b16 %v959
    %v2147 = vunpack.c.l.b16 %v960
    %v2148 = vunpack.c.h.b16 %v960
    %v2149 = vunpack.c.l.b16 %v961
    %v2150 = vunpack.c.h.b16 %v961
    %v2151 = vunpack.c.l.b16 %v962
    %v2152 = vunpack.c.h.b16 %v962
    %v2153 = vunpack.c.l.b16 %v963
    %v2154 = vunpack.c.h.b16 %v963
    %v2155 = vunpack.c.l.b16 %v964
    %v2156 = vunpack.c.h.b16 %v964
    %v2157 = vunpack.c.l.b16 %v965
    %v2158 = vunpack.c.h.b16 %v965
    %v2159 = vunpack.c.l.b16 %v966
    %v2160 = vunpack.c.h.b16 %v966
    %v2161 = vunpack.c.l.b16 %v967
    %v2162 = vunpack.c.h.b16 %v967
    %v2163 = vunpack.c.l.b16 %v968
    %v2164 = vunpack.c.h.b16 %v968
    %v2165 = vunpack.c.l.b16 %v969
    %v2166 = vunpack.c.h.b16 %v969
    %v2167 = vunpack.c.l.b16 %v970
    %v2168 = vunpack.c.h.b16 %v970
    %v2169 = vunpack.c.l.b16 %v971
    %v2170 = vunpack.c.h.b16 %v971
    %v2171 = vunpack.c.l.b16 %v972
    %v2172 = vunpack.c.h.b16 %v972
    %v2173 = vunpack.c.l.b16 %v973
    %v2174 = vunpack.c.h.b16 %v973
    %v2175 = vunpack.c.l.b16 %v974
    %v2176 = vunpack.c.h.b16 %v974
    %v2177 = vunpack.c.l.b16 %v975
    %v2178 = vunpack.c.h.b16 %v975
    %v2179 = vunpack.c.l.b16 %v976
    %v2180 = vunpack.c.h.b16 %v976
    %v2181 = vunpack.c.l.b16 %v977
    %v2182 = vunpack.c.h.b16 %v977
    %v2183 = vunpack.c.l.b16 %v978
    %v2184 = vunpack.c.h.b16 %v978
    %v2185 = vunpack.c.l.b16 %v979
    %v2186 = vunpack.c.h.b16 %v979
    %v2187 = vunpack.c.l.b16 %v980
    %v2188 = vunpack.c.h.b16 %v980
    %v2189 = vunpack.c.l.b16 %v981
    %v2190 = vunpack.c.h.b16 %v981
    %v2191 = vunpack.c.l.b16 %v982
    %v2192 = vunpack.c.h.b16 %v982
    %v2193 = vunpack.c.l.b16 %v983
    %v2194 = vunpack.c.h.b16 %v983
    %v2195 = vunpack.c.l.b16 %v984
    %v2196 = vunpack.c.h.b16 %v984
    %v2197 = vunpack.c.l.b16 %v985
    %v2198 = vunpack.c.h.b16 %v985
    %v2199 = vunpack.c.l.b16 %v986
    %v2200 = vunpack.c.h.b16 %v986
    %v2201 = vunpack.c.l.b16 %v987
    %v2202 = vunpack.c.h.b16 %v987
    %v2203 = vunpack.c.l.b16 %v988
    %v2204 = vunpack.c.h.b16 %v988
    %v2205 = vunpack.c.l.b16 %v989
    %v2206 = vunpack.c.h.b16 %v989
    %v2207 = vunpack.c.l.b16 %v990
    %v2208 = vunpack.c.h.b16 %v990
    %v2209 = vunpack.c.l.b16 %v991
    %v2210 = vunpack.c.h.b16 %v991
    %v2211 = vunpack.c.l.b16 %v992
    %v2212 = vunpack.c.h.b16 %v992
    %v2213 = vunpack.c.l.b16 %v993
    %v2214 = vunpack.c.h.b16 %v993
    %v2215 = vunpack.c.l.b16 %v994
    %v2216 = vunpack.c.h.b16 %v994
    %v2217 = vunpack.c.l.b16 %v995
    %v2218 = vunpack.c.h.b16 %v995
    %v2219 = vunpack.c.l.b16 %v996
    %v2220 = vunpack.c.h.b16 %v996
    %v2221 = vunpack.c.l.b16 %v997
    %v2222 = vunpack.c.h.b16 %v997
    %v2223 = vunpack.c.l.b16 %v998
    %v2224 = vunpack.c.h.b16 %v998
    %v2225 = vunpack.c.l.b16 %v999
    %v2226 = vunpack.c.h.b16 %v999
    %v2227 = vunpack.c.l.b16 %v1000
    %v2228 = vunpack.c.h.b16 %v1000
    %v2229 = vunpack.c.l.b16 %v1001
    %v2230 = vunpack.c.h.b16 %v1001
    %v2231 = vunpack.c.l.b16 %v1002
    %v2232 = vunpack.c.h.b16 %v1002
    %v2233 = vunpack.c.l.b16 %v1003
    %v2234 = vunpack.c.h.b16 %v1003
    %v2235 = vunpack.c.l.b16 %v1004
    %v2236 = vunpack.c.h.b16 %v1004
    %v2237 = vunpack.c.l.b16 %v1005
    %v2238 = vunpack.c.h.b16 %v1005
    %v2239 = vunpack.c.l.b16 %v1006
    %v2240 = vunpack.c.h.b16 %v1006
    %v2241 = vunpack.c.l.b16 %v1007
    %v2242 = vunpack.c.h.b16 %v1007
    %v2243 = vunpack.c.l.b16 %v1008
    %v2244 = vunpack.c.h.b16 %v1008
    %v2245 = vunpack.c.l.b16 %v1009
    %v2246 = vunpack.c.h.b16 %v1009
    %v2247 = vunpack.c.l.b16 %v1010
    %v2248 = vunpack.c.h.b16 %v1010
    %v2249 = vunpack.c.l.b16 %v1011
    %v2250 = vunpack.c.h.b16 %v1011
    %v2251 = vunpack.c.l.b16 %v1012
    %v2252 = vunpack.c.h.b16 %v1012
    %v2253 = vunpack.c.l.b16 %v1013
    %v2254 = vunpack.c.h.b16 %v1013
    %v2255 = vunpack.c.l.b16 %v1014
    %v2256 = vunpack.c.h.b16 %v1014
    %v2257 = vunpack.c.l.b16 %v1015
    %v2258 = vunpack.c.h.b16 %v1015
    %v2259 = vunpack.c.l.b16 %v1016
    %v2260 = vunpack.c.h.b16 %v1016
    %v2261 = vunpack.c.l.b16 %v1017
    %v2262 = vunpack.c.h.b16 %v1017
    %v2263 = vunpack.c.l.b16 %v1018
    %v2264 = vunpack.c.h.b16 %v1018
    %v2265 = vunpack.c.l.b16 %v1019
    %v2266 = vunpack.c.h.b16 %v1019
    %v2267 = vunpack.c.l.b16 %v1020
    %v2268 = vunpack.c.h.b16 %v1020
    %v2269 = vunpack.c.l.b16 %v1021
    %v2270 = vunpack.c.h.b16 %v1021
    %v2271 = vunpack.c.l.b16 %v1022
    %v2272 = vunpack.c.h.b16 %v1022
    %v2273 = vunpack.c.l.b16 %v1023
    %v2274 = vunpack.c.h.b16 %v1023
    %v2275 = vunpack.c.l.b16 %v1024
    %v2276 = vunpack.c.h.b16 %v1024
    %v2277 = vunpack.c.l.b16 %v1025
    %v2278 = vunpack.c.h.b16 %v1025
    %v2279 = vunpack.c.l.b16 %v1026
    %v2280 = vunpack.c.h.b16 %v1026
    %v2281 = vunpack.c.l.b16 %v1027
    %v2282 = vunpack.c.h.b16 %v1027
    %v2283 = vunpack.c.l.b16 %v1028
    %v2284 = vunpack.c.h.b16 %v1028
    %v2285 = vunpack.c.l.b16 %v1029
    %v2286 = vunpack.c.h.b16 %v1029
    %v2287 = vunpack.c.l.b16 %v1030
    %v2288 = vunpack.c.h.b16 %v1030
    %v2289 = vunpack.c.l.b16 %v1031
    %v2290 = vunpack.c.h.b16 %v1031
    %v2291 = vunpack.c.l.b16 %v1032
    %v2292 = vunpack.c.h.b16 %v1032
    %v2293 = vunpack.c.l.b16 %v1033
    %v2294 = vunpack.c.h.b16 %v1033
    %v2295 = vunpack.c.l.b16 %v1034
    %v2296 = vunpack.c.h.b16 %v1034
    %v2297 = vunpack.c.l.b16 %v1035
    %v2298 = vunpack.c.h.b16 %v1035
    %v2299 = vunpack.c.l.b16 %v1036
    %v2300 = vunpack.c.h.b16 %v1036
    %v2301 = vunpack.c.l.b16 %v1037
    %v2302 = vunpack.c.h.b16 %v1037
    %v2303 = vunpack.c.l.b16 %v1038
    %v2304 = vunpack.c.h.b16 %v1038
    %v2305 = vunpack.c.l.b16 %v1039
    %v2306 = vunpack.c.h.b16 %v1039
    %v2307 = vunpack.c.l.b16 %v1040
    %v2308 = vunpack.c.h.b16 %v1040
    %v2309 = vunpack.c.l.b16 %v1041
    %v2310 = vunpack.c.h.b16 %v1041
    %v2311 = vunpack.c.l.b16 %v1042
    %v2312 = vunpack.c.h.b16 %v1042
    %v2313 = vunpack.c.l.b16 %v1043
    %v2314 = vunpack.c.h.b16 %v1043
    %v2315 = vunpack.c.l.b16 %v1044
    %v2316 = vunpack.c.h.b16 %v1044
    %v2317 = vunpack.c.l.b16 %v1045
    %v2318 = vunpack.c.h.b16 %v1045
    %v2319 = vunpack.c.l.b16 %v1046
    %v2320 = vunpack.c.h.b16 %v1046
    %v2321 = vunpack.c.l.b16 %v1047
    %v2322 = vunpack.c.h.b16 %v1047
    %v2323 = vunpack.c.l.b16 %v1048
    %v2324 = vunpack.c.h.b16 %v1048
    %v2325 = vunpack.c.l.b16 %v1049
    %v2326 = vunpack.c.h.b16 %v1049
    %v2327 = vunpack.c.l.b16 %v1050
    %v2328 = vunpack.c.h.b16 %v1050
    %v2329 = vunpack.c.l.b16 %v1051
    %v2330 = vunpack.c.h.b16 %v1051
    %v2331 = vunpack.c.l.b16 %v1052
    %v2332 = vunpack.c.h.b16 %v1052
    %v2333 = vunpack.c.l.b16 %v1053
    %v2334 = vunpack.c.h.b16 %v1053
    %v2335 = vunpack.c.l.b16 %v1054
    %v2336 = vunpack.c.h.b16 %v1054
    %v2337 = vunpack.c.l.b16 %v1055
    %v2338 = vunpack.c.h.b16 %v1055
    %v2339 = vunpack.c.l.b16 %v1056
    %v2340 = vunpack.c.h.b16 %v1056
    %v2341 = vunpack.c.l.b16 %v1057
    %v2342 = vunpack.c.h.b16 %v1057
    %v2343 = vunpack.c.l.b16 %v1058
    %v2344 = vunpack.c.h.b16 %v1058
    %v2345 = vunpack.c.l.b16 %v1059
    %v2346 = vunpack.c.h.b16 %v1059
    %v2347 = vunpack.c.l.b16 %v1060
    %v2348 = vunpack.c.h.b16 %v1060
    %v2349 = vunpack.c.l.b16 %v1061
    %v2350 = vunpack.c.h.b16 %v1061
    %v2351 = vunpack.c.l.b16 %v1062
    %v2352 = vunpack.c.h.b16 %v1062
    %v2353 = vunpack.c.l.b16 %v1063
    %v2354 = vunpack.c.h.b16 %v1063
    %v2355 = vunpack.c.l.b16 %v1064
    %v2356 = vunpack.c.h.b16 %v1064
    %v2357 = vunpack.c.l.b16 %v1065
    %v2358 = vunpack.c.h.b16 %v1065
    %v2359 = vunpack.c.l.b16 %v1066
    %v2360 = vunpack.c.h.b16 %v1066
    %v2361 = vunpack.c.l.b16 %v1067
    %v2362 = vunpack.c.h.b16 %v1067
    %v2363 = vunpack.c.l.b16 %v1068
    %v2364 = vunpack.c.h.b16 %v1068
    %v2365 = vunpack.c.l.b16 %v1069
    %v2366 = vunpack.c.h.b16 %v1069
    %v2367 = vunpack.c.l.b16 %v1070
    %v2368 = vunpack.c.h.b16 %v1070
    %v2369 = vunpack.c.l.b16 %v1071
    %v2370 = vunpack.c.h.b16 %v1071
    %v2371 = vunpack.c.l.b16 %v1072
    %v2372 = vunpack.c.h.b16 %v1072
    %v2373 = vunpack.c.l.b16 %v1073
    %v2374 = vunpack.c.h.b16 %v1073
    %v2375 = vunpack.c.l.b16 %v1074
    %v2376 = vunpack.c.h.b16 %v1074
    %v2377 = vunpack.c.l.b16 %v1075
    %v2378 = vunpack.c.h.b16 %v1075
    %v2379 = vunpack.c.l.b16 %v1076
    %v2380 = vunpack.c.h.b16 %v1076
    %v2381 = vunpack.c.l.b16 %v1077
    %v2382 = vunpack.c.h.b16 %v1077
    %v2383 = vunpack.c.l.b16 %v1078
    %v2384 = vunpack.c.h.b16 %v1078
    %v2385 = vunpack.c.l.b16 %v1079
    %v2386 = vunpack.c.h.b16 %v1079
    %v2387 = vunpack.c.l.b16 %v1080
    %v2388 = vunpack.c.h.b16 %v1080
    %v2389 = vunpack.c.l.b16 %v1081
    %v2390 = vunpack.c.h.b16 %v1081
    %v2391 = vunpack.c.l.b16 %v1082
    %v2392 = vunpack.c.h.b16 %v1082
    %v2393 = vunpack.c.l.b16 %v1083
    %v2394 = vunpack.c.h.b16 %v1083
    %v2395 = vunpack.c.l.b16 %v1084
    %v2396 = vunpack.c.h.b16 %v1084
    %v2397 = vunpack.c.l.b16 %v1085
    %v2398 = vunpack.c.h.b16 %v1085
    %v2399 = vunpack.c.l.b16 %v1086
    %v2400 = vunpack.c.h.b16 %v1086
    %v2401 = vunpack.c.l.b16 %v1087
    %v2402 = vunpack.c.h.b16 %v1087
    %v2403 = vunpack.c.l.b16 %v1088
    %v2404 = vunpack.c.h.b16 %v1088
    %v2405 = vunpack.c.l.b16 %v1089
    %v2406 = vunpack.c.h.b16 %v1089
    %v2407 = vunpack.c.l.b16 %v1090
    %v2408 = vunpack.c.h.b16 %v1090
    %v2409 = vunpack.c.l.b16 %v1091
    %v2410 = vunpack.c.h.b16 %v1091
    %v2411 = vunpack.c.l.b16 %v1092
    %v2412 = vunpack.c.h.b16 %v1092
    %v2413 = vunpack.c.l.b16 %v1093
    %v2414 = vunpack.c.h.b16 %v1093
    %v2415 = vunpack.c.l.b16 %v1094
    %v2416 = vunpack.c.h.b16 %v1094
    %v2417 = vunpack.c.l.b16 %v1095
    %v2418 = vunpack.c.h.b16 %v1095
    %v2419 = vunpack.c.l.b16 %v1096
    %v2420 = vunpack.c.h.b16 %v1096
    %v2421 = vunpack.c.l.b16 %v1097
    %v2422 = vunpack.c.h.b16 %v1097
    %v2423 = vunpack.c.l.b16 %v1098
    %v2424 = vunpack.c.h.b16 %v1098
    %v2425 = vunpack.c.l.b16 %v1099
    %v2426 = vunpack.c.h.b16 %v1099
    %v2427 = vunpack.c.l.b16 %v1100
    %v2428 = vunpack.c.h.b16 %v1100
    %v2429 = vunpack.c.l.b16 %v1101
    %v2430 = vunpack.c.h.b16 %v1101
    %v2431 = vunpack.c.l.b16 %v1102
    %v2432 = vunpack.c.h.b16 %v1102
    %v2433 = vunpack.c.l.b16 %v1103
    %v2434 = vunpack.c.h.b16 %v1103
    %v2435 = vunpack.c.l.b16 %v1104
    %v2436 = vunpack.c.h.b16 %v1104
    %v2437 = vunpack.c.l.b16 %v1105
    %v2438 = vunpack.c.h.b16 %v1105
    %v2439 = vunpack.c.l.b16 %v1106
    %v2440 = vunpack.c.h.b16 %v1106
    %v2441 = vunpack.c.l.b16 %v1107
    %v2442 = vunpack.c.h.b16 %v1107
    %v2443 = vunpack.c.l.b16 %v1108
    %v2444 = vunpack.c.h.b16 %v1108
    %v2445 = vunpack.c.l.b16 %v1109
    %v2446 = vunpack.c.h.b16 %v1109
    %v2447 = vunpack.c.l.b16 %v1110
    %v2448 = vunpack.c.h.b16 %v1110
    %v2449 = vunpack.c.l.b16 %v1111
    %v2450 = vunpack.c.h.b16 %v1111
    %v2451 = vunpack.c.l.b16 %v1112
    %v2452 = vunpack.c.h.b16 %v1112
    %v2453 = vunpack.c.l.b16 %v1113
    %v2454 = vunpack.c.h.b16 %v1113
    %v2455 = vunpack.c.l.b16 %v1114
    %v2456 = vunpack.c.h.b16 %v1114
    %v2457 = vunpack.c.l.b16 %v1115
    %v2458 = vunpack.c.h.b16 %v1115
    %v2459 = vunpack.c.l.b16 %v1116
    %v2460 = vunpack.c.h.b16 %v1116
    %v2461 = vunpack.c.l.b16 %v1117
    %v2462 = vunpack.c.h.b16 %v1117
    %v2463 = vunpack.c.l.b16 %v1118
    %v2464 = vunpack.c.h.b16 %v1118
    %v2465 = vunpack.c.l.b16 %v1119
    %v2466 = vunpack.c.h.b16 %v1119
    %v2467 = vunpack.c.l.b16 %v1120
    %v2468 = vunpack.c.h.b16 %v1120
    %v2469 = vunpack.c.l.b16 %v1121
    %v2470 = vunpack.c.h.b16 %v1121
    %v2471 = vunpack.c.l.b16 %v1122
    %v2472 = vunpack.c.h.b16 %v1122
    %v2473 = vunpack.c.l.b16 %v1123
    %v2474 = vunpack.c.h.b16 %v1123
    %v2475 = vunpack.c.l.b16 %v1124
    %v2476 = vunpack.c.h.b16 %v1124
    %v2477 = vunpack.c.l.b16 %v1125
    %v2478 = vunpack.c.h.b16 %v1125
    %v2479 = vunpack.c.l.b16 %v1126
    %v2480 = vunpack.c.h.b16 %v1126
    %v2481 = vunpack.c.l.b16 %v1127
    %v2482 = vunpack.c.h.b16 %v1127
    %v2483 = vunpack.c.l.b16 %v1128
    %v2484 = vunpack.c.h.b16 %v1128
    %v2485 = vunpack.c.l.b16 %v1129
    %v2486 = vunpack.c.h.b16 %v1129
    %v2487 = vunpack.c.l.b16 %v1130
    %v2488 = vunpack.c.h.b16 %v1130
    %v2489 = vunpack.c.l.b16 %v1131
    %v2490 = vunpack.c.h.b16 %v1131
    %v2491 = vunpack.c.l.b16 %v1132
    %v2492 = vunpack.c.h.b16 %v1132
    %v2493 = vunpack.c.l.b16 %v1133
    %v2494 = vunpack.c.h.b16 %v1133
    %v2495 = vunpack.c.l.b16 %v1134
    %v2496 = vunpack.c.h.b16 %v1134
    %v2497 = vunpack.c.l.b16 %v1135
    %v2498 = vunpack.c.h.b16 %v1135
    %v2499 = vunpack.c.l.b16 %v1136
    %v2500 = vunpack.c.h.b16 %v1136
    %v2501 = vunpack.c.l.b16 %v1137
    %v2502 = vunpack.c.h.b16 %v1137
    %v2503 = vunpack.c.l.b16 %v1138
    %v2504 = vunpack.c.h.b16 %v1138
    %v2505 = vunpack.c.l.b16 %v1139
    %v2506 = vunpack.c.h.b16 %v1139
    %v2507 = vunpack.c.l.b16 %v1140
    %v2508 = vunpack.c.h.b16 %v1140
    %v2509 = vunpack.c.l.b16 %v1141
    %v2510 = vunpack.c.h.b16 %v1141
    %v2511 = vunpack.c.l.b16 %v1142
    %v2512 = vunpack.c.h.b16 %v1142
    %v2513 = vunpack.c.l.b16 %v1143
    %v2514 = vunpack.c.h.b16 %v1143
    %v2515 = vunpack.c.l.b16 %v1144
    %v2516 = vunpack.c.h.b16 %v1144
    %v2517 = vunpack.c.l.b16 %v1145
    %v2518 = vunpack.c.h.b16 %v1145
    %v2519 = vunpack.c.l.b16 %v1146
    %v2520 = vunpack.c.h.b16 %v1146
    %v2521 = vunpack.c.l.b16 %v1147
    %v2522 = vunpack.c.h.b16 %v1147
    %v2523 = vunpack.c.l.b16 %v1148
    %v2524 = vunpack.c.h.b16 %v1148
    %v2525 = vunpack.c.l.b16 %v1149
    %v2526 = vunpack.c.h.b16 %v1149
    %v2527 = vunpack.c.l.b16 %v1150
    %v2528 = vunpack.c.h.b16 %v1150
    %v2529 = vunpack.c.l.b16 %v1151
    %v2530 = vunpack.c.h.b16 %v1151
    %v2531 = vunpack.c.l.b16 %v1152
    %v2532 = vunpack.c.h.b16 %v1152
    %v2533 = vunpack.c.l.b16 %v1153
    %v2534 = vunpack.c.h.b16 %v1153
    %v2535 = vunpack.c.l.b16 %v1154
    %v2536 = vunpack.c.h.b16 %v1154
    %v2537 = vunpack.c.l.b16 %v1155
    %v2538 = vunpack.c.h.b16 %v1155
    %v2539 = vunpack.c.l.b16 %v1156
    %v2540 = vunpack.c.h.b16 %v1156
    %v2541 = vunpack.c.l.b16 %v1157
    %v2542 = vunpack.c.h.b16 %v1157
    %v2543 = vunpack.c.l.b16 %v1158
    %v2544 = vunpack.c.h.b16 %v1158
    %v2545 = vunpack.c.l.b16 %v1159
    %v2546 = vunpack.c.h.b16 %v1159
    %v2547 = vunpack.c.l.b16 %v1160
    %v2548 = vunpack.c.h.b16 %v1160
    %v2549 = vunpack.c.l.b16 %v1161
    %v2550 = vunpack.c.h.b16 %v1161
    %v2551 = vunpack.c.l.b16 %v1162
    %v2552 = vunpack.c.h.b16 %v1162
    %v2553 = vunpack.c.l.b16 %v1163
    %v2554 = vunpack.c.h.b16 %v1163
    %v2555 = vunpack.c.l.b16 %v1164
    %v2556 = vunpack.c.h.b16 %v1164
    %v2557 = vunpack.c.l.b16 %v1165
    %v2558 = vunpack.c.h.b16 %v1165
    %v2559 = vunpack.c.l.b16 %v1166
    %v2560 = vunpack.c.h.b16 %v1166
    %v2561 = vunpack.c.l.b16 %v1167
    %v2562 = vunpack.c.h.b16 %v1167
    %v2563 = vunpack.c.l.b16 %v1168
    %v2564 = vunpack.c.h.b16 %v1168
    %v2565 = vunpack.c.l.b16 %v1169
    %v2566 = vunpack.c.h.b16 %v1169
    %v2567 = vunpack.c.l.b16 %v1170
    %v2568 = vunpack.c.h.b16 %v1170
    %v2569 = vunpack.c.l.b16 %v1171
    %v2570 = vunpack.c.h.b16 %v1171
    %v2571 = vunpack.c.l.b16 %v1172
    %v2572 = vunpack.c.h.b16 %v1172
    %v2573 = vunpack.c.l.b16 %v1173
    %v2574 = vunpack.c.h.b16 %v1173
    %v2575 = vunpack.c.l.b16 %v1174
    %v2576 = vunpack.c.h.b16 %v1174
    %v2577 = vunpack.c.l.b16 %v1175
    %v2578 = vunpack.c.h.b16 %v1175
    %v2579 = vunpack.c.l.b16 %v1176
    %v2580 = vunpack.c.h.b16 %v1176
    %v2581 = vunpack.c.l.b16 %v1177
    %v2582 = vunpack.c.h.b16 %v1177
    %v2583 = vunpack.c.l.b16 %v1178
    %v2584 = vunpack.c.h.b16 %v1178
    %v2585 = vunpack.c.l.b16 %v1179
    %v2586 = vunpack.c.h.b16 %v1179
    %v2587 = vunpack.c.l.b16 %v1180
    %v2588 = vunpack.c.h.b16 %v1180
    %v2589 = vunpack.c.l.b16 %v1181
    %v2590 = vunpack.c.h.b16 %v1181
    %v2591 = vunpack.c.l.b16 %v1182
    %v2592 = vunpack.c.h.b16 %v1182
    %v2593 = vunpack.c.l.b16 %v1183
    %v2594 = vunpack.c.h.b16 %v1183
    %v2595 = vunpack.c.l.b16 %v1184
    %v2596 = vunpack.c.h.b16 %v1184
    %v2597 = vunpack.c.l.b16 %v1185
    %v2598 = vunpack.c.h.b16 %v1185
    %v2599 = vunpack.c.l.b16 %v1186
    %v2600 = vunpack.c.h.b16 %v1186
    %v2601 = vunpack.c.l.b16 %v1187
    %v2602 = vunpack.c.h.b16 %v1187
    %v2603 = vunpack.c.l.b16 %v1188
    %v2604 = vunpack.c.h.b16 %v1188
    %v2605 = vunpack.c.l.b16 %v1189
    %v2606 = vunpack.c.h.b16 %v1189
    %v2607 = vunpack.c.l.b16 %v1190
    %v2608 = vunpack.c.h.b16 %v1190
    %v2609 = vunpack.c.l.b16 %v1191
    %v2610 = vunpack.c.h.b16 %v1191
    %v2611 = vunpack.c.l.b16 %v1192
    %v2612 = vunpack.c.h.b16 %v1192
    %v2613 = vunpack.c.l.b16 %v1193
    %v2614 = vunpack.c.h.b16 %v1193
    %v2615 = vunpack.c.l.b16 %v1194
    %v2616 = vunpack.c.h.b16 %v1194
    %v2617 = vunpack.c.l.b16 %v1195
    %v2618 = vunpack.c.h.b16 %v1195
    %v2619 = vunpack.c.l.b16 %v1196
    %v2620 = vunpack.c.h.b16 %v1196
    %v2621 = vunpack.c.l.b16 %v1197
    %v2622 = vunpack.c.h.b16 %v1197
    %v2623 = vunpack.c.l.b16 %v1198
    %v2624 = vunpack.c.h.b16 %v1198
    %v2625 = vunpack.c.l.b16 %v1199
    %v2626 = vunpack.c.h.b16 %v1199
    %v2627 = vunpack.c.l.b16 %v1200
    %v2628 = vunpack.c.h.b16 %v1200
    %v2629 = vunpack.c.l.b16 %v1201
    %v2630 = vunpack.c.h.b16 %v1201
    %v2631 = vunpack.c.l.b16 %v1202
    %v2632 = vunpack.c.h.b16 %v1202
    %v2633 = vunpack.c.l.b16 %v1203
    %v2634 = vunpack.c.h.b16 %v1203
    %v2635 = vunpack.c.l.b16 %v1204
    %v2636 = vunpack.c.h.b16 %v1204
    %v2637 = vunpack.c.l.b16 %v1205
    %v2638 = vunpack.c.h.b16 %v1205
    %v2639 = vunpack.c.l.b16 %v1206
    %v2640 = vunpack.c.h.b16 %v1206
    %v2641 = vunpack.c.l.b16 %v1207
    %v2642 = vunpack.c.h.b16 %v1207
    %v2643 = vunpack.c.l.b16 %v1208
    %v2644 = vunpack.c.h.b16 %v1208
    %v2645 = vunpack.c.l.b16 %v1209
    %v2646 = vunpack.c.h.b16 %v1209
    %v2647 = vunpack.c.l.b16 %v1210
    %v2648 = vunpack.c.h.b16 %v1210
    %v2649 = vunpack.c.l.b16 %v1211
    %v2650 = vunpack.c.h.b16 %v1211
    %v2651 = vunpack.c.l.b16 %v1212
    %v2652 = vunpack.c.h.b16 %v1212
    %v2653 = vunpack.c.l.b16 %v1213
    %v2654 = vunpack.c.h.b16 %v1213
    %v2655 = vunpack.c.l.b16 %v1214
    %v2656 = vunpack.c.h.b16 %v1214
    %v2657 = vunpack.c.l.b16 %v1215
    %v2658 = vunpack.c.h.b16 %v1215
    %v2659 = vunpack.c.l.b16 %v1216
    %v2660 = vunpack.c.h.b16 %v1216
    %v2661 = vunpack.c.l.b16 %v1217
    %v2662 = vunpack.c.h.b16 %v1217
    %v2663 = vunpack.c.l.b16 %v1218
    %v2664 = vunpack.c.h.b16 %v1218
    %v2665 = vunpack.c.l.b16 %v1219
    %v2666 = vunpack.c.h.b16 %v1219
    %v2667 = vunpack.c.l.b16 %v1220
    %v2668 = vunpack.c.h.b16 %v1220
    %v2669 = vunpack.c.l.b16 %v1221
    %v2670 = vunpack.c.h.b16 %v1221
    %v2671 = vunpack.c.l.b16 %v1222
    %v2672 = vunpack.c.h.b16 %v1222
    %v2673 = vunpack.c.l.b16 %v1223
    %v2674 = vunpack.c.h.b16 %v1223
    %v2675 = vunpack.c.l.b16 %v1224
    %v2676 = vunpack.c.h.b16 %v1224
    %v2677 = vunpack.c.l.b16 %v1225
    %v2678 = vunpack.c.h.b16 %v1225
    %v2679 = vunpack.c.l.b16 %v1226
    %v2680 = vunpack.c.h.b16 %v1226
    %v2681 = vunpack.c.l.b16 %v1227
    %v2682 = vunpack.c.h.b16 %v1227
    %v2683 = vunpack.c.l.b16 %v1228
    %v2684 = vunpack.c.h.b16 %v1228
    %v2685 = vunpack.c.l.b16 %v1229
    %v2686 = vunpack.c.h.b16 %v1229
    %v2687 = vunpack.c.l.b16 %v1230
    %v2688 = vunpack.c.h.b16 %v1230
    %v2689 = vunpack.c.l.b16 %v1231
    %v2690 = vunpack.c.h.b16 %v1231
    %v2691 = vunpack.c.l.b16 %v1232
    %v2692 = vunpack.c.h.b16 %v1232
    %v2693 = vunpack.c.l.b16 %v1233
    %v2694 = vunpack.c.h.b16 %v1233
    %v2695 = vunpack.c.l.b16 %v1234
    %v2696 = vunpack.c.h.b16 %v1234
    %v2697 = vunpack.c.l.b16 %v1235
    %v2698 = vunpack.c.h.b16 %v1235
    %v2699 = vunpack.c.l.b16 %v1236
    %v2700 = vunpack.c.h.b16 %v1236
    %v2701 = vunpack.c.l.b16 %v1237
    %v2702 = vunpack.c.h.b16 %v1237
    %v2703 = vunpack.c.l.b16 %v1238
    %v2704 = vunpack.c.h.b16 %v1238
    %v2705 = vunpack.c.l.b16 %v1239
    %v2706 = vunpack.c.h.b16 %v1239
    %v2707 = vunpack.c.l.b16 %v1240
    %v2708 = vunpack.c.h.b16 %v1240
    %v2709 = vunpack.c.l.b16 %v1241
    %v2710 = vunpack.c.h.b16 %v1241
    %v2711 = vunpack.c.l.b16 %v1242
    %v2712 = vunpack.c.h.b16 %v1242
    %v2713 = vunpack.c.l.b16 %v1243
    %v2714 = vunpack.c.h.b16 %v1243
    %v2715 = vunpack.c.l.b16 %v1244
    %v2716 = vunpack.c.h.b16 %v1244
    %v2717 = vunpack.c.l.b16 %v1245
    %v2718 = vunpack.c.h.b16 %v1245
    %v2719 = vunpack.c.l.b16 %v1246
    %v2720 = vunpack.c.h.b16 %v1246
    %v2721 = vunpack.c.l.b16 %v1247
    %v2722 = vunpack.c.h.b16 %v1247
    %v2723 = vunpack.c.l.b16 %v1248
    %v2724 = vunpack.c.h.b16 %v1248
    %v2725 = vunpack.c.l.b16 %v1249
    %v2726 = vunpack.c.h.b16 %v1249
    %v2727 = vunpack.c.l.b16 %v1250
    %v2728 = vunpack.c.h.b16 %v1250
    %v2729 = vunpack.c.l.b16 %v1251
    %v2730 = vunpack.c.h.b16 %v1251
    %v2731 = vunpack.c.l.b16 %v1252
    %v2732 = vunpack.c.h.b16 %v1252
    %v2733 = vunpack.c.l.b16 %v1253
    %v2734 = vunpack.c.h.b16 %v1253
    %v2735 = vunpack.c.l.b16 %v1254
    %v2736 = vunpack.c.h.b16 %v1254
    %v2737 = vunpack.c.l.b16 %v1255
    %v2738 = vunpack.c.h.b16 %v1255
    %v2739 = vunpack.c.l.b16 %v1256
    %v2740 = vunpack.c.h.b16 %v1256
    %v2741 = vunpack.c.l.b16 %v1257
    %v2742 = vunpack.c.h.b16 %v1257
    %v2743 = vunpack.c.l.b16 %v1258
    %v2744 = vunpack.c.h.b16 %v1258
    %v2745 = vunpack.c.l.b16 %v1259
    %v2746 = vunpack.c.h.b16 %v1259
    %v2747 = vunpack.c.l.b16 %v1260
    %v2748 = vunpack.c.h.b16 %v1260
    %v2749 = vunpack.c.l.b16 %v1261
    %v2750 = vunpack.c.h.b16 %v1261
    %v2751 = vunpack.c.l.b16 %v1262
    %v2752 = vunpack.c.h.b16 %v1262
    %v2753 = vunpack.c.l.b16 %v1263
    %v2754 = vunpack.c.h.b16 %v1263
    %v2755 = vunpack.c.l.b16 %v1264
    %v2756 = vunpack.c.h.b16 %v1264
    %v2757 = vunpack.c.l.b16 %v1265
    %v2758 = vunpack.c.h.b16 %v1265
    %v2759 = vunpack.c.l.b16 %v1266
    %v2760 = vunpack.c.h.b16 %v1266
    %v2761 = vunpack.c.l.b16 %v1267
    %v2762 = vunpack.c.h.b16 %v1267
    %v2763 = vunpack.c.l.b16 %v1268
    %v2764 = vunpack.c.h.b16 %v1268
    %v2765 = vunpack.c.l.b16 %v1269
    %v2766 = vunpack.c.h.b16 %v1269
    %v2767 = vunpack.c.l.b16 %v1270
    %v2768 = vunpack.c.h.b16 %v1270
    %v2769 = vunpack.c.l.b16 %v1271
    %v2770 = vunpack.c.h.b16 %v1271
    %v2771 = vunpack.c.l.b16 %v1272
    %v2772 = vunpack.c.h.b16 %v1272
    %v2773 = vunpack.c.l.b16 %v1273
    %v2774 = vunpack.c.h.b16 %v1273
    %v2775 = vunpack.c.l.b16 %v1274
    %v2776 = vunpack.c.h.b16 %v1274
    %v2777 = vunpack.c.l.b16 %v1275
    %v2778 = vunpack.c.h.b16 %v1275
    %v2779 = vunpack.c.l.b16 %v1276
    %v2780 = vunpack.c.h.b16 %v1276
    %v2781 = vunpack.c.l.b16 %v1277
    %v2782 = vunpack.c.h.b16 %v1277
    %v2783 = vunpack.c.l.b16 %v1278
    %v2784 = vunpack.c.h.b16 %v1278
    %v2785 = vunpack.c.l.b16 %v1279
    %v2786 = vunpack.c.h.b16 %v1279
    %v2787 = vunpack.c.l.b16 %v1280
    %v2788 = vunpack.c.h.b16 %v1280
    %v2789 = vunpack.c.l.b16 %v1281
    %v2790 = vunpack.c.h.b16 %v1281
    %v2791 = vunpack.c.l.b16 %v1282
    %v2792 = vunpack.c.h.b16 %v1282
    %v2793 = vunpack.c.l.b16 %v1283
    %v2794 = vunpack.c.h.b16 %v1283
    %v2795 = vunpack.c.l.b16 %v1284
    %v2796 = vunpack.c.h.b16 %v1284
    %v2797 = vunpack.c.l.b16 %v1285
    %v2798 = vunpack.c.h.b16 %v1285
    %v2799 = vunpack.c.l.b16 %v1286
    %v2800 = vunpack.c.h.b16 %v1286
    %v2801 = vunpack.c.l.b16 %v1287
    %v2802 = vunpack.c.h.b16 %v1287
    %v2803 = vunpack.c.l.b16 %v1288
    %v2804 = vunpack.c.h.b16 %v1288
    %v2805 = vunpack.c.l.b16 %v1289
    %v2806 = vunpack.c.h.b16 %v1289
    %v2807 = vunpack.c.l.b16 %v1290
    %v2808 = vunpack.c.h.b16 %v1290
    %v2809 = vunpack.c.l.b16 %v1291
    %v2810 = vunpack.c.h.b16 %v1291
    %v2811 = vunpack.c.l.b16 %v1292
    %v2812 = vunpack.c.h.b16 %v1292
    %v2813 = vunpack.c.l.b16 %v1293
    %v2814 = vunpack.c.h.b16 %v1293
    %v2815 = vunpack.c.l.b16 %v1294
    %v2816 = vunpack.c.h.b16 %v1294
    %v2817 = vunpack.c.l.b16 %v1295
    %v2818 = vunpack.c.h.b16 %v1295
    %v2819 = vunpack.c.l.b16 %v1296
    %v2820 = vunpack.c.h.b16 %v1296
    %v2821 = vunpack.c.l.b16 %v1297
    %v2822 = vunpack.c.h.b16 %v1297
    %v2823 = vunpack.c.l.b16 %v1298
    %v2824 = vunpack.c.h.b16 %v1298
    %v2825 = vunpack.c.l.b16 %v1299
    %v2826 = vunpack.c.h.b16 %v1299
    %v2827 = vunpack.c.l.b16 %v1300
    %v2828 = vunpack.c.h.b16 %v1300
    %v2829 = vunpack.c.l.b16 %v1301
    %v2830 = vunpack.c.h.b16 %v1301
    %v2831 = vunpack.c.l.b16 %v1302
    %v2832 = vunpack.c.h.b16 %v1302
    %v2833 = vunpack.c.l.b16 %v1303
    %v2834 = vunpack.c.h.b16 %v1303
    %v2835 = vunpack.c.l.b16 %v1304
    %v2836 = vunpack.c.h.b16 %v1304
    %v2837 = vunpack.c.l.b16 %v1305
    %v2838 = vunpack.c.h.b16 %v1305
    %v2839 = vunpack.c.l.b16 %v1306
    %v2840 = vunpack.c.h.b16 %v1306
    %v2841 = vunpack.c.l.b16 %v1307
    %v2842 = vunpack.c.h.b16 %v1307
    %v2843 = vunpack.c.l.b16 %v1308
    %v2844 = vunpack.c.h.b16 %v1308
    %v2845 = vunpack.c.l.b16 %v1309
    %v2846 = vunpack.c.h.b16 %v1309
    %v2847 = vunpack.c.l.b16 %v1310
    %v2848 = vunpack.c.h.b16 %v1310
    %v2849 = vunpack.c.l.b16 %v1311
    %v2850 = vunpack.c.h.b16 %v1311
    %v2851 = vunpack.c.l.b16 %v1312
    %v2852 = vunpack.c.h.b16 %v1312
    %v2853 = vunpack.c.l.b16 %v1313
    %v2854 = vunpack.c.h.b16 %v1313
    %v2855 = vunpack.c.l.b16 %v1314
    %v2856 = vunpack.c.h.b16 %v1314
    %v2857 = vunpack.c.l.b16 %v1315
    %v2858 = vunpack.c.h.b16 %v1315
    %v2859 = vunpack.c.l.b16 %v1316
    %v2860 = vunpack.c.h.b16 %v1316
    %v2861 = vunpack.c.l.b16 %v1317
    %v2862 = vunpack.c.h.b16 %v1317
    %v2863 = vunpack.c.l.b16 %v1318
    %v2864 = vunpack.c.h.b16 %v1318
    %v2865 = vunpack.c.l.b16 %v1319
    %v2866 = vunpack.c.h.b16 %v1319
    %v2867 = vunpack.c.l.b16 %v1320
    %v2868 = vunpack.c.h.b16 %v1320
    %v2869 = vunpack.c.l.b16 %v1321
    %v2870 = vunpack.c.h.b16 %v1321
    %v2871 = vunpack.c.l.b16 %v1322
    %v2872 = vunpack.c.h.b16 %v1322
    %v2873 = vunpack.c.l.b16 %v1323
    %v2874 = vunpack.c.h.b16 %v1323
    %v2875 = vunpack.c.l.b16 %v1324
    %v2876 = vunpack.c.h.b16 %v1324
    %v2877 = vunpack.c.l.b16 %v1325
    %v2878 = vunpack.c.h.b16 %v1325
    %v2879 = vunpack.c.l.b16 %v1326
    %v2880 = vunpack.c.h.b16 %v1326
    %v2881 = vunpack.c.l.b16 %v1327
    %v2882 = vunpack.c.h.b16 %v1327
    %v2883 = vunpack.c.l.b16 %v1328
    %v2884 = vunpack.c.h.b16 %v1328
    %v2885 = vunpack.c.l.b16 %v1329
    %v2886 = vunpack.c.h.b16 %v1329
    %v2887 = vunpack.c.l.b16 %v1330
    %v2888 = vunpack.c.h.b16 %v1330
    %v2889 = vunpack.c.l.b16 %v1331
    %v2890 = vunpack.c.h.b16 %v1331
    %v2891 = vunpack.c.l.b16 %v1332
    %v2892 = vunpack.c.h.b16 %v1332
    %v2893 = vunpack.c.l.b16 %v1333
    %v2894 = vunpack.c.h.b16 %v1333
    %v2895 = vunpack.c.l.b16 %v1334
    %v2896 = vunpack.c.h.b16 %v1334
    %v2897 = vunpack.c.l.b16 %v1335
    %v2898 = vunpack.c.h.b16 %v1335
    %v2899 = vunpack.c.l.b16 %v1336
    %v2900 = vunpack.c.h.b16 %v1336
    %v2901 = vunpack.c.l.b16 %v1337
    %v2902 = vunpack.c.h.b16 %v1337
    %v2903 = vunpack.c.l.b16 %v1338
    %v2904 = vunpack.c.h.b16 %v1338
    %v2905 = vunpack.c.l.b16 %v1339
    %v2906 = vunpack.c.h.b16 %v1339
    %v2907 = vunpack.c.l.b16 %v1340
    %v2908 = vunpack.c.h.b16 %v1340
    %v2909 = vunpack.c.l.b16 %v1341
    %v2910 = vunpack.c.h.b16 %v1341
    %v2911 = vunpack.c.l.b16 %v1342
    %v2912 = vunpack.c.h.b16 %v1342
    %v2913 = vunpack.c.l.b16 %v1343
    %v2914 = vunpack.c.h.b16 %v1343
    %v2915 = vunpack.c.l.b16 %v1344
    %v2916 = vunpack.c.h.b16 %v1344
    %v2917 = vunpack.c.l.b16 %v1345
    %v2918 = vunpack.c.h.b16 %v1345
    %v2919 = vunpack.c.l.b16 %v1346
    %v2920 = vunpack.c.h.b16 %v1346
    %v2921 = vunpack.c.l.b16 %v1347
    %v2922 = vunpack.c.h.b16 %v1347
    %v2923 = vunpack.c.l.b16 %v1348
    %v2924 = vunpack.c.h.b16 %v1348
    %v2925 = vunpack.c.l.b16 %v1349
    %v2926 = vunpack.c.h.b16 %v1349
    %v2927 = vunpack.c.l.b16 %v1350
    %v2928 = vunpack.c.h.b16 %v1350
    %v2929 = vpack.c.b16 %v1913, %v1905
    %v2930 = vpack.c.b16 %v1914, %v1906
    %v2931 = vpack.c.b16 %v1915, %v1907
    %v2932 = vpack.c.b16 %v1916, %v1908
    %v2933 = vpack.c.b16 %v1917, %v1909
    %v2934 = vpack.c.b16 %v1918, %v1910
    %v2935 = vpack.c.b16 %v1919, %v1911
    %v2936 = vpack.c.b16 %v1920, %v1912
    %v2937 = vpack.c.b16 %v1929, %v1921
    %v2938 = vpack.c.b16 %v1930, %v1922
    %v2939 = vpack.c.b16 %v1931, %v1923
    %v2940 = vpack.c.b16 %v1932, %v1924
    %v2941 = vpack.c.b16 %v1933, %v1925
    %v2942 = vpack.c.b16 %v1934, %v1926
    %v2943 = vpack.c.b16 %v1935, %v1927
    %v2944 = vpack.c.b16 %v1936, %v1928
    %v2945 = vpack.c.b16 %v1945, %v1937
    %v2946 = vpack.c.b16 %v1946, %v1938
    %v2947 = vpack.c.b16 %v1947, %v1939
    %v2948 = vpack.c.b16 %v1948, %v1940
    %v2949 = vpack.c.b16 %v1949, %v1941
    %v2950 = vpack.c.b16 %v1950, %v1942
    %v2951 = vpack.c.b16 %v1951, %v1943
    %v2952 = vpack.c.b16 %v1952, %v1944
    %v2953 = vpack.c.b16 %v1961, %v1953
    %v2954 = vpack.c.b16 %v1962, %v1954
    %v2955 = vpack.c.b16 %v1963, %v1955
    %v2956 = vpack.c.b16 %v1964, %v1956
    %v2957 = vpack.c.b16 %v1965, %v1957
    %v2958 = vpack.c.b16 %v1966, %v1958
    %v2959 = vpack.c.b16 %v1967, %v1959
    %v2960 = vpack.c.b16 %v1968, %v1960
    %v2961 = vpack.c.b16 %v1977, %v1969
    %v2962 = vpack.c.b16 %v1978, %v1970
    %v2963 = vpack.c.b16 %v1979, %v1971
    %v2964 = vpack.c.b16 %v1980, %v1972
    %v2965 = vpack.c.b16 %v1981, %v1973
    %v2966 = vpack.c.b16 %v1982, %v1974
    %v2967 = vpack.c.b16 %v1983, %v1975
    %v2968 = vpack.c.b16 %v1984, %v1976
    %v2969 = vpack.c.b16 %v1993, %v1985
    %v2970 = vpack.c.b16 %v1994, %v1986
    %v2971 = vpack.c.b16 %v1995, %v1987
    %v2972 = vpack.c.b16 %v1996, %v1988
    %v2973 = vpack.c.b16 %v1997, %v1989
    %v2974 = vpack.c.b16 %v1998, %v1990
    %v2975 = vpack.c.b16 %v1999, %v1991
    %v2976 = vpack.c.b16 %v2000, %v1992
    %v2977 = vpack.c.b16 %v2009, %v2001
    %v2978 = vpack.c.b16 %v2010, %v2002
    %v2979 = vpack.c.b16 %v2011, %v2003
    %v2980 = vpack.c.b16 %v2012, %v2004
    %v2981 = vpack.c.b16 %v2013, %v2005
    %v2982 = vpack.c.b16 %v2014, %v2006
    %v2983 = vpack.c.b16 %v2015, %v2007
    %v2984 = vpack.c.b16 %v2016, %v2008
    %v2985 = vpack.c.b16 %v2025, %v2017
    %v2986 = vpack.c.b16 %v2026, %v2018
    %v2987 = vpack.c.b16 %v2027, %v2019
    %v2988 = vpack.c.b16 %v2028, %v2020
    %v2989 = vpack.c.b16 %v2029, %v2021
    %v2990 = vpack.c.b16 %v2030, %v2022
    %v2991 = vpack.c.b16 %v2031, %v2023
    %v2992 = vpack.c.b16 %v2032, %v2024
    %v2993 = vpack.c.b16 %v2041, %v2033
    %v2994 = vpack.c.b16 %v2042, %v2034
    %v2995 = vpack.c.b16 %v2043, %v2035
    %v2996 = vpack.c.b16 %v2044, %v2036
    %v2997 = vpack.c.b16 %v2045, %v2037
    %v2998 = vpack.c.b16 %v2046, %v2038
    %v2999 = vpack.c.b16 %v2047, %v2039
    %v3000 = vpack.c.b16 %v2048, %v2040
    %v3001 = vpack.c.b16 %v2057, %v2049
    %v3002 = vpack.c.b16 %v2058, %v2050
    %v3003 = vpack.c.b16 %v2059, %v2051
    %v3004 = vpack.c.b16 %v2060, %v2052
    %v3005 = vpack.c.b16 %v2061, %v2053
    %v3006 = vpack.c.b16 %v2062, %v2054
    %v3007 = vpack.c.b16 %v2063, %v2055
    %v3008 = vpack.c.b16 %v2064, %v2056
    %v3009 = vpack.c.b16 %v2073, %v2065
    %v3010 = vpack.c.b16 %v2074, %v2066
    %v3011 = vpack.c.b16 %v2075, %v2067
    %v3012 = vpack.c.b16 %v2076, %v2068
    %v3013 = vpack.c.b16 %v2077, %v2069
    %v3014 = vpack.c.b16 %v2078, %v2070
    %v3015 = vpack.c.b16 %v2079, %v2071
    %v3016 = vpack.c.b16 %v2080, %v2072
    %v3017 = vpack.c.b16 %v2089, %v2081
    %v3018 = vpack.c.b16 %v2090, %v2082
    %v3019 = vpack.c.b16 %v2091, %v2083
    %v3020 = vpack.c.b16 %v2092, %v2084
    %v3021 = vpack.c.b16 %v2093, %v2085
    %v3022 = vpack.c.b16 %v2094, %v2086
    %v3023 = vpack.c.b16 %v2095, %v2087
    %v3024 = vpack.c.b16 %v2096, %v2088
    %v3025 = vpack.c.b16 %v2105, %v2097
    %v3026 = vpack.c.b16 %v2106, %v2098
    %v3027 = vpack.c.b16 %v2107, %v2099
    %v3028 = vpack.c.b16 %v2108, %v2100
    %v3029 = vpack.c.b16 %v2109, %v2101
    %v3030 = vpack.c.b16 %v2110, %v2102
    %v3031 = vpack.c.b16 %v2111, %v2103
    %v3032 = vpack.c.b16 %v2112, %v2104
    %v3033 = vpack.c.b16 %v2121, %v2113
    %v3034 = vpack.c.b16 %v2122, %v2114
    %v3035 = vpack.c.b16 %v2123, %v2115
    %v3036 = vpack.c.b16 %v2124, %v2116
    %v3037 = vpack.c.b16 %v2125, %v2117
    %v3038 = vpack.c.b16 %v2126, %v2118
    %v3039 = vpack.c.b16 %v2127, %v2119
    %v3040 = vpack.c.b16 %v2128, %v2120
    %v3041 = vpack.c.b16 %v2137, %v2129
    %v3042 = vpack.c.b16 %v2138, %v2130
    %v3043 = vpack.c.b16 %v2139, %v2131
    %v3044 = vpack.c.b16 %v2140, %v2132
    %v3045 = vpack.c.b16 %v2141, %v2133
    %v3046 = vpack.c.b16 %v2142, %v2134
    %v3047 = vpack.c.b16 %v2143, %v2135
    %v3048 = vpack.c.b16 %v2144, %v2136
    %v3049 = vpack.c.b16 %v2153, %v2145
    %v3050 = vpack.c.b16 %v2154, %v2146
    %v3051 = vpack.c.b16 %v2155, %v2147
    %v3052 = vpack.c.b16 %v2156, %v2148
    %v3053 = vpack.c.b16 %v2157, %v2149
    %v3054 = vpack.c.b16 %v2158, %v2150
    %v3055 = vpack.c.b16 %v2159, %v2151
    %v3056 = vpack.c.b16 %v2160, %v2152
    %v3057 = vpack.c.b16 %v2169, %v2161
    %v3058 = vpack.c.b16 %v2170, %v2162
    %v3059 = vpack.c.b16 %v2171, %v2163
    %v3060 = vpack.c.b16 %v2172, %v2164
    %v3061 = vpack.c.b16 %v2173, %v2165
    %v3062 = vpack.c.b16 %v2174, %v2166
    %v3063 = vpack.c.b16 %v2175, %v2167
    %v3064 = vpack.c.b16 %v2176, %v2168
    %v3065 = vpack.c.b16 %v2185, %v2177
    %v3066 = vpack.c.b16 %v2186, %v2178
    %v3067 = vpack.c.b16 %v2187, %v2179
    %v3068 = vpack.c.b16 %v2188, %v2180
    %v3069 = vpack.c.b16 %v2189, %v2181
    %v3070 = vpack.c.b16 %v2190, %v2182
    %v3071 = vpack.c.b16 %v2191, %v2183
    %v3072 = vpack.c.b16 %v2192, %v2184
    %v3073 = vpack.c.b16 %v2201, %v2193
    %v3074 = vpack.c.b16 %v2202, %v2194
    %v3075 = vpack.c.b16 %v2203, %v2195
    %v3076 = vpack.c.b16 %v2204, %v2196
    %v3077 = vpack.c.b16 %v2205, %v2197
    %v3078 = vpack.c.b16 %v2206, %v2198
    %v3079 = vpack.c.b16 %v2207, %v2199
    %v3080 = vpack.c.b16 %v2208, %v2200
    %v3081 = vpack.c.b16 %v2217, %v2209
    %v3082 = vpack.c.b16 %v2218, %v2210
    %v3083 = vpack.c.b16 %v2219, %v2211
    %v3084 = vpack.c.b16 %v2220, %v2212
    %v3085 = vpack.c.b16 %v2221, %v2213
    %v3086 = vpack.c.b16 %v2222, %v2214
    %v3087 = vpack.c.b16 %v2223, %v2215
    %v3088 = vpack.c.b16 %v2224, %v2216
    %v3089 = vpack.c.b16 %v2233, %v2225
    %v3090 = vpack.c.b16 %v2234, %v2226
    %v3091 = vpack.c.b16 %v2235, %v2227
    %v3092 = vpack.c.b16 %v2236, %v2228
    %v3093 = vpack.c.b16 %v2237, %v2229
    %v3094 = vpack.c.b16 %v2238, %v2230
    %v3095 = vpack.c.b16 %v2239, %v2231
    %v3096 = vpack.c.b16 %v2240, %v2232
    %v3097 = vpack.c.b16 %v2249, %v2241
    %v3098 = vpack.c.b16 %v2250, %v2242
    %v3099 = vpack.c.b16 %v2251, %v2243
    %v3100 = vpack.c.b16 %v2252, %v2244
    %v3101 = vpack.c.b16 %v2253, %v2245
    %v3102 = vpack.c.b16 %v2254, %v2246
    %v3103 = vpack.c.b16 %v2255, %v2247
    %v3104 = vpack.c.b16 %v2256, %v2248
    %v3105 = vpack.c.b16 %v2265, %v2257
    %v3106 = vpack.c.b16 %v2266, %v2258
    %v3107 = vpack.c.b16 %v2267, %v2259
    %v3108 = vpack.c.b16 %v2268, %v2260
    %v3109 = vpack.c.b16 %v2269, %v2261
    %v3110 = vpack.c.b16 %v2270, %v2262
    %v3111 = vpack.c.b16 %v2271, %v2263
    %v3112 = vpack.c.b16 %v2272, %v2264
    %v3113 = vpack.c.b16 %v2281, %v2273
    %v3114 = vpack.c.b16 %v2282, %v2274
    %v3115 = vpack.c.b16 %v2283, %v2275
    %v3116 = vpack.c.b16 %v2284, %v2276
    %v3117 = vpack.c.b16 %v2285, %v2277
    %v3118 = vpack.c.b16 %v2286, %v2278
    %v3119 = vpack.c.b16 %v2287, %v2279
    %v3120 = vpack.c.b16 %v2288, %v2280
    %v3121 = vpack.c.b16 %v2297, %v2289
    %v3122 = vpack.c.b16 %v2298, %v2290
    %v3123 = vpack.c.b16 %v2299, %v2291
    %v3124 = vpack.c.b16 %v2300, %v2292
    %v3125 = vpack.c.b16 %v2301, %v2293
    %v3126 = vpack.c.b16 %v2302, %v2294
    %v3127 = vpack.c.b16 %v2303, %v2295
    %v3128 = vpack.c.b16 %v2304, %v2296
    %v3129 = vpack.c.b16 %v2313, %v2305
    %v3130 = vpack.c.b16 %v2314, %v2306
    %v3131 = vpack.c.b16 %v2315, %v2307
    %v3132 = vpack.c.b16 %v2316, %v2308
    %v3133 = vpack.c.b16 %v2317, %v2309
    %v3134 = vpack.c.b16 %v2318, %v2310
    %v3135 = vpack.c.b16 %v2319, %v2311
    %v3136 = vpack.c.b16 %v2320, %v2312
    %v3137 = vpack.c.b16 %v2329, %v2321
    %v3138 = vpack.c.b16 %v2330, %v2322
    %v3139 = vpack.c.b16 %v2331, %v2323
    %v3140 = vpack.c.b16 %v2332, %v2324
    %v3141 = vpack.c.b16 %v2333, %v2325
    %v3142 = vpack.c.b16 %v2334, %v2326
    %v3143 = vpack.c.b16 %v2335, %v2327
    %v3144 = vpack.c.b16 %v2336, %v2328
    %v3145 = vpack.c.b16 %v2345, %v2337
    %v3146 = vpack.c.b16 %v2346, %v2338
    %v3147 = vpack.c.b16 %v2347, %v2339
    %v3148 = vpack.c.b16 %v2348, %v2340
    %v3149 = vpack.c.b16 %v2349, %v2341
    %v3150 = vpack.c.b16 %v2350, %v2342
    %v3151 = vpack.c.b16 %v2351, %v2343
    %v3152 = vpack.c.b16 %v2352, %v2344
    %v3153 = vpack.c.b16 %v2361, %v2353
    %v3154 = vpack.c.b16 %v2362, %v2354
    %v3155 = vpack.c.b16 %v2363, %v2355
    %v3156 = vpack.c.b16 %v2364, %v2356
    %v3157 = vpack.c.b16 %v2365, %v2357
    %v3158 = vpack.c.b16 %v2366, %v2358
    %v3159 = vpack.c.b16 %v2367, %v2359
    %v3160 = vpack.c.b16 %v2368, %v2360
    %v3161 = vpack.c.b16 %v2377, %v2369
    %v3162 = vpack.c.b16 %v2378, %v2370
    %v3163 = vpack.c.b16 %v2379, %v2371
    %v3164 = vpack.c.b16 %v2380, %v2372
    %v3165 = vpack.c.b16 %v2381, %v2373
    %v3166 = vpack.c.b16 %v2382, %v2374
    %v3167 = vpack.c.b16 %v2383, %v2375
    %v3168 = vpack.c.b16 %v2384, %v2376
    %v3169 = vpack.c.b16 %v2393, %v2385
    %v3170 = vpack.c.b16 %v2394, %v2386
    %v3171 = vpack.c.b16 %v2395, %v2387
    %v3172 = vpack.c.b16 %v2396, %v2388
    %v3173 = vpack.c.b16 %v2397, %v2389
    %v3174 = vpack.c.b16 %v2398, %v2390
    %v3175 = vpack.c.b16 %v2399, %v2391
    %v3176 = vpack.c.b16 %v2400, %v2392
    %v3177 = vpack.c.b16 %v2409, %v2401
    %v3178 = vpack.c.b16 %v2410, %v2402
    %v3179 = vpack.c.b16 %v2411, %v2403
    %v3180 = vpack.c.b16 %v2412, %v2404
    %v3181 = vpack.c.b16 %v2413, %v2405
    %v3182 = vpack.c.b16 %v2414, %v2406
    %v3183 = vpack.c.b16 %v2415, %v2407
    %v3184 = vpack.c.b16 %v2416, %v2408
    %v3185 = vpack.c.b16 %v2425, %v2417
    %v3186 = vpack.c.b16 %v2426, %v2418
    %v3187 = vpack.c.b16 %v2427, %v2419
    %v3188 = vpack.c.b16 %v2428, %v2420
    %v3189 = vpack.c.b16 %v2429, %v2421
    %v3190 = vpack.c.b16 %v2430, %v2422
    %v3191 = vpack.c.b16 %v2431, %v2423
    %v3192 = vpack.c.b16 %v2432, %v2424
    %v3193 = vpack.c.b16 %v2441, %v2433
    %v3194 = vpack.c.b16 %v2442, %v2434
    %v3195 = vpack.c.b16 %v2443, %v2435
    %v3196 = vpack.c.b16 %v2444, %v2436
    %v3197 = vpack.c.b16 %v2445, %v2437
    %v3198 = vpack.c.b16 %v2446, %v2438
    %v3199 = vpack.c.b16 %v2447, %v2439
    %v3200 = vpack.c.b16 %v2448, %v2440
    %v3201 = vpack.c.b16 %v2457, %v2449
    %v3202 = vpack.c.b16 %v2458, %v2450
    %v3203 = vpack.c.b16 %v2459, %v2451
    %v3204 = vpack.c.b16 %v2460, %v2452
    %v3205 = vpack.c.b16 %v2461, %v2453
    %v3206 = vpack.c.b16 %v2462, %v2454
    %v3207 = vpack.c.b16 %v2463, %v2455
    %v3208 = vpack.c.b16 %v2464, %v2456
    %v3209 = vpack.c.b16 %v2473, %v2465
    %v3210 = vpack.c.b16 %v2474, %v2466
    %v3211 = vpack.c.b16 %v2475, %v2467
    %v3212 = vpack.c.b16 %v2476, %v2468
    %v3213 = vpack.c.b16 %v2477, %v2469
    %v3214 = vpack.c.b16 %v2478, %v2470
    %v3215 = vpack.c.b16 %v2479, %v2471
    %v3216 = vpack.c.b16 %v2480, %v2472
    %v3217 = vpack.c.b16 %v2489, %v2481
    %v3218 = vpack.c.b16 %v2490, %v2482
    %v3219 = vpack.c.b16 %v2491, %v2483
    %v3220 = vpack.c.b16 %v2492, %v2484
    %v3221 = vpack.c.b16 %v2493, %v2485
    %v3222 = vpack.c.b16 %v2494, %v2486
    %v3223 = vpack.c.b16 %v2495, %v2487
    %v3224 = vpack.c.b16 %v2496, %v2488
    %v3225 = vpack.c.b16 %v2505, %v2497
    %v3226 = vpack.c.b16 %v2506, %v2498
    %v3227 = vpack.c.b16 %v2507, %v2499
    %v3228 = vpack.c.b16 %v2508, %v2500
    %v3229 = vpack.c.b16 %v2509, %v2501
    %v3230 = vpack.c.b16 %v2510, %v2502
    %v3231 = vpack.c.b16 %v2511, %v2503
    %v3232 = vpack.c.b16 %v2512, %v2504
    %v3233 = vpack.c.b16 %v2521, %v2513
    %v3234 = vpack.c.b16 %v2522, %v2514
    %v3235 = vpack.c.b16 %v2523, %v2515
    %v3236 = vpack.c.b16 %v2524, %v2516
    %v3237 = vpack.c.b16 %v2525, %v2517
    %v3238 = vpack.c.b16 %v2526, %v2518
    %v3239 = vpack.c.b16 %v2527, %v2519
    %v3240 = vpack.c.b16 %v2528, %v2520
    %v3241 = vpack.c.b16 %v2537, %v2529
    %v3242 = vpack.c.b16 %v2538, %v2530
    %v3243 = vpack.c.b16 %v2539, %v2531
    %v3244 = vpack.c.b16 %v2540, %v2532
    %v3245 = vpack.c.b16 %v2541, %v2533
    %v3246 = vpack.c.b16 %v2542, %v2534
    %v3247 = vpack.c.b16 %v2543, %v2535
    %v3248 = vpack.c.b16 %v2544, %v2536
    %v3249 = vpack.c.b16 %v2553, %v2545
    %v3250 = vpack.c.b16 %v2554, %v2546
    %v3251 = vpack.c.b16 %v2555, %v2547
    %v3252 = vpack.c.b16 %v2556, %v2548
    %v3253 = vpack.c.b16 %v2557, %v2549
    %v3254 = vpack.c.b16 %v2558, %v2550
    %v3255 = vpack.c.b16 %v2559, %v2551
    %v3256 = vpack.c.b16 %v2560, %v2552
    %v3257 = vpack.c.b16 %v2569, %v2561
    %v3258 = vpack.c.b16 %v2570, %v2562
    %v3259 = vpack.c.b16 %v2571, %v2563
    %v3260 = vpack.c.b16 %v2572, %v2564
    %v3261 = vpack.c.b16 %v2573, %v2565
    %v3262 = vpack.c.b16 %v2574, %v2566
    %v3263 = vpack.c.b16 %v2575, %v2567
    %v3264 = vpack.c.b16 %v2576, %v2568
    %v3265 = vpack.c.b16 %v2585, %v2577
    %v3266 = vpack.c.b16 %v2586, %v2578
    %v3267 = vpack.c.b16 %v2587, %v2579
    %v3268 = vpack.c.b16 %v2588, %v2580
    %v3269 = vpack.c.b16 %v2589, %v2581
    %v3270 = vpack.c.b16 %v2590, %v2582
    %v3271 = vpack.c.b16 %v2591, %v2583
    %v3272 = vpack.c.b16 %v2592, %v2584
    %v3273 = vpack.c.b16 %v2601, %v2593
    %v3274 = vpack.c.b16 %v2602, %v2594
    %v3275 = vpack.c.b16 %v2603, %v2595
    %v3276 = vpack.c.b16 %v2604, %v2596
    %v3277 = vpack.c.b16 %v2605, %v2597
    %v3278 = vpack.c.b16 %v2606, %v2598
    %v3279 = vpack.c.b16 %v2607, %v2599
    %v3280 = vpack.c.b16 %v2608, %v2600
    %v3281 = vpack.c.b16 %v2617, %v2609
    %v3282 = vpack.c.b16 %v2618, %v2610
    %v3283 = vpack.c.b16 %v2619, %v2611
    %v3284 = vpack.c.b16 %v2620, %v2612
    %v3285 = vpack.c.b16 %v2621, %v2613
    %v3286 = vpack.c.b16 %v2622, %v2614
    %v3287 = vpack.c.b16 %v2623, %v2615
    %v3288 = vpack.c.b16 %v2624, %v2616
    %v3289 = vpack.c.b16 %v2633, %v2625
    %v3290 = vpack.c.b16 %v2634, %v2626
    %v3291 = vpack.c.b16 %v2635, %v2627
    %v3292 = vpack.c.b16 %v2636, %v2628
    %v3293 = vpack.c.b16 %v2637, %v2629
    %v3294 = vpack.c.b16 %v2638, %v2630
    %v3295 = vpack.c.b16 %v2639, %v2631
    %v3296 = vpack.c.b16 %v2640, %v2632
    %v3297 = vpack.c.b16 %v2649, %v2641
    %v3298 = vpack.c.b16 %v2650, %v2642
    %v3299 = vpack.c.b16 %v2651, %v2643
    %v3300 = vpack.c.b16 %v2652, %v2644
    %v3301 = vpack.c.b16 %v2653, %v2645
    %v3302 = vpack.c.b16 %v2654, %v2646
    %v3303 = vpack.c.b16 %v2655, %v2647
    %v3304 = vpack.c.b16 %v2656, %v2648
    %v3305 = vpack.c.b16 %v2665, %v2657
    %v3306 = vpack.c.b16 %v2666, %v2658
    %v3307 = vpack.c.b16 %v2667, %v2659
    %v3308 = vpack.c.b16 %v2668, %v2660
    %v3309 = vpack.c.b16 %v2669, %v2661
    %v3310 = vpack.c.b16 %v2670, %v2662
    %v3311 = vpack.c.b16 %v2671, %v2663
    %v3312 = vpack.c.b16 %v2672, %v2664
    %v3313 = vpack.c.b16 %v2681, %v2673
    %v3314 = vpack.c.b16 %v2682, %v2674
    %v3315 = vpack.c.b16 %v2683, %v2675
    %v3316 = vpack.c.b16 %v2684, %v2676
    %v3317 = vpack.c.b16 %v2685, %v2677
    %v3318 = vpack.c.b16 %v2686, %v2678
    %v3319 = vpack.c.b16 %v2687, %v2679
    %v3320 = vpack.c.b16 %v2688, %v2680
    %v3321 = vpack.c.b16 %v2697, %v2689
    %v3322 = vpack.c.b16 %v2698, %v2690
    %v3323 = vpack.c.b16 %v2699, %v2691
    %v3324 = vpack.c.b16 %v2700, %v2692
    %v3325 = vpack.c.b16 %v2701, %v2693
    %v3326 = vpack.c.b16 %v2702, %v2694
    %v3327 = vpack.c.b16 %v2703, %v2695
    %v3328 = vpack.c.b16 %v2704, %v2696
    %v3329 = vpack.c.b16 %v2713, %v2705
    %v3330 = vpack.c.b16 %v2714, %v2706
    %v3331 = vpack.c.b16 %v2715, %v2707
    %v3332 = vpack.c.b16 %v2716, %v2708
    %v3333 = vpack.c.b16 %v2717, %v2709
    %v3334 = vpack.c.b16 %v2718, %v2710
    %v3335 = vpack.c.b16 %v2719, %v2711
    %v3336 = vpack.c.b16 %v2720, %v2712
    %v3337 = vpack.c.b16 %v2729, %v2721
    %v3338 = vpack.c.b16 %v2730, %v2722
    %v3339 = vpack.c.b16 %v2731, %v2723
    %v3340 = vpack.c.b16 %v2732, %v2724
    %v3341 = vpack.c.b16 %v2733, %v2725
    %v3342 = vpack.c.b16 %v2734, %v2726
    %v3343 = vpack.c.b16 %v2735, %v2727
    %v3344 = vpack.c.b16 %v2736, %v2728
    %v3345 = vpack.c.b16 %v2745, %v2737
    %v3346 = vpack.c.b16 %v2746, %v2738
    %v3347 = vpack.c.b16 %v2747, %v2739
    %v3348 = vpack.c.b16 %v2748, %v2740
    %v3349 = vpack.c.b16 %v2749, %v2741
    %v3350 = vpack.c.b16 %v2750, %v2742
    %v3351 = vpack.c.b16 %v2751, %v2743
    %v3352 = vpack.c.b16 %v2752, %v2744
    %v3353 = vpack.c.b16 %v2761, %v2753
    %v3354 = vpack.c.b16 %v2762, %v2754
    %v3355 = vpack.c.b16 %v2763, %v2755
    %v3356 = vpack.c.b16 %v2764, %v2756
    %v3357 = vpack.c.b16 %v2765, %v2757
    %v3358 = vpack.c.b16 %v2766, %v2758
    %v3359 = vpack.c.b16 %v2767, %v2759
    %v3360 = vpack.c.b16 %v2768, %v2760
    %v3361 = vpack.c.b16 %v2777, %v2769
    %v3362 = vpack.c.b16 %v2778, %v2770
    %v3363 = vpack.c.b16 %v2779, %v2771
    %v3364 = vpack.c.b16 %v2780, %v2772
    %v3365 = vpack.c.b16 %v2781, %v2773
    %v3366 = vpack.c.b16 %v2782, %v2774
    %v3367 = vpack.c.b16 %v2783, %v2775
    %v3368 = vpack.c.b16 %v2784, %v2776
    %v3369 = vpack.c.b16 %v2793, %v2785
    %v3370 = vpack.c.b16 %v2794, %v2786
    %v3371 = vpack.c.b16 %v2795, %v2787
    %v3372 = vpack.c.b16 %v2796, %v2788
    %v3373 = vpack.c.b16 %v2797, %v2789
    %v3374 = vpack.c.b16 %v2798, %v2790
    %v3375 = vpack.c.b16 %v2799, %v2791
    %v3376 = vpack.c.b16 %v2800, %v2792
    %v3377 = vpack.c.b16 %v2809, %v2801
    %v3378 = vpack.c.b16 %v2810, %v2802
    %v3379 = vpack.c.b16 %v2811, %v2803
    %v3380 = vpack.c.b16 %v2812, %v2804
    %v3381 = vpack.c.b16 %v2813, %v2805
    %v3382 = vpack.c.b16 %v2814, %v2806
    %v3383 = vpack.c.b16 %v2815, %v2807
    %v3384 = vpack.c.b16 %v2816, %v2808
    %v3385 = vpack.c.b16 %v2825, %v2817
    %v3386 = vpack.c.b16 %v2826, %v2818
    %v3387 = vpack.c.b16 %v2827, %v2819
    %v3388 = vpack.c.b16 %v2828, %v2820
    %v3389 = vpack.c.b16 %v2829, %v2821
    %v3390 = vpack.c.b16 %v2830, %v2822
    %v3391 = vpack.c.b16 %v2831, %v2823
    %v3392 = vpack.c.b16 %v2832, %v2824
    %v3393 = vpack.c.b16 %v2841, %v2833
    %v3394 = vpack.c.b16 %v2842, %v2834
    %v3395 = vpack.c.b16 %v2843, %v2835
    %v3396 = vpack.c.b16 %v2844, %v2836
    %v3397 = vpack.c.b16 %v2845, %v2837
    %v3398 = vpack.c.b16 %v2846, %v2838
    %v3399 = vpack.c.b16 %v2847, %v2839
    %v3400 = vpack.c.b16 %v2848, %v2840
    %v3401 = vpack.c.b16 %v2857, %v2849
    %v3402 = vpack.c.b16 %v2858, %v2850
    %v3403 = vpack.c.b16 %v2859, %v2851
    %v3404 = vpack.c.b16 %v2860, %v2852
    %v3405 = vpack.c.b16 %v2861, %v2853
    %v3406 = vpack.c.b16 %v2862, %v2854
    %v3407 = vpack.c.b16 %v2863, %v2855
    %v3408 = vpack.c.b16 %v2864, %v2856
    %v3409 = vpack.c.b16 %v2873, %v2865
    %v3410 = vpack.c.b16 %v2874, %v2866
    %v3411 = vpack.c.b16 %v2875, %v2867
    %v3412 = vpack.c.b16 %v2876, %v2868
    %v3413 = vpack.c.b16 %v2877, %v2869
    %v3414 = vpack.c.b16 %v2878, %v2870
    %v3415 = vpack.c.b16 %v2879, %v2871
    %v3416 = vpack.c.b16 %v2880, %v2872
    %v3417 = vpack.c.b16 %v2889, %v2881
    %v3418 = vpack.c.b16 %v2890, %v2882
    %v3419 = vpack.c.b16 %v2891, %v2883
    %v3420 = vpack.c.b16 %v2892, %v2884
    %v3421 = vpack.c.b16 %v2893, %v2885
    %v3422 = vpack.c.b16 %v2894, %v2886
    %v3423 = vpack.c.b16 %v2895, %v2887
    %v3424 = vpack.c.b16 %v2896, %v2888
    %v3425 = vpack.c.b16 %v2905, %v2897
    %v3426 = vpack.c.b16 %v2906, %v2898
    %v3427 = vpack.c.b16 %v2907, %v2899
    %v3428 = vpack.c.b16 %v2908, %v2900
    %v3429 = vpack.c.b16 %v2909, %v2901
    %v3430 = vpack.c.b16 %v2910, %v2902
    %v3431 = vpack.c.b16 %v2911, %v2903
    %v3432 = vpack.c.b16 %v2912, %v2904
    %v3433 = vpack.c.b16 %v2921, %v2913
    %v3434 = vpack.c.b16 %v2922, %v2914
    %v3435 = vpack.c.b16 %v2923, %v2915
    %v3436 = vpack.c.b16 %v2924, %v2916
    %v3437 = vpack.c.b16 %v2925, %v2917
    %v3438 = vpack.c.b16 %v2926, %v2918
    %v3439 = vpack.c.b16 %v2927, %v2919
    %v3440 = vpack.c.b16 %v2928, %v2920
    %3953 = vmatprep.subr.bf16.mxu0 %v2930
    %3954 = vmatpush1.bf16.msra.mxu0 %v2929
    %3955 = vmatprep.subr.bf16.mxu0 %v2938
    %3956 = vmatpush1.bf16.msra.mxu0 %v2937
    %3957 = vmatprep.subr.bf16.mxu0 %v2946
    %3958 = vmatpush1.bf16.msra.mxu0 %v2945
    %3959 = vmatprep.subr.bf16.mxu0 %v2954
    %3960 = vmatpush1.bf16.msra.mxu0 %v2953
    %3961 = vmatprep.subr.bf16.mxu0 %v2962
    %3962 = vmatpush1.bf16.msra.mxu0 %v2961
    %3963 = vmatprep.subr.bf16.mxu0 %v2970
    %3964 = vmatpush1.bf16.msra.mxu0 %v2969
    %3965 = vmatprep.subr.bf16.mxu0 %v2978
    %3966 = vmatpush1.bf16.msra.mxu0 %v2977
    %3967 = vmatprep.subr.bf16.mxu0 %v2986
    %3968 = vmatpush1.bf16.msra.mxu0 %v2985
    %3969 = vmatprep.subr.bf16.mxu0 %v2994
    %3970 = vmatpush1.bf16.msra.mxu0 %v2993
    %3971 = vmatprep.subr.bf16.mxu0 %v3002
    %3972 = vmatpush1.bf16.msra.mxu0 %v3001
    %3973 = vmatprep.subr.bf16.mxu0 %v3010
    %3974 = vmatpush1.bf16.msra.mxu0 %v3009
    %3975 = vmatprep.subr.bf16.mxu0 %v3018
    %3976 = vmatpush1.bf16.msra.mxu0 %v3017
    %3977 = vmatprep.subr.bf16.mxu0 %v3026
    %3978 = vmatpush1.bf16.msra.mxu0 %v3025
    %3979 = vmatprep.subr.bf16.mxu0 %v3034
    %3980 = vmatpush1.bf16.msra.mxu0 %v3033
    %3981 = vmatprep.subr.bf16.mxu0 %v3042
    %3982 = vmatpush1.bf16.msra.mxu0 %v3041
    %3983 = vmatprep.subr.bf16.mxu0 %v3050
    %3984 = vmatpush1.bf16.msra.mxu0 %v3049
    %3985 = vmatprep.mubr.bf16.mxu0 %v832
    %3986 = vmatmul.mubr.bf16.gmra.mrb[0].mxu0 %v831
    %v3987 = vpop.f32.mrb[0].mxu0
    %v3988 = vadd.f32 %v1356, %v3987
    %v3989 = vpop.f32.mrb[0].mxu0
    %v3990 = vadd.f32 %v1360, %v3989
    %v3991 = vpop.f32.mrb[0].mxu0
    %v3992 = vpop.f32.mrb[0].mxu0
    %3993 = vdwg.mxu0
    %3994 = vmatprep.subr.bf16.mxu0 %v3058
    %3995 = vmatpush1.bf16.msra.mxu0 %v3057
    %3996 = vmatprep.subr.bf16.mxu0 %v3066
    %3997 = vmatpush1.bf16.msra.mxu0 %v3065
    %3998 = vmatprep.subr.bf16.mxu0 %v3074
    %3999 = vmatpush1.bf16.msra.mxu0 %v3073
    %4000 = vmatprep.subr.bf16.mxu0 %v3082
    %4001 = vmatpush1.bf16.msra.mxu0 %v3081
    %4002 = vmatprep.subr.bf16.mxu0 %v3090
    %4003 = vmatpush1.bf16.msra.mxu0 %v3089
    %4004 = vmatprep.subr.bf16.mxu0 %v3098
    %4005 = vmatpush1.bf16.msra.mxu0 %v3097
    %4006 = vmatprep.subr.bf16.mxu0 %v3106
    %4007 = vmatpush1.bf16.msra.mxu0 %v3105
    %4008 = vmatprep.subr.bf16.mxu0 %v3114
    %4009 = vmatpush1.bf16.msra.mxu0 %v3113
    %4010 = vmatprep.subr.bf16.mxu0 %v3122
    %4011 = vmatpush1.bf16.msra.mxu0 %v3121
    %4012 = vmatprep.subr.bf16.mxu0 %v3130
    %4013 = vmatpush1.bf16.msra.mxu0 %v3129
    %4014 = vmatprep.subr.bf16.mxu0 %v3138
    %4015 = vmatpush1.bf16.msra.mxu0 %v3137
    %4016 = vmatprep.subr.bf16.mxu0 %v3146
    %4017 = vmatpush1.bf16.msra.mxu0 %v3145
    %4018 = vmatprep.subr.bf16.mxu0 %v3154
    %4019 = vmatpush1.bf16.msra.mxu0 %v3153
    %4020 = vmatprep.subr.bf16.mxu0 %v3162
    %4021 = vmatpush1.bf16.msra.mxu0 %v3161
    %4022 = vmatprep.subr.bf16.mxu0 %v3170
    %4023 = vmatpush1.bf16.msra.mxu0 %v3169
    %4024 = vmatprep.subr.bf16.mxu0 %v3178
    %4025 = vmatpush1.bf16.msra.mxu0 %v3177
    %4026 = vmatprep.mubr.bf16.mxu0 %v834
    %4027 = vmatmul.mubr.bf16.gmra.mrb[0].mxu0 %v833
    %v4028 = vpop.f32.mrb[0].mxu0
    %v4029 = vadd.f32 %v3988, %v4028
    %v4030 = vpop.f32.mrb[0].mxu0
    %v4031 = vadd.f32 %v3990, %v4030
    %v4032 = vpop.f32.mrb[0].mxu0
    %v4033 = vpop.f32.mrb[0].mxu0
    %4034 = vdwg.mxu0
    %4035 = vmatprep.subr.bf16.mxu0 %v3186
    %4036 = vmatpush1.bf16.msra.mxu0 %v3185
    %4037 = vmatprep.subr.bf16.mxu0 %v3194
    %4038 = vmatpush1.bf16.msra.mxu0 %v3193
    %4039 = vmatprep.subr.bf16.mxu0 %v3202
    %4040 = vmatpush1.bf16.msra.mxu0 %v3201
    %4041 = vmatprep.subr.bf16.mxu0 %v3210
    %4042 = vmatpush1.bf16.msra.mxu0 %v3209
    %4043 = vmatprep.subr.bf16.mxu0 %v3218
    %4044 = vmatpush1.bf16.msra.mxu0 %v3217
    %4045 = vmatprep.subr.bf16.mxu0 %v3226
    %4046 = vmatpush1.bf16.msra.mxu0 %v3225
    %4047 = vmatprep.subr.bf16.mxu0 %v3234
    %4048 = vmatpush1.bf16.msra.mxu0 %v3233
    %4049 = vmatprep.subr.bf16.mxu0 %v3242
    %4050 = vmatpush1.bf16.msra.mxu0 %v3241
    %4051 = vmatprep.subr.bf16.mxu0 %v3250
    %4052 = vmatpush1.bf16.msra.mxu0 %v3249
    %4053 = vmatprep.subr.bf16.mxu0 %v3258
    %4054 = vmatpush1.bf16.msra.mxu0 %v3257
    %4055 = vmatprep.subr.bf16.mxu0 %v3266
    %4056 = vmatpush1.bf16.msra.mxu0 %v3265
    %4057 = vmatprep.subr.bf16.mxu0 %v3274
    %4058 = vmatpush1.bf16.msra.mxu0 %v3273
    %4059 = vmatprep.subr.bf16.mxu0 %v3282
    %4060 = vmatpush1.bf16.msra.mxu0 %v3281
    %4061 = vmatprep.subr.bf16.mxu0 %v3290
    %4062 = vmatpush1.bf16.msra.mxu0 %v3289
    %4063 = vmatprep.subr.bf16.mxu0 %v3298
    %4064 = vmatpush1.bf16.msra.mxu0 %v3297
    %4065 = vmatprep.subr.bf16.mxu0 %v3306
    %4066 = vmatpush1.bf16.msra.mxu0 %v3305
    %4067 = vmatprep.mubr.bf16.mxu0 %v836
    %4068 = vmatmul.mubr.bf16.gmra.mrb[0].mxu0 %v835
    %v4069 = vpop.f32.mrb[0].mxu0
    %v4070 = vadd.f32 %v4029, %v4069
    %v4071 = vpop.f32.mrb[0].mxu0
    %v4072 = vadd.f32 %v4031, %v4071
    %v4073 = vpop.f32.mrb[0].mxu0
    %v4074 = vpop.f32.mrb[0].mxu0
    %4075 = vdwg.mxu0
    %4076 = vmatprep.subr.bf16.mxu0 %v3314
    %4077 = vmatpush1.bf16.msra.mxu0 %v3313
    %4078 = vmatprep.subr.bf16.mxu0 %v3322
    %4079 = vmatpush1.bf16.msra.mxu0 %v3321
    %4080 = vmatprep.subr.bf16.mxu0 %v3330
    %4081 = vmatpush1.bf16.msra.mxu0 %v3329
    %4082 = vmatprep.subr.bf16.mxu0 %v3338
    %4083 = vmatpush1.bf16.msra.mxu0 %v3337
    %4084 = vmatprep.subr.bf16.mxu0 %v3346
    %4085 = vmatpush1.bf16.msra.mxu0 %v3345
    %4086 = vmatprep.subr.bf16.mxu0 %v3354
    %4087 = vmatpush1.bf16.msra.mxu0 %v3353
    %4088 = vmatprep.subr.bf16.mxu0 %v3362
    %4089 = vmatpush1.bf16.msra.mxu0 %v3361
    %4090 = vmatprep.subr.bf16.mxu0 %v3370
    %4091 = vmatpush1.bf16.msra.mxu0 %v3369
    %4092 = vmatprep.subr.bf16.mxu0 %v3378
    %4093 = vmatpush1.bf16.msra.mxu0 %v3377
    %4094 = vmatprep.subr.bf16.mxu0 %v3386
    %4095 = vmatpush1.bf16.msra.mxu0 %v3385
    %4096 = vmatprep.subr.bf16.mxu0 %v3394
    %4097 = vmatpush1.bf16.msra.mxu0 %v3393
    %4098 = vmatprep.subr.bf16.mxu0 %v3402
    %4099 = vmatpush1.bf16.msra.mxu0 %v3401
    %4100 = vmatprep.subr.bf16.mxu0 %v3410
    %4101 = vmatpush1.bf16.msra.mxu0 %v3409
    %4102 = vmatprep.subr.bf16.mxu0 %v3418
    %4103 = vmatpush1.bf16.msra.mxu0 %v3417
    %4104 = vmatprep.subr.bf16.mxu0 %v3426
    %4105 = vmatpush1.bf16.msra.mxu0 %v3425
    %4106 = vmatprep.subr.bf16.mxu0 %v3434
    %4107 = vmatpush1.bf16.msra.mxu0 %v3433
    %4108 = vmatprep.mubr.bf16.mxu0 %v838
    %4109 = vmatmul.mubr.bf16.gmra.mrb[0].mxu0 %v837
    %v4110 = vpop.f32.mrb[0].mxu0
    %v4111 = vadd.f32 %v4070, %v4110
    %v4112 = vpop.f32.mrb[0].mxu0
    %v4113 = vadd.f32 %v4072, %v4112
    %v4114 = vpop.f32.mrb[0].mxu0
    %v4115 = vpop.f32.mrb[0].mxu0
    %4116 = vdwg.mxu0
    %4117 = vmatprep.subr.bf16.mxu0 %v2932
    %4118 = vmatpush1.bf16.msra.mxu0 %v2931
    %4119 = vmatprep.subr.bf16.mxu0 %v2940
    %4120 = vmatpush1.bf16.msra.mxu0 %v2939
    %4121 = vmatprep.subr.bf16.mxu0 %v2948
    %4122 = vmatpush1.bf16.msra.mxu0 %v2947
    %4123 = vmatprep.subr.bf16.mxu0 %v2956
    %4124 = vmatpush1.bf16.msra.mxu0 %v2955
    %4125 = vmatprep.subr.bf16.mxu0 %v2964
    %4126 = vmatpush1.bf16.msra.mxu0 %v2963
    %4127 = vmatprep.subr.bf16.mxu0 %v2972
    %4128 = vmatpush1.bf16.msra.mxu0 %v2971
    %4129 = vmatprep.subr.bf16.mxu0 %v2980
    %4130 = vmatpush1.bf16.msra.mxu0 %v2979
    %4131 = vmatprep.subr.bf16.mxu0 %v2988
    %4132 = vmatpush1.bf16.msra.mxu0 %v2987
    %4133 = vmatprep.subr.bf16.mxu0 %v2996
    %4134 = vmatpush1.bf16.msra.mxu0 %v2995
    %4135 = vmatprep.subr.bf16.mxu0 %v3004
    %4136 = vmatpush1.bf16.msra.mxu0 %v3003
    %4137 = vmatprep.subr.bf16.mxu0 %v3012
    %4138 = vmatpush1.bf16.msra.mxu0 %v3011
    %4139 = vmatprep.subr.bf16.mxu0 %v3020
    %4140 = vmatpush1.bf16.msra.mxu0 %v3019
    %4141 = vmatprep.subr.bf16.mxu0 %v3028
    %4142 = vmatpush1.bf16.msra.mxu0 %v3027
    %4143 = vmatprep.subr.bf16.mxu0 %v3036
    %4144 = vmatpush1.bf16.msra.mxu0 %v3035
    %4145 = vmatprep.subr.bf16.mxu0 %v3044
    %4146 = vmatpush1.bf16.msra.mxu0 %v3043
    %4147 = vmatprep.subr.bf16.mxu0 %v3052
    %4148 = vmatpush1.bf16.msra.mxu0 %v3051
    %4149 = vmatprep.mubr.bf16.mxu0 %v832
    %4150 = vmatmul.mubr.bf16.gmra.mrb[0].mxu0 %v831
    %v4151 = vpop.f32.mrb[0].mxu0
    %v4152 = vadd.f32 %v1364, %v4151
    %v4153 = vpop.f32.mrb[0].mxu0
    %v4154 = vadd.f32 %v1368, %v4153
    %v4155 = vpop.f32.mrb[0].mxu0
    %v4156 = vpop.f32.mrb[0].mxu0
    %4157 = vdwg.mxu0
    %4158 = vmatprep.subr.bf16.mxu0 %v3060
    %4159 = vmatpush1.bf16.msra.mxu0 %v3059
    %4160 = vmatprep.subr.bf16.mxu0 %v3068
    %4161 = vmatpush1.bf16.msra.mxu0 %v3067
    %4162 = vmatprep.subr.bf16.mxu0 %v3076
    %4163 = vmatpush1.bf16.msra.mxu0 %v3075
    %4164 = vmatprep.subr.bf16.mxu0 %v3084
    %4165 = vmatpush1.bf16.msra.mxu0 %v3083
    %4166 = vmatprep.subr.bf16.mxu0 %v3092
    %4167 = vmatpush1.bf16.msra.mxu0 %v3091
    %4168 = vmatprep.subr.bf16.mxu0 %v3100
    %4169 = vmatpush1.bf16.msra.mxu0 %v3099
    %4170 = vmatprep.subr.bf16.mxu0 %v3108
    %4171 = vmatpush1.bf16.msra.mxu0 %v3107
    %4172 = vmatprep.subr.bf16.mxu0 %v3116
    %4173 = vmatpush1.bf16.msra.mxu0 %v3115
    %4174 = vmatprep.subr.bf16.mxu0 %v3124
    %4175 = vmatpush1.bf16.msra.mxu0 %v3123
    %4176 = vmatprep.subr.bf16.mxu0 %v3132
    %4177 = vmatpush1.bf16.msra.mxu0 %v3131
    %4178 = vmatprep.subr.bf16.mxu0 %v3140
    %4179 = vmatpush1.bf16.msra.mxu0 %v3139
    %4180 = vmatprep.subr.bf16.mxu0 %v3148
    %4181 = vmatpush1.bf16.msra.mxu0 %v3147
    %4182 = vmatprep.subr.bf16.mxu0 %v3156
    %4183 = vmatpush1.bf16.msra.mxu0 %v3155
    %4184 = vmatprep.subr.bf16.mxu0 %v3164
    %4185 = vmatpush1.bf16.msra.mxu0 %v3163
    %4186 = vmatprep.subr.bf16.mxu0 %v3172
    %4187 = vmatpush1.bf16.msra.mxu0 %v3171
    %4188 = vmatprep.subr.bf16.mxu0 %v3180
    %4189 = vmatpush1.bf16.msra.mxu0 %v3179
    %4190 = vmatprep.mubr.bf16.mxu0 %v834
    %4191 = vmatmul.mubr.bf16.gmra.mrb[0].mxu0 %v833
    %v4192 = vpop.f32.mrb[0].mxu0
    %v4193 = vadd.f32 %v4152, %v4192
    %v4194 = vpop.f32.mrb[0].mxu0
    %v4195 = vadd.f32 %v4154, %v4194
    %v4196 = vpop.f32.mrb[0].mxu0
    %v4197 = vpop.f32.mrb[0].mxu0
    %4198 = vdwg.mxu0
    %4199 = vmatprep.subr.bf16.mxu0 %v3188
    %4200 = vmatpush1.bf16.msra.mxu0 %v3187
    %4201 = vmatprep.subr.bf16.mxu0 %v3196
    %4202 = vmatpush1.bf16.msra.mxu0 %v3195
    %4203 = vmatprep.subr.bf16.mxu0 %v3204
    %4204 = vmatpush1.bf16.msra.mxu0 %v3203
    %4205 = vmatprep.subr.bf16.mxu0 %v3212
    %4206 = vmatpush1.bf16.msra.mxu0 %v3211
    %4207 = vmatprep.subr.bf16.mxu0 %v3220
    %4208 = vmatpush1.bf16.msra.mxu0 %v3219
    %4209 = vmatprep.subr.bf16.mxu0 %v3228
    %4210 = vmatpush1.bf16.msra.mxu0 %v3227
    %4211 = vmatprep.subr.bf16.mxu0 %v3236
    %4212 = vmatpush1.bf16.msra.mxu0 %v3235
    %4213 = vmatprep.subr.bf16.mxu0 %v3244
    %4214 = vmatpush1.bf16.msra.mxu0 %v3243
    %4215 = vmatprep.subr.bf16.mxu0 %v3252
    %4216 = vmatpush1.bf16.msra.mxu0 %v3251
    %4217 = vmatprep.subr.bf16.mxu0 %v3260
    %4218 = vmatpush1.bf16.msra.mxu0 %v3259
    %4219 = vmatprep.subr.bf16.mxu0 %v3268
    %4220 = vmatpush1.bf16.msra.mxu0 %v3267
    %4221 = vmatprep.subr.bf16.mxu0 %v3276
    %4222 = vmatpush1.bf16.msra.mxu0 %v3275
    %4223 = vmatprep.subr.bf16.mxu0 %v3284
    %4224 = vmatpush1.bf16.msra.mxu0 %v3283
    %4225 = vmatprep.subr.bf16.mxu0 %v3292
    %4226 = vmatpush1.bf16.msra.mxu0 %v3291
    %4227 = vmatprep.subr.bf16.mxu0 %v3300
    %4228 = vmatpush1.bf16.msra.mxu0 %v3299
    %4229 = vmatprep.subr.bf16.mxu0 %v3308
    %4230 = vmatpush1.bf16.msra.mxu0 %v3307
    %4231 = vmatprep.mubr.bf16.mxu0 %v836
    %4232 = vmatmul.mubr.bf16.gmra.mrb[0].mxu0 %v835
    %v4233 = vpop.f32.mrb[0].mxu0
    %v4234 = vadd.f32 %v4193, %v4233
    %v4235 = vpop.f32.mrb[0].mxu0
    %v4236 = vadd.f32 %v4195, %v4235
    %v4237 = vpop.f32.mrb[0].mxu0
    %v4238 = vpop.f32.mrb[0].mxu0
    %4239 = vdwg.mxu0
    %4240 = vmatprep.subr.bf16.mxu0 %v3316
    %4241 = vmatpush1.bf16.msra.mxu0 %v3315
    %4242 = vmatprep.subr.bf16.mxu0 %v3324
    %4243 = vmatpush1.bf16.msra.mxu0 %v3323
    %4244 = vmatprep.subr.bf16.mxu0 %v3332
    %4245 = vmatpush1.bf16.msra.mxu0 %v3331
    %4246 = vmatprep.subr.bf16.mxu0 %v3340
    %4247 = vmatpush1.bf16.msra.mxu0 %v3339
    %4248 = vmatprep.subr.bf16.mxu0 %v3348
    %4249 = vmatpush1.bf16.msra.mxu0 %v3347
    %4250 = vmatprep.subr.bf16.mxu0 %v3356
    %4251 = vmatpush1.bf16.msra.mxu0 %v3355
    %4252 = vmatprep.subr.bf16.mxu0 %v3364
    %4253 = vmatpush1.bf16.msra.mxu0 %v3363
    %4254 = vmatprep.subr.bf16.mxu0 %v3372
    %4255 = vmatpush1.bf16.msra.mxu0 %v3371
    %4256 = vmatprep.subr.bf16.mxu0 %v3380
    %4257 = vmatpush1.bf16.msra.mxu0 %v3379
    %4258 = vmatprep.subr.bf16.mxu0 %v3388
    %4259 = vmatpush1.bf16.msra.mxu0 %v3387
    %4260 = vmatprep.subr.bf16.mxu0 %v3396
    %4261 = vmatpush1.bf16.msra.mxu0 %v3395
    %4262 = vmatprep.subr.bf16.mxu0 %v3404
    %4263 = vmatpush1.bf16.msra.mxu0 %v3403
    %4264 = vmatprep.subr.bf16.mxu0 %v3412
    %4265 = vmatpush1.bf16.msra.mxu0 %v3411
    %4266 = vmatprep.subr.bf16.mxu0 %v3420
    %4267 = vmatpush1.bf16.msra.mxu0 %v3419
    %4268 = vmatprep.subr.bf16.mxu0 %v3428
    %4269 = vmatpush1.bf16.msra.mxu0 %v3427
    %4270 = vmatprep.subr.bf16.mxu0 %v3436
    %4271 = vmatpush1.bf16.msra.mxu0 %v3435
    %4272 = vmatprep.mubr.bf16.mxu0 %v838
    %4273 = vmatmul.mubr.bf16.gmra.mrb[0].mxu0 %v837
    %v4274 = vpop.f32.mrb[0].mxu0
    %v4275 = vadd.f32 %v4234, %v4274
    %v4276 = vpop.f32.mrb[0].mxu0
    %v4277 = vadd.f32 %v4236, %v4276
    %v4278 = vpop.f32.mrb[0].mxu0
    %v4279 = vpop.f32.mrb[0].mxu0
    %4280 = vdwg.mxu0
    %4281 = vmatprep.subr.bf16.mxu0 %v2934
    %4282 = vmatpush1.bf16.msra.mxu0 %v2933
    %4283 = vmatprep.subr.bf16.mxu0 %v2942
    %4284 = vmatpush1.bf16.msra.mxu0 %v2941
    %4285 = vmatprep.subr.bf16.mxu0 %v2950
    %4286 = vmatpush1.bf16.msra.mxu0 %v2949
    %4287 = vmatprep.subr.bf16.mxu0 %v2958
    %4288 = vmatpush1.bf16.msra.mxu0 %v2957
    %4289 = vmatprep.subr.bf16.mxu0 %v2966
    %4290 = vmatpush1.bf16.msra.mxu0 %v2965
    %4291 = vmatprep.subr.bf16.mxu0 %v2974
    %4292 = vmatpush1.bf16.msra.mxu0 %v2973
    %4293 = vmatprep.subr.bf16.mxu0 %v2982
    %4294 = vmatpush1.bf16.msra.mxu0 %v2981
    %4295 = vmatprep.subr.bf16.mxu0 %v2990
    %4296 = vmatpush1.bf16.msra.mxu0 %v2989
    %4297 = vmatprep.subr.bf16.mxu0 %v2998
    %4298 = vmatpush1.bf16.msra.mxu0 %v2997
    %4299 = vmatprep.subr.bf16.mxu0 %v3006
    %4300 = vmatpush1.bf16.msra.mxu0 %v3005
    %4301 = vmatprep.subr.bf16.mxu0 %v3014
    %4302 = vmatpush1.bf16.msra.mxu0 %v3013
    %4303 = vmatprep.subr.bf16.mxu0 %v3022
    %4304 = vmatpush1.bf16.msra.mxu0 %v3021
    %4305 = vmatprep.subr.bf16.mxu0 %v3030
    %4306 = vmatpush1.bf16.msra.mxu0 %v3029
    %4307 = vmatprep.subr.bf16.mxu0 %v3038
    %4308 = vmatpush1.bf16.msra.mxu0 %v3037
    %4309 = vmatprep.subr.bf16.mxu0 %v3046
    %4310 = vmatpush1.bf16.msra.mxu0 %v3045
    %4311 = vmatprep.subr.bf16.mxu0 %v3054
    %4312 = vmatpush1.bf16.msra.mxu0 %v3053
    %4313 = vmatprep.mubr.bf16.mxu0 %v832
    %4314 = vmatmul.mubr.bf16.gmra.mrb[0].mxu0 %v831
    %v4315 = vpop.f32.mrb[0].mxu0
    %v4316 = vadd.f32 %v1372, %v4315
    %v4317 = vpop.f32.mrb[0].mxu0
    %v4318 = vadd.f32 %v1376, %v4317
    %v4319 = vpop.f32.mrb[0].mxu0
    %v4320 = vpop.f32.mrb[0].mxu0
    %4321 = vdwg.mxu0
    %4322 = vmatprep.subr.bf16.mxu0 %v3062
    %4323 = vmatpush1.bf16.msra.mxu0 %v3061
    %4324 = vmatprep.subr.bf16.mxu0 %v3070
    %4325 = vmatpush1.bf16.msra.mxu0 %v3069
    %4326 = vmatprep.subr.bf16.mxu0 %v3078
    %4327 = vmatpush1.bf16.msra.mxu0 %v3077
    %4328 = vmatprep.subr.bf16.mxu0 %v3086
    %4329 = vmatpush1.bf16.msra.mxu0 %v3085
    %4330 = vmatprep.subr.bf16.mxu0 %v3094
    %4331 = vmatpush1.bf16.msra.mxu0 %v3093
    %4332 = vmatprep.subr.bf16.mxu0 %v3102
    %4333 = vmatpush1.bf16.msra.mxu0 %v3101
    %4334 = vmatprep.subr.bf16.mxu0 %v3110
    %4335 = vmatpush1.bf16.msra.mxu0 %v3109
    %4336 = vmatprep.subr.bf16.mxu0 %v3118
    %4337 = vmatpush1.bf16.msra.mxu0 %v3117
    %4338 = vmatprep.subr.bf16.mxu0 %v3126
    %4339 = vmatpush1.bf16.msra.mxu0 %v3125
    %4340 = vmatprep.subr.bf16.mxu0 %v3134
    %4341 = vmatpush1.bf16.msra.mxu0 %v3133
    %4342 = vmatprep.subr.bf16.mxu0 %v3142
    %4343 = vmatpush1.bf16.msra.mxu0 %v3141
    %4344 = vmatprep.subr.bf16.mxu0 %v3150
    %4345 = vmatpush1.bf16.msra.mxu0 %v3149
    %4346 = vmatprep.subr.bf16.mxu0 %v3158
    %4347 = vmatpush1.bf16.msra.mxu0 %v3157
    %4348 = vmatprep.subr.bf16.mxu0 %v3166
    %4349 = vmatpush1.bf16.msra.mxu0 %v3165
    %4350 = vmatprep.subr.bf16.mxu0 %v3174
    %4351 = vmatpush1.bf16.msra.mxu0 %v3173
    %4352 = vmatprep.subr.bf16.mxu0 %v3182
    %4353 = vmatpush1.bf16.msra.mxu0 %v3181
    %4354 = vmatprep.mubr.bf16.mxu0 %v834
    %4355 = vmatmul.mubr.bf16.gmra.mrb[0].mxu0 %v833
    %v4356 = vpop.f32.mrb[0].mxu0
    %v4357 = vadd.f32 %v4316, %v4356
    %v4358 = vpop.f32.mrb[0].mxu0
    %v4359 = vadd.f32 %v4318, %v4358
    %v4360 = vpop.f32.mrb[0].mxu0
    %v4361 = vpop.f32.mrb[0].mxu0
    %4362 = vdwg.mxu0
    %4363 = vmatprep.subr.bf16.mxu0 %v3190
    %4364 = vmatpush1.bf16.msra.mxu0 %v3189
    %4365 = vmatprep.subr.bf16.mxu0 %v3198
    %4366 = vmatpush1.bf16.msra.mxu0 %v3197
    %4367 = vmatprep.subr.bf16.mxu0 %v3206
    %4368 = vmatpush1.bf16.msra.mxu0 %v3205
    %4369 = vmatprep.subr.bf16.mxu0 %v3214
    %4370 = vmatpush1.bf16.msra.mxu0 %v3213
    %4371 = vmatprep.subr.bf16.mxu0 %v3222
    %4372 = vmatpush1.bf16.msra.mxu0 %v3221
    %4373 = vmatprep.subr.bf16.mxu0 %v3230
    %4374 = vmatpush1.bf16.msra.mxu0 %v3229
    %4375 = vmatprep.subr.bf16.mxu0 %v3238
    %4376 = vmatpush1.bf16.msra.mxu0 %v3237
    %4377 = vmatprep.subr.bf16.mxu0 %v3246
    %4378 = vmatpush1.bf16.msra.mxu0 %v3245
    %4379 = vmatprep.subr.bf16.mxu0 %v3254
    %4380 = vmatpush1.bf16.msra.mxu0 %v3253
    %4381 = vmatprep.subr.bf16.mxu0 %v3262
    %4382 = vmatpush1.bf16.msra.mxu0 %v3261
    %4383 = vmatprep.subr.bf16.mxu0 %v3270
    %4384 = vmatpush1.bf16.msra.mxu0 %v3269
    %4385 = vmatprep.subr.bf16.mxu0 %v3278
    %4386 = vmatpush1.bf16.msra.mxu0 %v3277
    %4387 = vmatprep.subr.bf16.mxu0 %v3286
    %4388 = vmatpush1.bf16.msra.mxu0 %v3285
    %4389 = vmatprep.subr.bf16.mxu0 %v3294
    %4390 = vmatpush1.bf16.msra.mxu0 %v3293
    %4391 = vmatprep.subr.bf16.mxu0 %v3302
    %4392 = vmatpush1.bf16.msra.mxu0 %v3301
    %4393 = vmatprep.subr.bf16.mxu0 %v3310
    %4394 = vmatpush1.bf16.msra.mxu0 %v3309
    %4395 = vmatprep.mubr.bf16.mxu0 %v836
    %4396 = vmatmul.mubr.bf16.gmra.mrb[0].mxu0 %v835
    %v4397 = vpop.f32.mrb[0].mxu0
    %v4398 = vadd.f32 %v4357, %v4397
    %v4399 = vpop.f32.mrb[0].mxu0
    %v4400 = vadd.f32 %v4359, %v4399
    %v4401 = vpop.f32.mrb[0].mxu0
    %v4402 = vpop.f32.mrb[0].mxu0
    %4403 = vdwg.mxu0
    %4404 = vmatprep.subr.bf16.mxu0 %v3318
    %4405 = vmatpush1.bf16.msra.mxu0 %v3317
    %4406 = vmatprep.subr.bf16.mxu0 %v3326
    %4407 = vmatpush1.bf16.msra.mxu0 %v3325
    %4408 = vmatprep.subr.bf16.mxu0 %v3334
    %4409 = vmatpush1.bf16.msra.mxu0 %v3333
    %4410 = vmatprep.subr.bf16.mxu0 %v3342
    %4411 = vmatpush1.bf16.msra.mxu0 %v3341
    %4412 = vmatprep.subr.bf16.mxu0 %v3350
    %4413 = vmatpush1.bf16.msra.mxu0 %v3349
    %4414 = vmatprep.subr.bf16.mxu0 %v3358
    %4415 = vmatpush1.bf16.msra.mxu0 %v3357
    %4416 = vmatprep.subr.bf16.mxu0 %v3366
    %4417 = vmatpush1.bf16.msra.mxu0 %v3365
    %4418 = vmatprep.subr.bf16.mxu0 %v3374
    %4419 = vmatpush1.bf16.msra.mxu0 %v3373
    %4420 = vmatprep.subr.bf16.mxu0 %v3382
    %4421 = vmatpush1.bf16.msra.mxu0 %v3381
    %4422 = vmatprep.subr.bf16.mxu0 %v3390
    %4423 = vmatpush1.bf16.msra.mxu0 %v3389
    %4424 = vmatprep.subr.bf16.mxu0 %v3398
    %4425 = vmatpush1.bf16.msra.mxu0 %v3397
    %4426 = vmatprep.subr.bf16.mxu0 %v3406
    %4427 = vmatpush1.bf16.msra.mxu0 %v3405
    %4428 = vmatprep.subr.bf16.mxu0 %v3414
    %4429 = vmatpush1.bf16.msra.mxu0 %v3413
    %4430 = vmatprep.subr.bf16.mxu0 %v3422
    %4431 = vmatpush1.bf16.msra.mxu0 %v3421
    %4432 = vmatprep.subr.bf16.mxu0 %v3430
    %4433 = vmatpush1.bf16.msra.mxu0 %v3429
    %4434 = vmatprep.subr.bf16.mxu0 %v3438
    %4435 = vmatpush1.bf16.msra.mxu0 %v3437
    %4436 = vmatprep.mubr.bf16.mxu0 %v838
    %4437 = vmatmul.mubr.bf16.gmra.mrb[0].mxu0 %v837
    %v4438 = vpop.f32.mrb[0].mxu0
    %v4439 = vadd.f32 %v4398, %v4438
    %v4440 = vpop.f32.mrb[0].mxu0
    %v4441 = vadd.f32 %v4400, %v4440
    %v4442 = vpop.f32.mrb[0].mxu0
    %v4443 = vpop.f32.mrb[0].mxu0
    %4444 = vdwg.mxu0
    %4445 = vmatprep.subr.bf16.mxu0 %v2936
    %4446 = vmatpush1.bf16.msra.mxu0 %v2935
    %4447 = vmatprep.subr.bf16.mxu0 %v2944
    %4448 = vmatpush1.bf16.msra.mxu0 %v2943
    %4449 = vmatprep.subr.bf16.mxu0 %v2952
    %4450 = vmatpush1.bf16.msra.mxu0 %v2951
    %4451 = vmatprep.subr.bf16.mxu0 %v2960
    %4452 = vmatpush1.bf16.msra.mxu0 %v2959
    %4453 = vmatprep.subr.bf16.mxu0 %v2968
    %4454 = vmatpush1.bf16.msra.mxu0 %v2967
    %4455 = vmatprep.subr.bf16.mxu0 %v2976
    %4456 = vmatpush1.bf16.msra.mxu0 %v2975
    %4457 = vmatprep.subr.bf16.mxu0 %v2984
    %4458 = vmatpush1.bf16.msra.mxu0 %v2983
    %4459 = vmatprep.subr.bf16.mxu0 %v2992
    %4460 = vmatpush1.bf16.msra.mxu0 %v2991
    %4461 = vmatprep.subr.bf16.mxu0 %v3000
    %4462 = vmatpush1.bf16.msra.mxu0 %v2999
    %4463 = vmatprep.subr.bf16.mxu0 %v3008
    %4464 = vmatpush1.bf16.msra.mxu0 %v3007
    %4465 = vmatprep.subr.bf16.mxu0 %v3016
    %4466 = vmatpush1.bf16.msra.mxu0 %v3015
    %4467 = vmatprep.subr.bf16.mxu0 %v3024
    %4468 = vmatpush1.bf16.msra.mxu0 %v3023
    %4469 = vmatprep.subr.bf16.mxu0 %v3032
    %4470 = vmatpush1.bf16.msra.mxu0 %v3031
    %4471 = vmatprep.subr.bf16.mxu0 %v3040
    %4472 = vmatpush1.bf16.msra.mxu0 %v3039
    %4473 = vmatprep.subr.bf16.mxu0 %v3048
    %4474 = vmatpush1.bf16.msra.mxu0 %v3047
    %4475 = vmatprep.subr.bf16.mxu0 %v3056
    %4476 = vmatpush1.bf16.msra.mxu0 %v3055
    %4477 = vmatprep.mubr.bf16.mxu0 %v832
    %4478 = vmatmul.mubr.bf16.gmra.mrb[0].mxu0 %v831
    %v4479 = vpop.f32.mrb[0].mxu0
    %v4480 = vadd.f32 %v1380, %v4479
    %v4481 = vpop.f32.mrb[0].mxu0
    %v4482 = vadd.f32 %v1384, %v4481
    %v4483 = vpop.f32.mrb[0].mxu0
    %v4484 = vpop.f32.mrb[0].mxu0
    %4485 = vdwg.mxu0
    %4486 = vmatprep.subr.bf16.mxu0 %v3064
    %4487 = vmatpush1.bf16.msra.mxu0 %v3063
    %4488 = vmatprep.subr.bf16.mxu0 %v3072
    %4489 = vmatpush1.bf16.msra.mxu0 %v3071
    %4490 = vmatprep.subr.bf16.mxu0 %v3080
    %4491 = vmatpush1.bf16.msra.mxu0 %v3079
    %4492 = vmatprep.subr.bf16.mxu0 %v3088
    %4493 = vmatpush1.bf16.msra.mxu0 %v3087
    %4494 = vmatprep.subr.bf16.mxu0 %v3096
    %4495 = vmatpush1.bf16.msra.mxu0 %v3095
    %4496 = vmatprep.subr.bf16.mxu0 %v3104
    %4497 = vmatpush1.bf16.msra.mxu0 %v3103
    %4498 = vmatprep.subr.bf16.mxu0 %v3112
    %4499 = vmatpush1.bf16.msra.mxu0 %v3111
    %4500 = vmatprep.subr.bf16.mxu0 %v3120
    %4501 = vmatpush1.bf16.msra.mxu0 %v3119
    %4502 = vmatprep.subr.bf16.mxu0 %v3128
    %4503 = vmatpush1.bf16.msra.mxu0 %v3127
    %4504 = vmatprep.subr.bf16.mxu0 %v3136
    %4505 = vmatpush1.bf16.msra.mxu0 %v3135
    %4506 = vmatprep.subr.bf16.mxu0 %v3144
    %4507 = vmatpush1.bf16.msra.mxu0 %v3143
    %4508 = vmatprep.subr.bf16.mxu0 %v3152
    %4509 = vmatpush1.bf16.msra.mxu0 %v3151
    %4510 = vmatprep.subr.bf16.mxu0 %v3160
    %4511 = vmatpush1.bf16.msra.mxu0 %v3159
    %4512 = vmatprep.subr.bf16.mxu0 %v3168
    %4513 = vmatpush1.bf16.msra.mxu0 %v3167
    %4514 = vmatprep.subr.bf16.mxu0 %v3176
    %4515 = vmatpush1.bf16.msra.mxu0 %v3175
    %4516 = vmatprep.subr.bf16.mxu0 %v3184
    %4517 = vmatpush1.bf16.msra.mxu0 %v3183
    %4518 = vmatprep.mubr.bf16.mxu0 %v834
    %4519 = vmatmul.mubr.bf16.gmra.mrb[0].mxu0 %v833
    %v4520 = vpop.f32.mrb[0].mxu0
    %v4521 = vadd.f32 %v4480, %v4520
    %v4522 = vpop.f32.mrb[0].mxu0
    %v4523 = vadd.f32 %v4482, %v4522
    %v4524 = vpop.f32.mrb[0].mxu0
    %v4525 = vpop.f32.mrb[0].mxu0
    %4526 = vdwg.mxu0
    %4527 = vmatprep.subr.bf16.mxu0 %v3192
    %4528 = vmatpush1.bf16.msra.mxu0 %v3191
    %4529 = vmatprep.subr.bf16.mxu0 %v3200
    %4530 = vmatpush1.bf16.msra.mxu0 %v3199
    %4531 = vmatprep.subr.bf16.mxu0 %v3208
    %4532 = vmatpush1.bf16.msra.mxu0 %v3207
    %4533 = vmatprep.subr.bf16.mxu0 %v3216
    %4534 = vmatpush1.bf16.msra.mxu0 %v3215
    %4535 = vmatprep.subr.bf16.mxu0 %v3224
    %4536 = vmatpush1.bf16.msra.mxu0 %v3223
    %4537 = vmatprep.subr.bf16.mxu0 %v3232
    %4538 = vmatpush1.bf16.msra.mxu0 %v3231
    %4539 = vmatprep.subr.bf16.mxu0 %v3240
    %4540 = vmatpush1.bf16.msra.mxu0 %v3239
    %4541 = vmatprep.subr.bf16.mxu0 %v3248
    %4542 = vmatpush1.bf16.msra.mxu0 %v3247
    %4543 = vmatprep.subr.bf16.mxu0 %v3256
    %4544 = vmatpush1.bf16.msra.mxu0 %v3255
    %4545 = vmatprep.subr.bf16.mxu0 %v3264
    %4546 = vmatpush1.bf16.msra.mxu0 %v3263
    %4547 = vmatprep.subr.bf16.mxu0 %v3272
    %4548 = vmatpush1.bf16.msra.mxu0 %v3271
    %4549 = vmatprep.subr.bf16.mxu0 %v3280
    %4550 = vmatpush1.bf16.msra.mxu0 %v3279
    %4551 = vmatprep.subr.bf16.mxu0 %v3288
    %4552 = vmatpush1.bf16.msra.mxu0 %v3287
    %4553 = vmatprep.subr.bf16.mxu0 %v3296
    %4554 = vmatpush1.bf16.msra.mxu0 %v3295
    %4555 = vmatprep.subr.bf16.mxu0 %v3304
    %4556 = vmatpush1.bf16.msra.mxu0 %v3303
    %4557 = vmatprep.subr.bf16.mxu0 %v3312
    %4558 = vmatpush1.bf16.msra.mxu0 %v3311
    %4559 = vmatprep.mubr.bf16.mxu0 %v836
    %4560 = vmatmul.mubr.bf16.gmra.mrb[0].mxu0 %v835
    %v4561 = vpop.f32.mrb[0].mxu0
    %v4562 = vadd.f32 %v4521, %v4561
    %v4563 = vpop.f32.mrb[0].mxu0
    %v4564 = vadd.f32 %v4523, %v4563
    %v4565 = vpop.f32.mrb[0].mxu0
    %v4566 = vpop.f32.mrb[0].mxu0
    %4567 = vdwg.mxu0
    %4568 = vmatprep.subr.bf16.mxu0 %v3320
    %4569 = vmatpush1.bf16.msra.mxu0 %v3319
    %4570 = vmatprep.subr.bf16.mxu0 %v3328
    %4571 = vmatpush1.bf16.msra.mxu0 %v3327
    %4572 = vmatprep.subr.bf16.mxu0 %v3336
    %4573 = vmatpush1.bf16.msra.mxu0 %v3335
    %4574 = vmatprep.subr.bf16.mxu0 %v3344
    %4575 = vmatpush1.bf16.msra.mxu0 %v3343
    %4576 = vmatprep.subr.bf16.mxu0 %v3352
    %4577 = vmatpush1.bf16.msra.mxu0 %v3351
    %4578 = vmatprep.subr.bf16.mxu0 %v3360
    %4579 = vmatpush1.bf16.msra.mxu0 %v3359
    %4580 = vmatprep.subr.bf16.mxu0 %v3368
    %4581 = vmatpush1.bf16.msra.mxu0 %v3367
    %4582 = vmatprep.subr.bf16.mxu0 %v3376
    %4583 = vmatpush1.bf16.msra.mxu0 %v3375
    %4584 = vmatprep.subr.bf16.mxu0 %v3384
    %4585 = vmatpush1.bf16.msra.mxu0 %v3383
    %4586 = vmatprep.subr.bf16.mxu0 %v3392
    %4587 = vmatpush1.bf16.msra.mxu0 %v3391
    %4588 = vmatprep.subr.bf16.mxu0 %v3400
    %4589 = vmatpush1.bf16.msra.mxu0 %v3399
    %4590 = vmatprep.subr.bf16.mxu0 %v3408
    %4591 = vmatpush1.bf16.msra.mxu0 %v3407
    %4592 = vmatprep.subr.bf16.mxu0 %v3416
    %4593 = vmatpush1.bf16.msra.mxu0 %v3415
    %4594 = vmatprep.subr.bf16.mxu0 %v3424
    %4595 = vmatpush1.bf16.msra.mxu0 %v3423
    %4596 = vmatprep.subr.bf16.mxu0 %v3432
    %4597 = vmatpush1.bf16.msra.mxu0 %v3431
    %4598 = vmatprep.subr.bf16.mxu0 %v3440
    %4599 = vmatpush1.bf16.msra.mxu0 %v3439
    %4600 = vmatprep.mubr.bf16.mxu0 %v838
    %4601 = vmatmul.mubr.bf16.gmra.mrb[0].mxu0 %v837
    %v4602 = vpop.f32.mrb[0].mxu0
    %v4603 = vadd.f32 %v4562, %v4602
    %v4604 = vpop.f32.mrb[0].mxu0
    %v4605 = vadd.f32 %v4564, %v4604
    %v4606 = vpop.f32.mrb[0].mxu0
    %v4607 = vpop.f32.mrb[0].mxu0
    %4608 = vdwg.mxu0
    %v4609 = vrot.slane %v4111, 4
    %v4610 = vadd.f32 %v4111, %v4609
    %v4611 = vrot.slane %v4610, 2
    %v4612 = vadd.f32 %v4610, %v4611
    %v4613 = vrot.slane %v4612, 1
    %v4614 = vadd.f32 %v4612, %v4613
    %v4615 = vrot.slane %v4113, 4
    %v4616 = vadd.f32 %v4113, %v4615
    %v4617 = vrot.slane %v4616, 2
    %v4618 = vadd.f32 %v4616, %v4617
    %v4619 = vrot.slane %v4618, 1
    %v4620 = vadd.f32 %v4618, %v4619
    %v4621 = vrot.slane %v4275, 4
    %v4622 = vadd.f32 %v4275, %v4621
    %v4623 = vrot.slane %v4622, 2
    %v4624 = vadd.f32 %v4622, %v4623
    %v4625 = vrot.slane %v4624, 1
    %v4626 = vadd.f32 %v4624, %v4625
    %v4627 = vrot.slane %v4277, 4
    %v4628 = vadd.f32 %v4277, %v4627
    %v4629 = vrot.slane %v4628, 2
    %v4630 = vadd.f32 %v4628, %v4629
    %v4631 = vrot.slane %v4630, 1
    %v4632 = vadd.f32 %v4630, %v4631
    %v4633 = vrot.slane %v4439, 4
    %v4634 = vadd.f32 %v4439, %v4633
    %v4635 = vrot.slane %v4634, 2
    %v4636 = vadd.f32 %v4634, %v4635
    %v4637 = vrot.slane %v4636, 1
    %v4638 = vadd.f32 %v4636, %v4637
    %v4639 = vrot.slane %v4441, 4
    %v4640 = vadd.f32 %v4441, %v4639
    %v4641 = vrot.slane %v4640, 2
    %v4642 = vadd.f32 %v4640, %v4641
    %v4643 = vrot.slane %v4642, 1
    %v4644 = vadd.f32 %v4642, %v4643
    %v4645 = vrot.slane %v4603, 4
    %v4646 = vadd.f32 %v4603, %v4645
    %v4647 = vrot.slane %v4646, 2
    %v4648 = vadd.f32 %v4646, %v4647
    %v4649 = vrot.slane %v4648, 1
    %v4650 = vadd.f32 %v4648, %v4649
    %v4651 = vrot.slane %v4605, 4
    %v4652 = vadd.f32 %v4605, %v4651
    %v4653 = vrot.slane %v4652, 2
    %v4654 = vadd.f32 %v4652, %v4653
    %v4655 = vrot.slane %v4654, 1
    %v4656 = vadd.f32 %v4654, %v4655
    %v4657 = vrcp.pop 8.0
    %v4658 = vmul.f32 %v4614, %v4657
    %v4659 = vmul.f32 %v4620, %v4657
    %v4660 = vmul.f32 %v4626, %v4657
    %v4661 = vmul.f32 %v4632, %v4657
    %v4662 = vmul.f32 %v4638, %v4657
    %v4663 = vmul.f32 %v4644, %v4657
    %v4664 = vmul.f32 %v4650, %v4657
    %v4665 = vmul.f32 %v4656, %v4657
    %v4666 = vsub.f32 %v4111, %v4658
    %v4667 = vsub.f32 %v4113, %v4659
    %v4668 = vsub.f32 %v4275, %v4660
    %v4669 = vsub.f32 %v4277, %v4661
    %v4670 = vsub.f32 %v4439, %v4662
    %v4671 = vsub.f32 %v4441, %v4663
    %v4672 = vsub.f32 %v4603, %v4664
    %v4673 = vsub.f32 %v4605, %v4665
    %v4674 = vmul.f32 %v4666, %v4666
    %v4675 = vmul.f32 %v4667, %v4667
    %v4676 = vmul.f32 %v4668, %v4668
    %v4677 = vmul.f32 %v4669, %v4669
    %v4678 = vmul.f32 %v4670, %v4670
    %v4679 = vmul.f32 %v4671, %v4671
    %v4680 = vmul.f32 %v4672, %v4672
    %v4681 = vmul.f32 %v4673, %v4673
    %v4682 = vrot.slane %v4674, 4
    %v4683 = vadd.f32 %v4674, %v4682
    %v4684 = vrot.slane %v4683, 2
    %v4685 = vadd.f32 %v4683, %v4684
    %v4686 = vrot.slane %v4685, 1
    %v4687 = vadd.f32 %v4685, %v4686
    %v4688 = vrot.slane %v4675, 4
    %v4689 = vadd.f32 %v4675, %v4688
    %v4690 = vrot.slane %v4689, 2
    %v4691 = vadd.f32 %v4689, %v4690
    %v4692 = vrot.slane %v4691, 1
    %v4693 = vadd.f32 %v4691, %v4692
    %v4694 = vrot.slane %v4676, 4
    %v4695 = vadd.f32 %v4676, %v4694
    %v4696 = vrot.slane %v4695, 2
    %v4697 = vadd.f32 %v4695, %v4696
    %v4698 = vrot.slane %v4697, 1
    %v4699 = vadd.f32 %v4697, %v4698
    %v4700 = vrot.slane %v4677, 4
    %v4701 = vadd.f32 %v4677, %v4700
    %v4702 = vrot.slane %v4701, 2
    %v4703 = vadd.f32 %v4701, %v4702
    %v4704 = vrot.slane %v4703, 1
    %v4705 = vadd.f32 %v4703, %v4704
    %v4706 = vrot.slane %v4678, 4
    %v4707 = vadd.f32 %v4678, %v4706
    %v4708 = vrot.slane %v4707, 2
    %v4709 = vadd.f32 %v4707, %v4708
    %v4710 = vrot.slane %v4709, 1
    %v4711 = vadd.f32 %v4709, %v4710
    %v4712 = vrot.slane %v4679, 4
    %v4713 = vadd.f32 %v4679, %v4712
    %v4714 = vrot.slane %v4713, 2
    %v4715 = vadd.f32 %v4713, %v4714
    %v4716 = vrot.slane %v4715, 1
    %v4717 = vadd.f32 %v4715, %v4716
    %v4718 = vrot.slane %v4680, 4
    %v4719 = vadd.f32 %v4680, %v4718
    %v4720 = vrot.slane %v4719, 2
    %v4721 = vadd.f32 %v4719, %v4720
    %v4722 = vrot.slane %v4721, 1
    %v4723 = vadd.f32 %v4721, %v4722
    %v4724 = vrot.slane %v4681, 4
    %v4725 = vadd.f32 %v4681, %v4724
    %v4726 = vrot.slane %v4725, 2
    %v4727 = vadd.f32 %v4725, %v4726
    %v4728 = vrot.slane %v4727, 1
    %v4729 = vadd.f32 %v4727, %v4728
    %v4730 = vmul.f32 %v4687, %v4657
    %v4731 = vmul.f32 %v4693, %v4657
    %v4732 = vmul.f32 %v4699, %v4657
    %v4733 = vmul.f32 %v4705, %v4657
    %v4734 = vmul.f32 %v4711, %v4657
    %v4735 = vmul.f32 %v4717, %v4657
    %v4736 = vmul.f32 %v4723, %v4657
    %v4737 = vmul.f32 %v4729, %v4657
    %v4738 = vadd.f32 %v4730, 1e-05
    %v4739 = vadd.f32 %v4731, 1e-05
    %v4740 = vadd.f32 %v4732, 1e-05
    %v4741 = vadd.f32 %v4733, 1e-05
    %v4742 = vadd.f32 %v4734, 1e-05
    %v4743 = vadd.f32 %v4735, 1e-05
    %v4744 = vadd.f32 %v4736, 1e-05
    %v4745 = vadd.f32 %v4737, 1e-05
    %v4746 = vrsqrt.pop %v4738
    %v4747 = vrsqrt.pop %v4739
    %v4748 = vrsqrt.pop %v4740
    %v4749 = vrsqrt.pop %v4741
    %v4750 = vrsqrt.pop %v4742
    %v4751 = vrsqrt.pop %v4743
    %v4752 = vrsqrt.pop %v4744
    %v4753 = vrsqrt.pop %v4745
    %v4754 = vmul.f32 %v4666, %v4746
    %v4755 = vmul.f32 %v4667, %v4747
    %v4756 = vmul.f32 %v4668, %v4748
    %v4757 = vmul.f32 %v4669, %v4749
    %v4758 = vmul.f32 %v4670, %v4750
    %v4759 = vmul.f32 %v4671, %v4751
    %v4760 = vmul.f32 %v4672, %v4752
    %v4761 = vmul.f32 %v4673, %v4753
    %v4762 = vld [vmem:[#allocation14] sm:$0xff]
    %v4764 = vlaneseq
    %v4765 = vshrl.u32 %v4764, 7
    %v4766 = vsub.s32 0, %v4765
    %v4767 = vrot.slane %v4762, %v4766
    %v4768 = vlaneseq
    %v4769 = vshrl.u32 %v4768, 7
    %v4770 = vsub.s32 1, %v4769
    %v4771 = vrot.slane %v4762, %v4770
    %v4772 = vlaneseq
    %v4773 = vshrl.u32 %v4772, 7
    %v4774 = vsub.s32 2, %v4773
    %v4775 = vrot.slane %v4762, %v4774
    %v4776 = vlaneseq
    %v4777 = vshrl.u32 %v4776, 7
    %v4778 = vsub.s32 3, %v4777
    %v4779 = vrot.slane %v4762, %v4778
    %v4780 = vlaneseq
    %v4781 = vshrl.u32 %v4780, 7
    %v4782 = vsub.s32 4, %v4781
    %v4783 = vrot.slane %v4762, %v4782
    %v4784 = vlaneseq
    %v4785 = vshrl.u32 %v4784, 7
    %v4786 = vsub.s32 5, %v4785
    %v4787 = vrot.slane %v4762, %v4786
    %v4788 = vlaneseq
    %v4789 = vshrl.u32 %v4788, 7
    %v4790 = vsub.s32 6, %v4789
    %v4791 = vrot.slane %v4762, %v4790
    %v4792 = vlaneseq
    %v4793 = vshrl.u32 %v4792, 7
    %v4794 = vsub.s32 7, %v4793
    %v4795 = vrot.slane %v4762, %v4794
    %v4804 = vmul.f32 %v4754, %v4767
    %v4805 = vmul.f32 %v4755, %v4771
    %v4806 = vmul.f32 %v4756, %v4775
    %v4807 = vmul.f32 %v4757, %v4779
    %v4808 = vmul.f32 %v4758, %v4783
    %v4809 = vmul.f32 %v4759, %v4787
    %v4810 = vmul.f32 %v4760, %v4791
    %v4811 = vmul.f32 %v4761, %v4795
    %v4812 = vld [vmem:[#allocation16] sm:$0xff]
    %v4814 = vlaneseq
    %v4815 = vshrl.u32 %v4814, 7
    %v4816 = vsub.s32 0, %v4815
    %v4817 = vrot.slane %v4812, %v4816
    %v4818 = vlaneseq
    %v4819 = vshrl.u32 %v4818, 7
    %v4820 = vsub.s32 1, %v4819
    %v4821 = vrot.slane %v4812, %v4820
    %v4822 = vlaneseq
    %v4823 = vshrl.u32 %v4822, 7
    %v4824 = vsub.s32 2, %v4823
    %v4825 = vrot.slane %v4812, %v4824
    %v4826 = vlaneseq
    %v4827 = vshrl.u32 %v4826, 7
    %v4828 = vsub.s32 3, %v4827
    %v4829 = vrot.slane %v4812, %v4828
    %v4830 = vlaneseq
    %v4831 = vshrl.u32 %v4830, 7
    %v4832 = vsub.s32 4, %v4831
    %v4833 = vrot.slane %v4812, %v4832
    %v4834 = vlaneseq
    %v4835 = vshrl.u32 %v4834, 7
    %v4836 = vsub.s32 5, %v4835
    %v4837 = vrot.slane %v4812, %v4836
    %v4838 = vlaneseq
    %v4839 = vshrl.u32 %v4838, 7
    %v4840 = vsub.s32 6, %v4839
    %v4841 = vrot.slane %v4812, %v4840
    %v4842 = vlaneseq
    %v4843 = vshrl.u32 %v4842, 7
    %v4844 = vsub.s32 7, %v4843
    %v4845 = vrot.slane %v4812, %v4844
    %v4854 = vadd.f32 %v4804, %v4817
    %v4855 = vadd.f32 %v4805, %v4821
    %v4856 = vadd.f32 %v4806, %v4825
    %v4857 = vadd.f32 %v4807, %v4829
    %v4858 = vadd.f32 %v4808, %v4833
    %v4859 = vadd.f32 %v4809, %v4837
    %v4860 = vadd.f32 %v4810, %v4841
    %v4861 = vadd.f32 %v4811, %v4845
    %v4862 = vmax.f32 %v4854, 0.0
    %v4863 = vmax.f32 %v4855, 0.0
    %v4864 = vmax.f32 %v4856, 0.0
    %v4865 = vmax.f32 %v4857, 0.0
    %v4866 = vmax.f32 %v4858, 0.0
    %v4867 = vmax.f32 %v4859, 0.0
    %v4868 = vmax.f32 %v4860, 0.0
    %v4869 = vmax.f32 %v4861, 0.0
    %v4870 = vpack.c.bf16 %v4862, %v4862
    %v4871 = vpack.c.bf16 %v4863, %v4863
    %v4872 = vpack.c.bf16 %v4864, %v4864
    %v4873 = vpack.c.bf16 %v4865, %v4865
    %v4874 = vpack.c.bf16 %v4866, %v4866
    %v4875 = vpack.c.bf16 %v4867, %v4867
    %v4876 = vpack.c.bf16 %v4868, %v4868
    %v4877 = vpack.c.bf16 %v4869, %v4869
    %v4878 = vld [vmem:[#allocation17] sm:$0xf]
    %v4879 = vld [vmem:[#allocation17 + $0x4] sm:$0xf]
    %v4880 = vld [vmem:[#allocation17 + $0x8] sm:$0xf]
    %v4881 = vld [vmem:[#allocation17 + $0xc] sm:$0xf]
    %v4882 = vld [vmem:[#allocation17 + $0x10] sm:$0xf]
    %v4883 = vld [vmem:[#allocation17 + $0x14] sm:$0xf]
    %v4884 = vld [vmem:[#allocation17 + $0x18] sm:$0xf]
    %v4885 = vld [vmem:[#allocation17 + $0x1c] sm:$0xf]
    %v4886 = vld [vmem:[#allocation17 + $0x20] sm:$0xf]
    %v4887 = vld [vmem:[#allocation17 + $0x24] sm:$0xf]
    %v4888 = vld [vmem:[#allocation17 + $0x28] sm:$0xf]
    %v4889 = vld [vmem:[#allocation17 + $0x2c] sm:$0xf]
    %v4890 = vld [vmem:[#allocation17 + $0x30] sm:$0xf]
    %v4891 = vld [vmem:[#allocation17 + $0x34] sm:$0xf]
    %v4892 = vld [vmem:[#allocation17 + $0x38] sm:$0xf]
    %v4893 = vld [vmem:[#allocation17 + $0x3c] sm:$0xf]
    %v4894 = vld [vmem:[#allocation17 + $0x40] sm:$0xf]
    %v4895 = vld [vmem:[#allocation17 + $0x44] sm:$0xf]
    %v4896 = vld [vmem:[#allocation17 + $0x48] sm:$0xf]
    %v4897 = vld [vmem:[#allocation17 + $0x4c] sm:$0xf]
    %v4898 = vld [vmem:[#allocation17 + $0x50] sm:$0xf]
    %v4899 = vld [vmem:[#allocation17 + $0x54] sm:$0xf]
    %v4900 = vld [vmem:[#allocation17 + $0x58] sm:$0xf]
    %v4901 = vld [vmem:[#allocation17 + $0x5c] sm:$0xf]
    %v4902 = vld [vmem:[#allocation17 + $0x60] sm:$0xf]
    %v4903 = vld [vmem:[#allocation17 + $0x64] sm:$0xf]
    %v4904 = vld [vmem:[#allocation17 + $0x68] sm:$0xf]
    %v4905 = vld [vmem:[#allocation17 + $0x6c] sm:$0xf]
    %v4906 = vld [vmem:[#allocation17 + $0x70] sm:$0xf]
    %v4907 = vld [vmem:[#allocation17 + $0x74] sm:$0xf]
    %v4908 = vld [vmem:[#allocation17 + $0x78] sm:$0xf]
    %v4909 = vld [vmem:[#allocation17 + $0x7c] sm:$0xf]
    %v4910 = vld [vmem:[#allocation17 + $0x80] sm:$0xf]
    %v4911 = vld [vmem:[#allocation17 + $0x84] sm:$0xf]
    %v4912 = vld [vmem:[#allocation17 + $0x88] sm:$0xf]
    %v4913 = vld [vmem:[#allocation17 + $0x8c] sm:$0xf]
    %v4914 = vld [vmem:[#allocation17 + $0x90] sm:$0xf]
    %v4915 = vld [vmem:[#allocation17 + $0x94] sm:$0xf]
    %v4916 = vld [vmem:[#allocation17 + $0x98] sm:$0xf]
    %v4917 = vld [vmem:[#allocation17 + $0x9c] sm:$0xf]
    %v4918 = vld [vmem:[#allocation17 + $0xa0] sm:$0xf]
    %v4919 = vld [vmem:[#allocation17 + $0xa4] sm:$0xf]
    %v4920 = vld [vmem:[#allocation17 + $0xa8] sm:$0xf]
    %v4921 = vld [vmem:[#allocation17 + $0xac] sm:$0xf]
    %v4922 = vld [vmem:[#allocation17 + $0xb0] sm:$0xf]
    %v4923 = vld [vmem:[#allocation17 + $0xb4] sm:$0xf]
    %v4924 = vld [vmem:[#allocation17 + $0xb8] sm:$0xf]
    %v4925 = vld [vmem:[#allocation17 + $0xbc] sm:$0xf]
    %v4926 = vld [vmem:[#allocation17 + $0xc0] sm:$0xf]
    %v4927 = vld [vmem:[#allocation17 + $0xc4] sm:$0xf]
    %v4928 = vld [vmem:[#allocation17 + $0xc8] sm:$0xf]
    %v4929 = vld [vmem:[#allocation17 + $0xcc] sm:$0xf]
    %v4930 = vld [vmem:[#allocation17 + $0xd0] sm:$0xf]
    %v4931 = vld [vmem:[#allocation17 + $0xd4] sm:$0xf]
    %v4932 = vld [vmem:[#allocation17 + $0xd8] sm:$0xf]
    %v4933 = vld [vmem:[#allocation17 + $0xdc] sm:$0xf]
    %v4934 = vld [vmem:[#allocation17 + $0xe0] sm:$0xf]
    %v4935 = vld [vmem:[#allocation17 + $0xe4] sm:$0xf]
    %v4936 = vld [vmem:[#allocation17 + $0xe8] sm:$0xf]
    %v4937 = vld [vmem:[#allocation17 + $0xec] sm:$0xf]
    %v4938 = vld [vmem:[#allocation17 + $0xf0] sm:$0xf]
    %v4939 = vld [vmem:[#allocation17 + $0xf4] sm:$0xf]
    %v4940 = vld [vmem:[#allocation17 + $0xf8] sm:$0xf]
    %v4941 = vld [vmem:[#allocation17 + $0xfc] sm:$0xf]
    %v4942 = vld [vmem:[#allocation17 + $0x100] sm:$0xf]
    %v4943 = vld [vmem:[#allocation17 + $0x104] sm:$0xf]
    %v4944 = vld [vmem:[#allocation17 + $0x108] sm:$0xf]
    %v4945 = vld [vmem:[#allocation17 + $0x10c] sm:$0xf]
    %v4946 = vld [vmem:[#allocation17 + $0x110] sm:$0xf]
    %v4947 = vld [vmem:[#allocation17 + $0x114] sm:$0xf]
    %v4948 = vld [vmem:[#allocation17 + $0x118] sm:$0xf]
    %v4949 = vld [vmem:[#allocation17 + $0x11c] sm:$0xf]
    %v4950 = vld [vmem:[#allocation17 + $0x120] sm:$0xf]
    %v4951 = vld [vmem:[#allocation17 + $0x124] sm:$0xf]
    %v4952 = vld [vmem:[#allocation17 + $0x128] sm:$0xf]
    %v4953 = vld [vmem:[#allocation17 + $0x12c] sm:$0xf]
    %v4954 = vld [vmem:[#allocation17 + $0x130] sm:$0xf]
    %v4955 = vld [vmem:[#allocation17 + $0x134] sm:$0xf]
    %v4956 = vld [vmem:[#allocation17 + $0x138] sm:$0xf]
    %v4957 = vld [vmem:[#allocation17 + $0x13c] sm:$0xf]
    %v4958 = vld [vmem:[#allocation17 + $0x140] sm:$0xf]
    %v4959 = vld [vmem:[#allocation17 + $0x144] sm:$0xf]
    %v4960 = vld [vmem:[#allocation17 + $0x148] sm:$0xf]
    %v4961 = vld [vmem:[#allocation17 + $0x14c] sm:$0xf]
    %v4962 = vld [vmem:[#allocation17 + $0x150] sm:$0xf]
    %v4963 = vld [vmem:[#allocation17 + $0x154] sm:$0xf]
    %v4964 = vld [vmem:[#allocation17 + $0x158] sm:$0xf]
    %v4965 = vld [vmem:[#allocation17 + $0x15c] sm:$0xf]
    %v4966 = vld [vmem:[#allocation17 + $0x160] sm:$0xf]
    %v4967 = vld [vmem:[#allocation17 + $0x164] sm:$0xf]
    %v4968 = vld [vmem:[#allocation17 + $0x168] sm:$0xf]
    %v4969 = vld [vmem:[#allocation17 + $0x16c] sm:$0xf]
    %v4970 = vld [vmem:[#allocation17 + $0x170] sm:$0xf]
    %v4971 = vld [vmem:[#allocation17 + $0x174] sm:$0xf]
    %v4972 = vld [vmem:[#allocation17 + $0x178] sm:$0xf]
    %v4973 = vld [vmem:[#allocation17 + $0x17c] sm:$0xf]
    %v4974 = vld [vmem:[#allocation17 + $0x180] sm:$0xf]
    %v4975 = vld [vmem:[#allocation17 + $0x184] sm:$0xf]
    %v4976 = vld [vmem:[#allocation17 + $0x188] sm:$0xf]
    %v4977 = vld [vmem:[#allocation17 + $0x18c] sm:$0xf]
    %v4978 = vld [vmem:[#allocation17 + $0x190] sm:$0xf]
    %v4979 = vld [vmem:[#allocation17 + $0x194] sm:$0xf]
    %v4980 = vld [vmem:[#allocation17 + $0x198] sm:$0xf]
    %v4981 = vld [vmem:[#allocation17 + $0x19c] sm:$0xf]
    %v4982 = vld [vmem:[#allocation17 + $0x1a0] sm:$0xf]
    %v4983 = vld [vmem:[#allocation17 + $0x1a4] sm:$0xf]
    %v4984 = vld [vmem:[#allocation17 + $0x1a8] sm:$0xf]
    %v4985 = vld [vmem:[#allocation17 + $0x1ac] sm:$0xf]
    %v4986 = vld [vmem:[#allocation17 + $0x1b0] sm:$0xf]
    %v4987 = vld [vmem:[#allocation17 + $0x1b4] sm:$0xf]
    %v4988 = vld [vmem:[#allocation17 + $0x1b8] sm:$0xf]
    %v4989 = vld [vmem:[#allocation17 + $0x1bc] sm:$0xf]
    %v4990 = vld [vmem:[#allocation17 + $0x1c0] sm:$0xf]
    %v4991 = vld [vmem:[#allocation17 + $0x1c4] sm:$0xf]
    %v4992 = vld [vmem:[#allocation17 + $0x1c8] sm:$0xf]
    %v4993 = vld [vmem:[#allocation17 + $0x1cc] sm:$0xf]
    %v4994 = vld [vmem:[#allocation17 + $0x1d0] sm:$0xf]
    %v4995 = vld [vmem:[#allocation17 + $0x1d4] sm:$0xf]
    %v4996 = vld [vmem:[#allocation17 + $0x1d8] sm:$0xf]
    %v4997 = vld [vmem:[#allocation17 + $0x1dc] sm:$0xf]
    %v4998 = vld [vmem:[#allocation17 + $0x1e0] sm:$0xf]
    %v4999 = vld [vmem:[#allocation17 + $0x1e4] sm:$0xf]
    %v5000 = vld [vmem:[#allocation17 + $0x1e8] sm:$0xf]
    %v5001 = vld [vmem:[#allocation17 + $0x1ec] sm:$0xf]
    %v5002 = vld [vmem:[#allocation17 + $0x1f0] sm:$0xf]
    %v5003 = vld [vmem:[#allocation17 + $0x1f4] sm:$0xf]
    %v5004 = vld [vmem:[#allocation17 + $0x1f8] sm:$0xf]
    %v5005 = vld [vmem:[#allocation17 + $0x1fc] sm:$0xf]
    %v5006 = vld [vmem:[#allocation19] sm:$0x1]
    %v5008 = vlaneseq
    %v5009 = vshrl.u32 %v5008, 7
    %v5010 = vsub.s32 0, %v5009
    %v5011 = vrot.slane %v5006, %v5010
    %v5141 = vunpack.c.l.b16 %v4878
    %v5142 = vunpack.c.l.b16 %v4879
    %v5143 = vunpack.c.l.b16 %v4880
    %v5144 = vunpack.c.l.b16 %v4881
    %v5145 = vunpack.c.l.b16 %v4882
    %v5146 = vunpack.c.l.b16 %v4883
    %v5147 = vunpack.c.l.b16 %v4884
    %v5148 = vunpack.c.l.b16 %v4885
    %v5149 = vunpack.c.l.b16 %v4886
    %v5150 = vunpack.c.l.b16 %v4887
    %v5151 = vunpack.c.l.b16 %v4888
    %v5152 = vunpack.c.l.b16 %v4889
    %v5153 = vunpack.c.l.b16 %v4890
    %v5154 = vunpack.c.l.b16 %v4891
    %v5155 = vunpack.c.l.b16 %v4892
    %v5156 = vunpack.c.l.b16 %v4893
    %v5157 = vunpack.c.l.b16 %v4894
    %v5158 = vunpack.c.l.b16 %v4895
    %v5159 = vunpack.c.l.b16 %v4896
    %v5160 = vunpack.c.l.b16 %v4897
    %v5161 = vunpack.c.l.b16 %v4898
    %v5162 = vunpack.c.l.b16 %v4899
    %v5163 = vunpack.c.l.b16 %v4900
    %v5164 = vunpack.c.l.b16 %v4901
    %v5165 = vunpack.c.l.b16 %v4902
    %v5166 = vunpack.c.l.b16 %v4903
    %v5167 = vunpack.c.l.b16 %v4904
    %v5168 = vunpack.c.l.b16 %v4905
    %v5169 = vunpack.c.l.b16 %v4906
    %v5170 = vunpack.c.l.b16 %v4907
    %v5171 = vunpack.c.l.b16 %v4908
    %v5172 = vunpack.c.l.b16 %v4909
    %v5173 = vunpack.c.l.b16 %v4910
    %v5174 = vunpack.c.l.b16 %v4911
    %v5175 = vunpack.c.l.b16 %v4912
    %v5176 = vunpack.c.l.b16 %v4913
    %v5177 = vunpack.c.l.b16 %v4914
    %v5178 = vunpack.c.l.b16 %v4915
    %v5179 = vunpack.c.l.b16 %v4916
    %v5180 = vunpack.c.l.b16 %v4917
    %v5181 = vunpack.c.l.b16 %v4918
    %v5182 = vunpack.c.l.b16 %v4919
    %v5183 = vunpack.c.l.b16 %v4920
    %v5184 = vunpack.c.l.b16 %v4921
    %v5185 = vunpack.c.l.b16 %v4922
    %v5186 = vunpack.c.l.b16 %v4923
    %v5187 = vunpack.c.l.b16 %v4924
    %v5188 = vunpack.c.l.b16 %v4925
    %v5189 = vunpack.c.l.b16 %v4926
    %v5190 = vunpack.c.l.b16 %v4927
    %v5191 = vunpack.c.l.b16 %v4928
    %v5192 = vunpack.c.l.b16 %v4929
    %v5193 = vunpack.c.l.b16 %v4930
    %v5194 = vunpack.c.l.b16 %v4931
    %v5195 = vunpack.c.l.b16 %v4932
    %v5196 = vunpack.c.l.b16 %v4933
    %v5197 = vunpack.c.l.b16 %v4934
    %v5198 = vunpack.c.l.b16 %v4935
    %v5199 = vunpack.c.l.b16 %v4936
    %v5200 = vunpack.c.l.b16 %v4937
    %v5201 = vunpack.c.l.b16 %v4938
    %v5202 = vunpack.c.l.b16 %v4939
    %v5203 = vunpack.c.l.b16 %v4940
    %v5204 = vunpack.c.l.b16 %v4941
    %v5205 = vunpack.c.l.b16 %v4942
    %v5206 = vunpack.c.l.b16 %v4943
    %v5207 = vunpack.c.l.b16 %v4944
    %v5208 = vunpack.c.l.b16 %v4945
    %v5209 = vunpack.c.l.b16 %v4946
    %v5210 = vunpack.c.l.b16 %v4947
    %v5211 = vunpack.c.l.b16 %v4948
    %v5212 = vunpack.c.l.b16 %v4949
    %v5213 = vunpack.c.l.b16 %v4950
    %v5214 = vunpack.c.l.b16 %v4951
    %v5215 = vunpack.c.l.b16 %v4952
    %v5216 = vunpack.c.l.b16 %v4953
    %v5217 = vunpack.c.l.b16 %v4954
    %v5218 = vunpack.c.l.b16 %v4955
    %v5219 = vunpack.c.l.b16 %v4956
    %v5220 = vunpack.c.l.b16 %v4957
    %v5221 = vunpack.c.l.b16 %v4958
    %v5222 = vunpack.c.l.b16 %v4959
    %v5223 = vunpack.c.l.b16 %v4960
    %v5224 = vunpack.c.l.b16 %v4961
    %v5225 = vunpack.c.l.b16 %v4962
    %v5226 = vunpack.c.l.b16 %v4963
    %v5227 = vunpack.c.l.b16 %v4964
    %v5228 = vunpack.c.l.b16 %v4965
    %v5229 = vunpack.c.l.b16 %v4966
    %v5230 = vunpack.c.l.b16 %v4967
    %v5231 = vunpack.c.l.b16 %v4968
    %v5232 = vunpack.c.l.b16 %v4969
    %v5233 = vunpack.c.l.b16 %v4970
    %v5234 = vunpack.c.l.b16 %v4971
    %v5235 = vunpack.c.l.b16 %v4972
    %v5236 = vunpack.c.l.b16 %v4973
    %v5237 = vunpack.c.l.b16 %v4974
    %v5238 = vunpack.c.l.b16 %v4975
    %v5239 = vunpack.c.l.b16 %v4976
    %v5240 = vunpack.c.l.b16 %v4977
    %v5241 = vunpack.c.l.b16 %v4978
    %v5242 = vunpack.c.l.b16 %v4979
    %v5243 = vunpack.c.l.b16 %v4980
    %v5244 = vunpack.c.l.b16 %v4981
    %v5245 = vunpack.c.l.b16 %v4982
    %v5246 = vunpack.c.l.b16 %v4983
    %v5247 = vunpack.c.l.b16 %v4984
    %v5248 = vunpack.c.l.b16 %v4985
    %v5249 = vunpack.c.l.b16 %v4986
    %v5250 = vunpack.c.l.b16 %v4987
    %v5251 = vunpack.c.l.b16 %v4988
    %v5252 = vunpack.c.l.b16 %v4989
    %v5253 = vunpack.c.l.b16 %v4990
    %v5254 = vunpack.c.l.b16 %v4991
    %v5255 = vunpack.c.l.b16 %v4992
    %v5256 = vunpack.c.l.b16 %v4993
    %v5257 = vunpack.c.l.b16 %v4994
    %v5258 = vunpack.c.l.b16 %v4995
    %v5259 = vunpack.c.l.b16 %v4996
    %v5260 = vunpack.c.l.b16 %v4997
    %v5261 = vunpack.c.l.b16 %v4998
    %v5262 = vunpack.c.l.b16 %v4999
    %v5263 = vunpack.c.l.b16 %v5000
    %v5264 = vunpack.c.l.b16 %v5001
    %v5265 = vunpack.c.l.b16 %v5002
    %v5266 = vunpack.c.l.b16 %v5003
    %v5267 = vunpack.c.l.b16 %v5004
    %v5268 = vunpack.c.l.b16 %v5005
    %v5269 = vpack.c.b16 %v5142, %v5141
    %v5270 = vpack.c.b16 %v5144, %v5143
    %v5271 = vpack.c.b16 %v5146, %v5145
    %v5272 = vpack.c.b16 %v5148, %v5147
    %v5273 = vpack.c.b16 %v5150, %v5149
    %v5274 = vpack.c.b16 %v5152, %v5151
    %v5275 = vpack.c.b16 %v5154, %v5153
    %v5276 = vpack.c.b16 %v5156, %v5155
    %v5277 = vpack.c.b16 %v5158, %v5157
    %v5278 = vpack.c.b16 %v5160, %v5159
    %v5279 = vpack.c.b16 %v5162, %v5161
    %v5280 = vpack.c.b16 %v5164, %v5163
    %v5281 = vpack.c.b16 %v5166, %v5165
    %v5282 = vpack.c.b16 %v5168, %v5167
    %v5283 = vpack.c.b16 %v5170, %v5169
    %v5284 = vpack.c.b16 %v5172, %v5171
    %v5285 = vpack.c.b16 %v5174, %v5173
    %v5286 = vpack.c.b16 %v5176, %v5175
    %v5287 = vpack.c.b16 %v5178, %v5177
    %v5288 = vpack.c.b16 %v5180, %v5179
    %v5289 = vpack.c.b16 %v5182, %v5181
    %v5290 = vpack.c.b16 %v5184, %v5183
    %v5291 = vpack.c.b16 %v5186, %v5185
    %v5292 = vpack.c.b16 %v5188, %v5187
    %v5293 = vpack.c.b16 %v5190, %v5189
    %v5294 = vpack.c.b16 %v5192, %v5191
    %v5295 = vpack.c.b16 %v5194, %v5193
    %v5296 = vpack.c.b16 %v5196, %v5195
    %v5297 = vpack.c.b16 %v5198, %v5197
    %v5298 = vpack.c.b16 %v5200, %v5199
    %v5299 = vpack.c.b16 %v5202, %v5201
    %v5300 = vpack.c.b16 %v5204, %v5203
    %v5301 = vpack.c.b16 %v5206, %v5205
    %v5302 = vpack.c.b16 %v5208, %v5207
    %v5303 = vpack.c.b16 %v5210, %v5209
    %v5304 = vpack.c.b16 %v5212, %v5211
    %v5305 = vpack.c.b16 %v5214, %v5213
    %v5306 = vpack.c.b16 %v5216, %v5215
    %v5307 = vpack.c.b16 %v5218, %v5217
    %v5308 = vpack.c.b16 %v5220, %v5219
    %v5309 = vpack.c.b16 %v5222, %v5221
    %v5310 = vpack.c.b16 %v5224, %v5223
    %v5311 = vpack.c.b16 %v5226, %v5225
    %v5312 = vpack.c.b16 %v5228, %v5227
    %v5313 = vpack.c.b16 %v5230, %v5229
    %v5314 = vpack.c.b16 %v5232, %v5231
    %v5315 = vpack.c.b16 %v5234, %v5233
    %v5316 = vpack.c.b16 %v5236, %v5235
    %v5317 = vpack.c.b16 %v5238, %v5237
    %v5318 = vpack.c.b16 %v5240, %v5239
    %v5319 = vpack.c.b16 %v5242, %v5241
    %v5320 = vpack.c.b16 %v5244, %v5243
    %v5321 = vpack.c.b16 %v5246, %v5245
    %v5322 = vpack.c.b16 %v5248, %v5247
    %v5323 = vpack.c.b16 %v5250, %v5249
    %v5324 = vpack.c.b16 %v5252, %v5251
    %v5325 = vpack.c.b16 %v5254, %v5253
    %v5326 = vpack.c.b16 %v5256, %v5255
    %v5327 = vpack.c.b16 %v5258, %v5257
    %v5328 = vpack.c.b16 %v5260, %v5259
    %v5329 = vpack.c.b16 %v5262, %v5261
    %v5330 = vpack.c.b16 %v5264, %v5263
    %v5331 = vpack.c.b16 %v5266, %v5265
    %v5332 = vpack.c.b16 %v5268, %v5267
    %5397 = vmatprep.subr.bf16.mxu0 0
    %5398 = vmatpush1.bf16.msra.mxu0 %v5269
    %5399 = vmatprep.subr.bf16.mxu0 0
    %5400 = vmatpush1.bf16.msra.mxu0 %v5270
    %5401 = vmatprep.subr.bf16.mxu0 0
    %5402 = vmatpush1.bf16.msra.mxu0 %v5271
    %5403 = vmatprep.subr.bf16.mxu0 0
    %5404 = vmatpush1.bf16.msra.mxu0 %v5272
    %5405 = vmatprep.subr.bf16.mxu0 0
    %5406 = vmatpush1.bf16.msra.mxu0 %v5273
    %5407 = vmatprep.subr.bf16.mxu0 0
    %5408 = vmatpush1.bf16.msra.mxu0 %v5274
    %5409 = vmatprep.subr.bf16.mxu0 0
    %5410 = vmatpush1.bf16.msra.mxu0 %v5275
    %5411 = vmatprep.subr.bf16.mxu0 0
    %5412 = vmatpush1.bf16.msra.mxu0 %v5276
    %5413 = vmatprep.subr.bf16.mxu0 0
    %5414 = vmatpush1.bf16.msra.mxu0 %v5277
    %5415 = vmatprep.subr.bf16.mxu0 0
    %5416 = vmatpush1.bf16.msra.mxu0 %v5278
    %5417 = vmatprep.subr.bf16.mxu0 0
    %5418 = vmatpush1.bf16.msra.mxu0 %v5279
    %5419 = vmatprep.subr.bf16.mxu0 0
    %5420 = vmatpush1.bf16.msra.mxu0 %v5280
    %5421 = vmatprep.subr.bf16.mxu0 0
    %5422 = vmatpush1.bf16.msra.mxu0 %v5281
    %5423 = vmatprep.subr.bf16.mxu0 0
    %5424 = vmatpush1.bf16.msra.mxu0 %v5282
    %5425 = vmatprep.subr.bf16.mxu0 0
    %5426 = vmatpush1.bf16.msra.mxu0 %v5283
    %5427 = vmatprep.subr.bf16.mxu0 0
    %5428 = vmatpush1.bf16.msra.mxu0 %v5284
    %5429 = vmatprep.mubr.bf16.mxu0 %v4871
    %5430 = vmatmul.mubr.bf16.gmra.mrb[0].mxu0 %v4870
    %v5431 = vpop.f32.mrb[0].mxu0
    %v5432 = vadd.f32 %v5011, %v5431
    %v5433 = vpop.f32.mrb[0].mxu0
    %v5434 = vpop.f32.mrb[0].mxu0
    %v5435 = vpop.f32.mrb[0].mxu0
    %5436 = vdwg.mxu0
    %5437 = vmatprep.subr.bf16.mxu0 0
    %5438 = vmatpush1.bf16.msra.mxu0 %v5285
    %5439 = vmatprep.subr.bf16.mxu0 0
    %5440 = vmatpush1.bf16.msra.mxu0 %v5286
    %5441 = vmatprep.subr.bf16.mxu0 0
    %5442 = vmatpush1.bf16.msra.mxu0 %v5287
    %5443 = vmatprep.subr.bf16.mxu0 0
    %5444 = vmatpush1.bf16.msra.mxu0 %v5288
    %5445 = vmatprep.subr.bf16.mxu0 0
    %5446 = vmatpush1.bf16.msra.mxu0 %v5289
    %5447 = vmatprep.subr.bf16.mxu0 0
    %5448 = vmatpush1.bf16.msra.mxu0 %v5290
    %5449 = vmatprep.subr.bf16.mxu0 0
    %5450 = vmatpush1.bf16.msra.mxu0 %v5291
    %5451 = vmatprep.subr.bf16.mxu0 0
    %5452 = vmatpush1.bf16.msra.mxu0 %v5292
    %5453 = vmatprep.subr.bf16.mxu0 0
    %5454 = vmatpush1.bf16.msra.mxu0 %v5293
    %5455 = vmatprep.subr.bf16.mxu0 0
    %5456 = vmatpush1.bf16.msra.mxu0 %v5294
    %5457 = vmatprep.subr.bf16.mxu0 0
    %5458 = vmatpush1.bf16.msra.mxu0 %v5295
    %5459 = vmatprep.subr.bf16.mxu0 0
    %5460 = vmatpush1.bf16.msra.mxu0 %v5296
    %5461 = vmatprep.subr.bf16.mxu0 0
    %5462 = vmatpush1.bf16.msra.mxu0 %v5297
    %5463 = vmatprep.subr.bf16.mxu0 0
    %5464 = vmatpush1.bf16.msra.mxu0 %v5298
    %5465 = vmatprep.subr.bf16.mxu0 0
    %5466 = vmatpush1.bf16.msra.mxu0 %v5299
    %5467 = vmatprep.subr.bf16.mxu0 0
    %5468 = vmatpush1.bf16.msra.mxu0 %v5300
    %5469 = vmatprep.mubr.bf16.mxu0 %v4873
    %5470 = vmatmul.mubr.bf16.gmra.mrb[0].mxu0 %v4872
    %v5471 = vpop.f32.mrb[0].mxu0
    %v5472 = vadd.f32 %v5432, %v5471
    %v5473 = vpop.f32.mrb[0].mxu0
    %v5474 = vpop.f32.mrb[0].mxu0
    %v5475 = vpop.f32.mrb[0].mxu0
    %5476 = vdwg.mxu0
    %5477 = vmatprep.subr.bf16.mxu0 0
    %5478 = vmatpush1.bf16.msra.mxu0 %v5301
    %5479 = vmatprep.subr.bf16.mxu0 0
    %5480 = vmatpush1.bf16.msra.mxu0 %v5302
    %5481 = vmatprep.subr.bf16.mxu0 0
    %5482 = vmatpush1.bf16.msra.mxu0 %v5303
    %5483 = vmatprep.subr.bf16.mxu0 0
    %5484 = vmatpush1.bf16.msra.mxu0 %v5304
    %5485 = vmatprep.subr.bf16.mxu0 0
    %5486 = vmatpush1.bf16.msra.mxu0 %v5305
    %5487 = vmatprep.subr.bf16.mxu0 0
    %5488 = vmatpush1.bf16.msra.mxu0 %v5306
    %5489 = vmatprep.subr.bf16.mxu0 0
    %5490 = vmatpush1.bf16.msra.mxu0 %v5307
    %5491 = vmatprep.subr.bf16.mxu0 0
    %5492 = vmatpush1.bf16.msra.mxu0 %v5308
    %5493 = vmatprep.subr.bf16.mxu0 0
    %5494 = vmatpush1.bf16.msra.mxu0 %v5309
    %5495 = vmatprep.subr.bf16.mxu0 0
    %5496 = vmatpush1.bf16.msra.mxu0 %v5310
    %5497 = vmatprep.subr.bf16.mxu0 0
    %5498 = vmatpush1.bf16.msra.mxu0 %v5311
    %5499 = vmatprep.subr.bf16.mxu0 0
    %5500 = vmatpush1.bf16.msra.mxu0 %v5312
    %5501 = vmatprep.subr.bf16.mxu0 0
    %5502 = vmatpush1.bf16.msra.mxu0 %v5313
    %5503 = vmatprep.subr.bf16.mxu0 0
    %5504 = vmatpush1.bf16.msra.mxu0 %v5314
    %5505 = vmatprep.subr.bf16.mxu0 0
    %5506 = vmatpush1.bf16.msra.mxu0 %v5315
    %5507 = vmatprep.subr.bf16.mxu0 0
    %5508 = vmatpush1.bf16.msra.mxu0 %v5316
    %5509 = vmatprep.mubr.bf16.mxu0 %v4875
    %5510 = vmatmul.mubr.bf16.gmra.mrb[0].mxu0 %v4874
    %v5511 = vpop.f32.mrb[0].mxu0
    %v5512 = vadd.f32 %v5472, %v5511
    %v5513 = vpop.f32.mrb[0].mxu0
    %v5514 = vpop.f32.mrb[0].mxu0
    %v5515 = vpop.f32.mrb[0].mxu0
    %5516 = vdwg.mxu0
    %5517 = vmatprep.subr.bf16.mxu0 0
    %5518 = vmatpush1.bf16.msra.mxu0 %v5317
    %5519 = vmatprep.subr.bf16.mxu0 0
    %5520 = vmatpush1.bf16.msra.mxu0 %v5318
    %5521 = vmatprep.subr.bf16.mxu0 0
    %5522 = vmatpush1.bf16.msra.mxu0 %v5319
    %5523 = vmatprep.subr.bf16.mxu0 0
    %5524 = vmatpush1.bf16.msra.mxu0 %v5320
    %5525 = vmatprep.subr.bf16.mxu0 0
    %5526 = vmatpush1.bf16.msra.mxu0 %v5321
    %5527 = vmatprep.subr.bf16.mxu0 0
    %5528 = vmatpush1.bf16.msra.mxu0 %v5322
    %5529 = vmatprep.subr.bf16.mxu0 0
    %5530 = vmatpush1.bf16.msra.mxu0 %v5323
    %5531 = vmatprep.subr.bf16.mxu0 0
    %5532 = vmatpush1.bf16.msra.mxu0 %v5324
    %5533 = vmatprep.subr.bf16.mxu0 0
    %5534 = vmatpush1.bf16.msra.mxu0 %v5325
    %5535 = vmatprep.subr.bf16.mxu0 0
    %5536 = vmatpush1.bf16.msra.mxu0 %v5326
    %5537 = vmatprep.subr.bf16.mxu0 0
    %5538 = vmatpush1.bf16.msra.mxu0 %v5327
    %5539 = vmatprep.subr.bf16.mxu0 0
    %5540 = vmatpush1.bf16.msra.mxu0 %v5328
    %5541 = vmatprep.subr.bf16.mxu0 0
    %5542 = vmatpush1.bf16.msra.mxu0 %v5329
    %5543 = vmatprep.subr.bf16.mxu0 0
    %5544 = vmatpush1.bf16.msra.mxu0 %v5330
    %5545 = vmatprep.subr.bf16.mxu0 0
    %5546 = vmatpush1.bf16.msra.mxu0 %v5331
    %5547 = vmatprep.subr.bf16.mxu0 0
    %5548 = vmatpush1.bf16.msra.mxu0 %v5332
    %5549 = vmatprep.mubr.bf16.mxu0 %v4877
    %5550 = vmatmul.mubr.bf16.gmra.mrb[0].mxu0 %v4876
    %v5551 = vpop.f32.mrb[0].mxu0
    %v5552 = vadd.f32 %v5512, %v5551
    %v5553 = vpop.f32.mrb[0].mxu0
    %v5554 = vpop.f32.mrb[0].mxu0
    %v5555 = vpop.f32.mrb[0].mxu0
    %5556 = vdwg.mxu0
    %v5557 = vxor.u32 %v5552, 2147483648
    %v5558 = vmul.f32 %v5557, 1.442695
    %v5559 = vpow.pop %v5558
    %v5560 = vadd.f32 %v5559, 1.0
    %v5561 = vrcp.pop %v5560
    %v5562 = vmul.f32 1.0, %v5561
    %5563 = vst [vmem:[#allocation20] sm:$0xff] %v5562
    // Predicated region
    $region90: #{tpu_custom_call.1} parent=1 // pred_check
      _
    $region91: #{tpu_custom_call.1} parent=1 // pred_check_branch
      %5565 = sbr.rel (0) target = $region93
    $region92: #{tpu_custom_call.1} parent=1 // pred_region
      %s5567 = ssub.s32 128, 128
      %5568 = vsyncadd [#allocation4], %s5567
      %s5570 = sshll.u32 [#allocation20], 4
      %s5571 = int_to_ptr.vmem [resolvable:$true] %s5570
      %5573 = dma.vmem_to_hbm [thread:$0]  %s5571, 128, %s11, [#allocation4]
    $region93: #{tpu_custom_call.1} parent=1 // pred_fallthru
      _
    // Predicated region
    $region94: #{tpu_custom_call.1} parent=1 // pred_check
      _
    $region95: #{tpu_custom_call.1} parent=1 // pred_check_branch
      %5575 = sbr.rel (0) target = $region97
    $region96: #{tpu_custom_call.1} parent=1 // pred_region
      %5576 = dma.done [#allocation4], 128
    $region97: #{tpu_custom_call.1} parent=1 // pred_fallthru
      _
    %5577 = vsyncpa [#allocation3], 1
    %5578 = vsyncpa [#allocation6], 1
    %5579 = vsyncpa [#allocation9], 1
    %5580 = vsyncpa [#allocation12], 1
    %5581 = vsyncpa [#allocation15], 1
    %5582 = vsyncpa [#allocation18], 1
    %5583 = vsyncpa [#allocation4], 1

</llo_original>
